<compile_context>
chip_gen: v7x
topology: tpu7x:2x2x1
jax: 0.10.0
libtpu: 0.0.40
codegen_flags: <defaults>
</compile_context>

<pallas_src>
import math

import numpy as np
import jax
import jax.numpy as jnp
from jax import lax
from jax.experimental import pallas as pl
from jax.experimental.pallas import tpu as pltpu

SQRT2 = math.sqrt(2.0)
NEG_SLOPE = 0.2  # TODO(synk): LeakyReLU class body not provided; slope 0.2 with sqrt(2) gain assumed (gain folded into weights).

CHANNELS_PER_CONV_GROUP = 16        # ChannelsPerConvolutionGroup
CHANNELS_PER_ATTENTION_HEAD = 16    # ChannelsPerAttentionHead


# ----------------------------------------------------------------------------
# Small static helpers
# ----------------------------------------------------------------------------
def _round_up(x, m):
    return ((x + m - 1) // m) * m


def _samples_per_step(n, max_per_step=4):
    """Largest divisor of n (<= max_per_step) that still leaves >=2 grid steps."""
    best = 1
    for b in range(1, min(n, max_per_step) + 1):
        if n % b == 0 and n // b >= 2:
            best = b
    return best


def _tap_shifts(w, bs):
    """Roll amount per 3x3 tap so rolled[p] = h[p + dy*w + dx] (jnp.roll semantics)."""
    return [(-(dy * w + dx)) % bs for dy in (-1, 0, 1) for dx in (-1, 0, 1)]


def _conv_tap_masks(h, w, c):
    """(S, 9*c) 0/1 mask: zero where the zero-padded 3x3 tap falls outside the image."""
    s = h * w
    m = np.zeros((s, 9 * c), np.float32)
    k = 0
    for dy in (-1, 0, 1):
        for dx in (-1, 0, 1):
            for i in range(h):
                for j in range(w):
                    if 0 <= i + dy < h and 0 <= j + dx < w:
                        m[i * w + j, k * c:(k + 1) * c] = 1.0
            k += 1
    return m


def _pack_slab(entries, dtype, row_align):
    """Pack 2-D (<=128-lane) constants into one (rows, 128) slab; return (slab, offsets)."""
    pieces, offsets, row = [], {}, 0
    for name, a in entries:
        a = jnp.asarray(a)
        r, c = a.shape
        assert c <= 128, name
        ra = _round_up(r, row_align)
        offsets[name] = (row, r, c)
        piece = jnp.zeros((ra, 128), dtype).at[:r, :c].set(a.astype(dtype))
        pieces.append(piece)
        row += ra
    return jnp.concatenate(pieces, axis=0), offsets


# ----------------------------------------------------------------------------
# Wrapper-side weight preparation (matches the PyTorch per-forward weight math)
# ----------------------------------------------------------------------------
def _center_conv(w):
    return w - w.mean(axis=(1, 2, 3), keepdims=True)


def _center_linear(w):
    return w - w.mean(axis=1, keepdims=True)


def _pointwise(w):  # (Cout, Cin, 1, 1) -> (Cin, Cout)
    return jnp.transpose(w[:, :, 0, 0], (1, 0))


def _grouped_stacked_weights(w, groups):
    """PyTorch grouped 3x3 weight (Cout, Cin_g, 3, 3) -> stacked (9*Cin, Cout) block-diagonal."""
    cout, cin_g, kh, kw = w.shape
    cin = cin_g * groups
    wc = _center_conv(w)
    wk = jnp.transpose(wc, (2, 3, 1, 0)).reshape(kh * kw, cin_g, cout)
    tiled = jnp.tile(wk, (1, groups, 1))  # row cin uses wk[cin % cin_g]
    mask = (np.arange(cin)[:, None] // cin_g
            == np.arange(cout)[None, :] // (cout // groups)).astype(np.float32)
    return (tiled * mask).reshape(kh * kw * cin, cout)


def _downsample_matrix(h, w, filt2d):
    # TODO(synk): InterpolativeDownsampler source not provided; stride-2 depthwise [1,2,1]x[1,2,1]/16, pad=1 assumed.
    ho, wo = h // 2, w // 2
    m = jnp.zeros((ho * wo, h * w), jnp.float32)
    for ky in range(3):
        for kx in range(3):
            e = np.zeros((ho * wo, h * w), np.float32)
            for oi in range(ho):
                ii = 2 * oi + ky - 1
                if 0 <= ii < h:
                    for oj in range(wo):
                        jj = 2 * oj + kx - 1
                        if 0 <= jj < w:
                            e[oi * wo + oj, ii * w + jj] = 1.0
            m = m + filt2d[ky, kx] * e
    return m


# ----------------------------------------------------------------------------
# Fused Pallas kernel (one grid step == B batch samples stacked along M)
# ----------------------------------------------------------------------------
def _build_kernel(B, H, W, heads, woffs, foffs):
    S0, S1 = H * W, (H // 2) * (W // 2)
    BS0 = B * S0
    shifts0 = _tap_shifts(W, BS0)
    shifts1 = _tap_shifts(W // 2, B * S1)
    scale = 1.0 / math.sqrt(CHANNELS_PER_ATTENTION_HEAD)
    f32, bf16 = jnp.float32, jnp.bfloat16

    def kernel(x_ref, w_ref, f_ref, m0_ref, m1_ref, down_ref, bm_ref, o_ref):
        def Wg(name):                      # bf16 weight slab slice (static offsets)
            r0, r, c = woffs[name]
            return w_ref[r0:r0 + r, 0:c]

        def Fg(name):                      # f32 bias/gain slab slice
            r0, r, c = foffs[name]
            return f_ref[r0:r0 + r, 0:c]

        def mm(a, b):                      # bf16 operands -> MXU, f32 accumulation
            return jnp.dot(a.astype(bf16), b.astype(bf16), preferred_element_type=f32)

        def mmf(a, b):                     # small f32 matmuls (head / norms)
            return jnp.dot(a, b, preferred_element_type=f32)

        def lrelu(v):                      # sqrt(2) gain folded into following weights
            return jnp.where(v >= 0.0, v, NEG_SLOPE * v)

        def ffn(act, pre, mask_ref, shifts):
            # LinearLayer1 (biased 1x1, gains folded in wrapper) + LeakyReLU
            h = lrelu(mm(act, Wg(pre + "_w1")) + Fg(pre + "_b1"))       # (M, HID) f32
            # LinearLayer2: grouped 3x3 conv = 9 XLU rolls + boundary mask + ONE matmul
            cols = [h if s == 0 else pltpu.roll(h, shift=s, axis=0) for s in shifts]
            slab = jnp.concatenate(cols, axis=-1).astype(bf16) * mask_ref[...]
            acc = jnp.dot(slab, Wg(pre + "_w2"), preferred_element_type=f32)
            # LinearLayer3 (1x1, residual alpha + sqrt2 folded in wrapper)
            res = mm(lrelu(acc), Wg(pre + "_w3"))
            return (act.astype(f32) + res).astype(bf16)

        def attention(act):
            q = mm(act, Wg("a_wq")) + Fg("a_bq")
            k = mm(act, Wg("a_wk")) + Fg("a_bk")
            v = mm(act, Wg("a_wv")) + Fg("a_bv")
            hsum = Fg("hsum")          # (AH, AH) per-head block-of-ones
            hmask = Fg("hmask")        # (heads, AH) per-head channel selector
            # per-lane head L2 norms via one block matmul; 1/sqrt(dh) folded into q scale.
            # TODO(synk): CosineAttention source not provided; SDPA-style 1/sqrt(head_dim) scale assumed.
            qn = q * (lax.rsqrt(jnp.maximum(mmf(q * q, hsum), 1e-24)) * scale)
            kn = k * lax.rsqrt(jnp.maximum(mmf(k * k, hsum), 1e-24))
            knb, vb = kn.astype(bf16), v.astype(bf16)
            bm = bm_ref[...]           # block-diagonal (per-sample) 0/1 mask
            out = jnp.zeros(q.shape, f32)
            for hd in range(heads):
                m = hmask[hd:hd + 1, :]
                s = lax.dot_general((qn * m).astype(bf16), knb,
                                    (((1,), (1,)), ((), ())),
                                    preferred_element_type=f32)
                # cosine scores bounded by +-scale -> exp() needs no max-subtract
                p = jnp.exp(s) * bm
                p = p * pl.reciprocal(jnp.sum(p, axis=-1, keepdims=True), approx=True)
                out = out + mm(p, vb) * m
            res = mm(out, Wg("a_wproj"))
            return (act.astype(f32) + res).astype(bf16)

        # ---- main path (bf16 activations, f32 epilogues) ----
        act = mm(x_ref[0], Wg("w_ext")).astype(bf16)                    # (B*S0, C)
        act = ffn(act, "f0", m0_ref, shifts0)                           # stage 0 FFN
        act = attention(act)                                            # stage 0 attention
        act = (mm(down_ref[...], act) * Fg("gds")).astype(bf16)        # 8x8 -> 4x4 downsample
        act = ffn(act, "f1", m1_ref, shifts1)                           # stage 1 FFN

        # ---- head (float32, as in the PyTorch forward) ----
        weighted = act.astype(f32) * Fg("basis")                        # (B*S1, C)
        feat = mmf(Fg("hsel"), weighted)                                # per-sample reduce -> (B, C)
        hid = lrelu(mmf(feat, Fg("wm1")))                               # (B, 2C)
        outv = jnp.sum(hid * Fg("wm2"), axis=-1, keepdims=True)         # (B, 1)
        tile = jnp.broadcast_to(outv, (B, 128))
        if B < 8:
            tile = jnp.concatenate([tile, jnp.zeros((8 - B, 128), f32)], axis=0)
        o_ref[...] = tile.reshape(1, 8, 128)

    return kernel


# ----------------------------------------------------------------------------
# Public forward
# ----------------------------------------------------------------------------
def discriminator_forward(params, x_nchw):
    N, Cin, H, W = x_nchw.shape
    f32, bf16 = jnp.float32, jnp.bfloat16
    B = _samples_per_step(N)                       # samples stacked per grid step
    steps = N // B
    S0, S1 = H * W, (H // 2) * (W // 2)

    # NCHW -> (steps, B*S0, 8): channels on lanes, RGB padded 3 -> 8.
    x = jnp.transpose(x_nchw, (0, 2, 3, 1)).reshape(N, S0, Cin).astype(f32)
    x = jnp.pad(x, ((0, 0), (0, 0), (0, 8 - Cin)))
    x = x.reshape(steps, B * S0, 8)

    f0, a0 = params["stages"][0]
    f1 = params["stages"][1][0]

    C = params["w_ext"].shape[0]
    HID = f0["w1"].shape[0]
    AH = a0["wqkv"].shape[0] // 3
    heads = AH // CHANNELS_PER_ATTENTION_HEAD
    groups = HID // CHANNELS_PER_CONV_GROUP
    dh = CHANNELS_PER_ATTENTION_HEAD

    # ExtractionLayer (1x1, uncentered, no bias)
    w_ext = jnp.pad(_pointwise(params["w_ext"]), ((0, 8 - Cin), (0, 0)))

    # ---- stage 0: FFN ----
    acc = jnp.ones((), f32)
    alpha = jnp.tanh(f0["alpha_raw"])  # TODO(synk): BoundedParameter bounding fn not provided; tanh assumed.
    gin = jnp.reshape(lax.rsqrt(acc), (-1, 1))
    f0_w1 = _pointwise(_center_conv(f0["w1"])) * gin
    f0_b1 = jnp.reshape(f0["b1"], (1, -1))
    f0_w2 = _grouped_stacked_weights(f0["w2"], groups) * SQRT2
    f0_w3 = _pointwise(_center_conv(f0["w3"])) * alpha[None, :] * SQRT2
    acc = acc + alpha * alpha

    # ---- stage 0: attention ----
    alpha = jnp.tanh(a0["alpha_raw"])
    gin = jnp.reshape(lax.rsqrt(acc), (-1, 1))
    wqkv = _pointwise(_center_conv(a0["wqkv"])) * gin
    # TODO(synk): exact QKV channel split of CosineAttention not provided; [q|k|v] chunks assumed.
    a_wq, a_wk, a_wv = wqkv[:, :AH], wqkv[:, AH:2 * AH], wqkv[:, 2 * AH:]
    bqkv = jnp.reshape(a0["bqkv"], (1, -1))
    a_bq, a_bk, a_bv = bqkv[:, :AH], bqkv[:, AH:2 * AH], bqkv[:, 2 * AH:]
    a_wproj = _pointwise(_center_conv(a0["wproj"])) * alpha[None, :]
    acc = acc + alpha * alpha

    # ---- downsample (FastPath) per-channel gain ----
    gds = jnp.reshape(lax.rsqrt(acc), (1, -1))

    # ---- stage 1: FFN ----
    acc = jnp.ones((), f32)
    alpha = jnp.tanh(f1["alpha_raw"])
    gin = jnp.reshape(lax.rsqrt(acc), (-1, 1))
    f1_w1 = _pointwise(_center_conv(f1["w1"])) * gin
    f1_b1 = jnp.reshape(f1["b1"], (1, -1))
    f1_w2 = _grouped_stacked_weights(f1["w2"], groups) * SQRT2
    f1_w3 = _pointwise(_center_conv(f1["w3"])) * alpha[None, :] * SQRT2
    acc = acc + alpha * alpha

    # ---- head (float32) ----
    # TODO(synk): DiscriminativeBasis source not provided; learnable depthwise 4x4 "valid" basis conv assumed.
    gain_head = lax.rsqrt(acc)
    wb = params["head"]["wbasis"]
    basis = jnp.transpose(wb[:, 0], (1, 2, 0)).reshape(S1, C) * gain_head[None, :]
    basis_t = jnp.tile(basis, (B, 1))
    wm1 = jnp.transpose(_center_linear(params["head"]["wm1"]), (1, 0))
    wm2 = _center_linear(params["head"]["wm2"]) * SQRT2

    # ---- spatial / per-sample constants ----
    down = _downsample_matrix(H, W, params["filter"])
    down_bd = jnp.kron(jnp.eye(B, dtype=f32), down).astype(bf16)
    m0 = jnp.asarray(np.tile(_conv_tap_masks(H, W, HID), (B, 1)), bf16)
    m1 = jnp.asarray(np.tile(_conv_tap_masks(H // 2, W // 2, HID), (B, 1)), bf16)
    bm = jnp.asarray(np.kron(np.eye(B, dtype=np.float32),
                             np.ones((S0, S0), np.float32)), bf16)
    hsel = np.kron(np.eye(B, dtype=np.float32), np.ones((1, S1), np.float32))
    hsum = np.kron(np.eye(heads, dtype=np.float32), np.ones((dh, dh), np.float32))
    hmask = np.kron(np.eye(heads, dtype=np.float32), np.ones((1, dh), np.float32))

    # ---- pack constants into two lane-dense slabs ----
    wslab, woffs = _pack_slab(
        [("w_ext", w_ext), ("f0_w1", f0_w1), ("f0_w2", f0_w2), ("f0_w3", f0_w3),
         ("a_wq", a_wq), ("a_wk", a_wk), ("a_wv", a_wv), ("a_wproj", a_wproj),
         ("f1_w1", f1_w1), ("f1_w2", f1_w2), ("f1_w3", f1_w3)],
        bf16, 16)
    fslab, foffs = _pack_slab(
        [("f0_b1", f0_b1), ("a_bq", a_bq), ("a_bk", a_bk), ("a_bv", a_bv),
         ("f1_b1", f1_b1), ("gds", gds), ("hsum", hsum), ("hmask", hmask),
         ("basis", basis_t), ("hsel", hsel), ("wm1", wm1), ("wm2", wm2)],
        f32, 8)

    kernel = _build_kernel(B, H, W, heads, woffs, foffs)

    def zero_idx(nd):
        return lambda i: (0,) * nd

    consts = [wslab, fslab, m0, m1, down_bd, bm]
    in_specs = [pl.BlockSpec((1, B * S0, 8), lambda i: (i, 0, 0))]
    in_specs += [pl.BlockSpec(a.shape, zero_idx(a.ndim)) for a in consts]

    out = pl.pallas_call(
        kernel,
        out_shape=jax.ShapeDtypeStruct((steps, 8, 128), jnp.float32),
        grid=(steps,),
        in_specs=in_specs,
        out_specs=pl.BlockSpec((1, 8, 128), lambda i: (i, 0, 0)),
        compiler_params=pltpu.CompilerParams(dimension_semantics=("parallel",)),
    )(x, *consts)

    return out[:, :B, 0].reshape(-1)     # x.view(x.shape[0])


# ----------------------------------------------------------------------------
# Deterministic synthetic parameters for this instantiation
#   WidthPerStage=[32,32]  BlocksPerStage=[['FFN','Attention'],['FFN']]
#   FFNWidthRatio=2  AttentionWidthRatio=1  MLPWidthRatio=2  KernelSize=3
# ----------------------------------------------------------------------------
def make_params(key):
    ks = iter(jax.random.split(key, 32))

    def nrm(shape, fan_in, gain=1.0):
        return (gain / math.sqrt(fan_in)) * jax.random.normal(next(ks), shape, jnp.float32)

    W0 = 32
    FFN_HIDDEN = 64
    ATT_HIDDEN = 32
    GROUPS = FFN_HIDDEN // CHANNELS_PER_CONV_GROUP
    K = 3

    def ffn_block():
        return dict(
            w1=nrm((FFN_HIDDEN, W0, 1, 1), W0),
            b1=0.1 * jax.random.normal(next(ks), (FFN_HIDDEN,), jnp.float32),
            w2=nrm((FFN_HIDDEN, FFN_HIDDEN // GROUPS, K, K), (FFN_HIDDEN // GROUPS) * K * K),
            w3=nrm((W0, FFN_HIDDEN, 1, 1), FFN_HIDDEN),
            alpha_raw=0.5 * jax.random.normal(next(ks), (W0,), jnp.float32),
        )

    def attn_block():
        return dict(
            wqkv=nrm((3 * ATT_HIDDEN, W0, 1, 1), W0),
            bqkv=0.1 * jax.random.normal(next(ks), (3 * ATT_HIDDEN,), jnp.float32),
            wproj=nrm((W0, ATT_HIDDEN, 1, 1), ATT_HIDDEN),
            alpha_raw=0.5 * jax.random.normal(next(ks), (W0,), jnp.float32),
        )

    taps = jnp.array([1.0, 2.0, 1.0], jnp.float32)
    filt = jnp.outer(taps, taps)
    filt = filt / filt.sum()

    return dict(
        w_ext=nrm((W0, 3, 1, 1), 3),
        filter=filt,
        stages=[[ffn_block(), attn_block()], [ffn_block()]],
        head=dict(
            wbasis=nrm((W0, 1, 4, 4), 16),      # DiscriminativeBasis depthwise 4x4
            wm1=nrm((W0 * 2, W0), W0),          # MLP hidden = W0 * MLPWidthRatio(2)
            wm2=nrm((1, W0 * 2), W0 * 2),       # output dim 1 (NumberOfClasses=None)
        ),
    )


if __name__ == "__main__":
    key = jax.random.PRNGKey(0)
    pkey, xkey = jax.random.split(key)
    params = make_params(pkey)
    x = jax.random.normal(xkey, (2, 3, 8, 8), jnp.float32)   # NCHW, like the PyTorch module
    fwd = jax.jit(discriminator_forward)
    out = jax.block_until_ready(fwd(params, x))
    assert out.shape == (2,) and out.dtype == jnp.float32
    print("KERNEL_OK")
</pallas_src>

<mosaic_0001>
module attributes {stable_mosaic.version = 11 : i64} {
  func.func @kernel(%arg0: i32, %arg1: memref<1x64x8xf32, #tpu.memory_space<vmem>>, %arg2: memref<1488x128xbf16, #tpu.memory_space<vmem>>, %arg3: memref<152x128xf32, #tpu.memory_space<vmem>>, %arg4: memref<64x576xbf16, #tpu.memory_space<vmem>>, %arg5: memref<16x576xbf16, #tpu.memory_space<vmem>>, %arg6: memref<16x64xbf16, #tpu.memory_space<vmem>>, %arg7: memref<64x64xbf16, #tpu.memory_space<vmem>>, %arg8: memref<1x8x128xf32, #tpu.memory_space<vmem>>) attributes {dimension_semantics = [#tpu.dimension_semantics<parallel>], iteration_bounds = array<i64: 2>, scalar_prefetch = 0 : i64, scratch_operands = 0 : i64, tpu.core_type = #tpu.core_type<tc>, window_params = [{transform_indices = @transform_0, window_bounds = array<i64: 1, 64, 8>}, {pipeline_mode = #tpu.pipeline_mode<synchronous>, transform_indices = @transform_1, window_bounds = array<i64: 1488, 128>}, {pipeline_mode = #tpu.pipeline_mode<synchronous>, transform_indices = @transform_2, window_bounds = array<i64: 152, 128>}, {pipeline_mode = #tpu.pipeline_mode<synchronous>, transform_indices = @transform_3, window_bounds = array<i64: 64, 576>}, {pipeline_mode = #tpu.pipeline_mode<synchronous>, transform_indices = @transform_4, window_bounds = array<i64: 16, 576>}, {pipeline_mode = #tpu.pipeline_mode<synchronous>, transform_indices = @transform_5, window_bounds = array<i64: 16, 64>}, {pipeline_mode = #tpu.pipeline_mode<synchronous>, transform_indices = @transform_6, window_bounds = array<i64: 64, 64>}, {transform_indices = @transform_7, window_bounds = array<i64: 1, 8, 128>}]} {
    %c0 = arith.constant 0 : index
    %c0_0 = arith.constant 0 : index
    %c0_1 = arith.constant 0 : index
    %0 = vector.load %arg1[%c0, %c0_0, %c0_1] : memref<1x64x8xf32, #tpu.memory_space<vmem>>, vector<1x64x8xf32>
    %1 = vector.shape_cast %0 : vector<1x64x8xf32> to vector<64x8xf32>
    %c0_2 = arith.constant 0 : index
    %c0_3 = arith.constant 0 : index
    %2 = vector.load %arg2[%c0_2, %c0_3] : memref<1488x128xbf16, #tpu.memory_space<vmem>>, vector<8x32xbf16>
    %3 = arith.truncf %1 : vector<64x8xf32> to vector<64x8xbf16>
    %cst = arith.constant dense<0.000000e+00> : vector<64x32xf32>
    %4 = tpu.matmul %3, %2, %cst {dimension_numbers = #tpu.dot_dimension_numbers<[1], [0], [0], [1], [0, 0, 1, 1], [], []>} : vector<64x8xbf16>, vector<8x32xbf16>, vector<64x32xf32> -> vector<64x32xf32>
    %5 = arith.truncf %4 : vector<64x32xf32> to vector<64x32xbf16>
    %c16 = arith.constant 16 : index
    %c0_4 = arith.constant 0 : index
    %6 = vector.load %arg2[%c16, %c0_4] : memref<1488x128xbf16, #tpu.memory_space<vmem>>, vector<32x64xbf16>
    %cst_5 = arith.constant dense<0.000000e+00> : vector<64x64xf32>
    %7 = tpu.matmul %5, %6, %cst_5 {dimension_numbers = #tpu.dot_dimension_numbers<[1], [0], [0], [1], [0, 0, 1, 1], [], []>} : vector<64x32xbf16>, vector<32x64xbf16>, vector<64x64xf32> -> vector<64x64xf32>
    %c0_6 = arith.constant 0 : index
    %c0_7 = arith.constant 0 : index
    %8 = vector.load %arg3[%c0_6, %c0_7] : memref<152x128xf32, #tpu.memory_space<vmem>>, vector<1x64xf32>
    %9 = vector.broadcast %8 : vector<1x64xf32> to vector<64x64xf32>
    %10 = arith.addf %7, %9 : vector<64x64xf32>
    %cst_8 = arith.constant 0.000000e+00 : f32
    %11 = vector.broadcast %cst_8 : f32 to vector<64x64xf32>
    %12 = arith.cmpf oge, %10, %11 : vector<64x64xf32>
    %cst_9 = arith.constant 2.000000e-01 : f32
    %13 = vector.broadcast %cst_9 : f32 to vector<64x64xf32>
    %14 = arith.mulf %13, %10 : vector<64x64xf32>
    %15 = arith.select %12, %10, %14 : vector<64x64xi1>, vector<64x64xf32>
    %c9_i32 = arith.constant 9 : i32
    %16 = tpu.dynamic_rotate %15 by %c9_i32 dim 0 : vector<64x64xf32>, i32 -> vector<64x64xf32>
    %c8_i32 = arith.constant 8 : i32
    %17 = tpu.dynamic_rotate %15 by %c8_i32 dim 0 : vector<64x64xf32>, i32 -> vector<64x64xf32>
    %c7_i32 = arith.constant 7 : i32
    %18 = tpu.dynamic_rotate %15 by %c7_i32 dim 0 : vector<64x64xf32>, i32 -> vector<64x64xf32>
    %c1_i32 = arith.constant 1 : i32
    %19 = tpu.dynamic_rotate %15 by %c1_i32 dim 0 : vector<64x64xf32>, i32 -> vector<64x64xf32>
    %c63_i32 = arith.constant 63 : i32
    %20 = tpu.dynamic_rotate %15 by %c63_i32 dim 0 : vector<64x64xf32>, i32 -> vector<64x64xf32>
    %c57_i32 = arith.constant 57 : i32
    %21 = tpu.dynamic_rotate %15 by %c57_i32 dim 0 : vector<64x64xf32>, i32 -> vector<64x64xf32>
    %c56_i32 = arith.constant 56 : i32
    %22 = tpu.dynamic_rotate %15 by %c56_i32 dim 0 : vector<64x64xf32>, i32 -> vector<64x64xf32>
    %c55_i32 = arith.constant 55 : i32
    %23 = tpu.dynamic_rotate %15 by %c55_i32 dim 0 : vector<64x64xf32>, i32 -> vector<64x64xf32>
    %24 = tpu.concatenate %16, %17, %18, %19, %15, %20, %21, %22, %23 in 1 : vector<64x64xf32>, vector<64x64xf32>, vector<64x64xf32>, vector<64x64xf32>, vector<64x64xf32>, vector<64x64xf32>, vector<64x64xf32>, vector<64x64xf32>, vector<64x64xf32> -> vector<64x576xf32>
    %25 = arith.truncf %24 : vector<64x576xf32> to vector<64x576xbf16>
    %c0_10 = arith.constant 0 : index
    %c0_11 = arith.constant 0 : index
    %26 = vector.load %arg4[%c0_10, %c0_11] : memref<64x576xbf16, #tpu.memory_space<vmem>>, vector<64x576xbf16>
    %27 = arith.mulf %25, %26 : vector<64x576xbf16>
    %c48 = arith.constant 48 : index
    %c0_12 = arith.constant 0 : index
    %28 = vector.load %arg2[%c48, %c0_12] : memref<1488x128xbf16, #tpu.memory_space<vmem>>, vector<576x64xbf16>
    %cst_13 = arith.constant dense<0.000000e+00> : vector<64x64xf32>
    %29 = tpu.matmul %27, %28, %cst_13 {dimension_numbers = #tpu.dot_dimension_numbers<[1], [0], [0], [1], [0, 0, 1, 1], [], []>} : vector<64x576xbf16>, vector<576x64xbf16>, vector<64x64xf32> -> vector<64x64xf32>
    %cst_14 = arith.constant 0.000000e+00 : f32
    %30 = vector.broadcast %cst_14 : f32 to vector<64x64xf32>
    %31 = arith.cmpf oge, %29, %30 : vector<64x64xf32>
    %cst_15 = arith.constant 2.000000e-01 : f32
    %32 = vector.broadcast %cst_15 : f32 to vector<64x64xf32>
    %33 = arith.mulf %32, %29 : vector<64x64xf32>
    %34 = arith.select %31, %29, %33 : vector<64x64xi1>, vector<64x64xf32>
    %c624 = arith.constant 624 : index
    %c0_16 = arith.constant 0 : index
    %35 = vector.load %arg2[%c624, %c0_16] : memref<1488x128xbf16, #tpu.memory_space<vmem>>, vector<64x32xbf16>
    %36 = arith.truncf %34 : vector<64x64xf32> to vector<64x64xbf16>
    %cst_17 = arith.constant dense<0.000000e+00> : vector<64x32xf32>
    %37 = tpu.matmul %36, %35, %cst_17 {dimension_numbers = #tpu.dot_dimension_numbers<[1], [0], [0], [1], [0, 0, 1, 1], [], []>} : vector<64x64xbf16>, vector<64x32xbf16>, vector<64x32xf32> -> vector<64x32xf32>
    %38 = arith.extf %5 : vector<64x32xbf16> to vector<64x32xf32>
    %39 = arith.addf %38, %37 : vector<64x32xf32>
    %40 = arith.truncf %39 : vector<64x32xf32> to vector<64x32xbf16>
    %c688 = arith.constant 688 : index
    %c0_18 = arith.constant 0 : index
    %41 = vector.load %arg2[%c688, %c0_18] : memref<1488x128xbf16, #tpu.memory_space<vmem>>, vector<32x32xbf16>
    %cst_19 = arith.constant dense<0.000000e+00> : vector<64x32xf32>
    %42 = tpu.matmul %40, %41, %cst_19 {dimension_numbers = #tpu.dot_dimension_numbers<[1], [0], [0], [1], [0, 0, 1, 1], [], []>} : vector<64x32xbf16>, vector<32x32xbf16>, vector<64x32xf32> -> vector<64x32xf32>
    %c8 = arith.constant 8 : index
    %c0_20 = arith.constant 0 : index
    %43 = vector.load %arg3[%c8, %c0_20] : memref<152x128xf32, #tpu.memory_space<vmem>>, vector<1x32xf32>
    %44 = vector.broadcast %43 : vector<1x32xf32> to vector<64x32xf32>
    %45 = arith.addf %42, %44 : vector<64x32xf32>
    %c720 = arith.constant 720 : index
    %c0_21 = arith.constant 0 : index
    %46 = vector.load %arg2[%c720, %c0_21] : memref<1488x128xbf16, #tpu.memory_space<vmem>>, vector<32x32xbf16>
    %cst_22 = arith.constant dense<0.000000e+00> : vector<64x32xf32>
    %47 = tpu.matmul %40, %46, %cst_22 {dimension_numbers = #tpu.dot_dimension_numbers<[1], [0], [0], [1], [0, 0, 1, 1], [], []>} : vector<64x32xbf16>, vector<32x32xbf16>, vector<64x32xf32> -> vector<64x32xf32>
    %c16_23 = arith.constant 16 : index
    %c0_24 = arith.constant 0 : index
    %48 = vector.load %arg3[%c16_23, %c0_24] : memref<152x128xf32, #tpu.memory_space<vmem>>, vector<1x32xf32>
    %49 = vector.broadcast %48 : vector<1x32xf32> to vector<64x32xf32>
    %50 = arith.addf %47, %49 : vector<64x32xf32>
    %c752 = arith.constant 752 : index
    %c0_25 = arith.constant 0 : index
    %51 = vector.load %arg2[%c752, %c0_25] : memref<1488x128xbf16, #tpu.memory_space<vmem>>, vector<32x32xbf16>
    %cst_26 = arith.constant dense<0.000000e+00> : vector<64x32xf32>
    %52 = tpu.matmul %40, %51, %cst_26 {dimension_numbers = #tpu.dot_dimension_numbers<[1], [0], [0], [1], [0, 0, 1, 1], [], []>} : vector<64x32xbf16>, vector<32x32xbf16>, vector<64x32xf32> -> vector<64x32xf32>
    %c24 = arith.constant 24 : index
    %c0_27 = arith.constant 0 : index
    %53 = vector.load %arg3[%c24, %c0_27] : memref<152x128xf32, #tpu.memory_space<vmem>>, vector<1x32xf32>
    %54 = vector.broadcast %53 : vector<1x32xf32> to vector<64x32xf32>
    %55 = arith.addf %52, %54 : vector<64x32xf32>
    %c48_28 = arith.constant 48 : index
    %c0_29 = arith.constant 0 : index
    %56 = vector.load %arg3[%c48_28, %c0_29] : memref<152x128xf32, #tpu.memory_space<vmem>>, vector<32x32xf32>
    %c80 = arith.constant 80 : index
    %c0_30 = arith.constant 0 : index
    %57 = vector.load %arg3[%c80, %c0_30] : memref<152x128xf32, #tpu.memory_space<vmem>>, vector<2x32xf32>
    %58 = arith.mulf %45, %45 : vector<64x32xf32>
    %cst_31 = arith.constant dense<0.000000e+00> : vector<64x32xf32>
    %59 = tpu.matmul %58, %56, %cst_31 {dimension_numbers = #tpu.dot_dimension_numbers<[1], [0], [0], [1], [0, 0, 1, 1], [], []>} : vector<64x32xf32>, vector<32x32xf32>, vector<64x32xf32> -> vector<64x32xf32>
    %cst_32 = arith.constant 1.000000e-24 : f32
    %60 = vector.broadcast %cst_32 : f32 to vector<64x32xf32>
    %61 = arith.maximumf %59, %60 : vector<64x32xf32>
    %62 = math.rsqrt %61 : vector<64x32xf32>
    %cst_33 = arith.constant 2.500000e-01 : f32
    %63 = vector.broadcast %cst_33 : f32 to vector<64x32xf32>
    %64 = arith.mulf %62, %63 : vector<64x32xf32>
    %65 = arith.mulf %45, %64 : vector<64x32xf32>
    %66 = arith.mulf %50, %50 : vector<64x32xf32>
    %cst_34 = arith.constant dense<0.000000e+00> : vector<64x32xf32>
    %67 = tpu.matmul %66, %56, %cst_34 {dimension_numbers = #tpu.dot_dimension_numbers<[1], [0], [0], [1], [0, 0, 1, 1], [], []>} : vector<64x32xf32>, vector<32x32xf32>, vector<64x32xf32> -> vector<64x32xf32>
    %cst_35 = arith.constant 1.000000e-24 : f32
    %68 = vector.broadcast %cst_35 : f32 to vector<64x32xf32>
    %69 = arith.maximumf %67, %68 : vector<64x32xf32>
    %70 = math.rsqrt %69 : vector<64x32xf32>
    %71 = arith.mulf %50, %70 : vector<64x32xf32>
    %72 = arith.truncf %71 : vector<64x32xf32> to vector<64x32xbf16>
    %73 = arith.truncf %55 : vector<64x32xf32> to vector<64x32xbf16>
    %c0_36 = arith.constant 0 : index
    %c0_37 = arith.constant 0 : index
    %74 = vector.load %arg7[%c0_36, %c0_37] : memref<64x64xbf16, #tpu.memory_space<vmem>>, vector<64x64xbf16>
    %cst_38 = arith.constant 0.000000e+00 : f32
    %75 = vector.broadcast %cst_38 : f32 to vector<64x32xf32>
    %76 = vector.extract_strided_slice %57 {offsets = [0, 0], sizes = [1, 32], strides = [1, 1]} : vector<2x32xf32> to vector<1x32xf32>
    %77 = vector.broadcast %76 : vector<1x32xf32> to vector<64x32xf32>
    %78 = arith.mulf %65, %77 : vector<64x32xf32>
    %79 = arith.truncf %78 : vector<64x32xf32> to vector<64x32xbf16>
    %cst_39 = arith.constant dense<0.000000e+00> : vector<64x64xf32>
    %80 = tpu.matmul %79, %72, %cst_39 {dimension_numbers = #tpu.dot_dimension_numbers<[1], [1], [0], [0], [0, 0, 1, 0], [], []>} : vector<64x32xbf16>, vector<64x32xbf16>, vector<64x64xf32> -> vector<64x64xf32>
    %81 = math.exp %80 : vector<64x64xf32>
    %82 = arith.extf %74 : vector<64x64xbf16> to vector<64x64xf32>
    %83 = arith.mulf %81, %82 : vector<64x64xf32>
    %cst_40 = arith.constant dense<0.000000e+00> : vector<64xf32>
    %84 = vector.multi_reduction <add>, %83, %cst_40 [1] : vector<64x64xf32> to vector<64xf32>
    %85 = vector.shape_cast %84 : vector<64xf32> to vector<64x1xf32>
    %86 = tpu.reciprocal %85 {approx = true} : vector<64x1xf32> -> vector<64x1xf32>
    %87 = vector.broadcast %86 : vector<64x1xf32> to vector<64x64xf32>
    %88 = arith.mulf %83, %87 : vector<64x64xf32>
    %89 = arith.truncf %88 : vector<64x64xf32> to vector<64x64xbf16>
    %cst_41 = arith.constant dense<0.000000e+00> : vector<64x32xf32>
    %90 = tpu.matmul %89, %73, %cst_41 {dimension_numbers = #tpu.dot_dimension_numbers<[1], [0], [0], [1], [0, 0, 1, 1], [], []>} : vector<64x64xbf16>, vector<64x32xbf16>, vector<64x32xf32> -> vector<64x32xf32>
    %91 = vector.broadcast %76 : vector<1x32xf32> to vector<64x32xf32>
    %92 = arith.mulf %90, %91 : vector<64x32xf32>
    %93 = arith.addf %75, %92 : vector<64x32xf32>
    %94 = vector.extract_strided_slice %57 {offsets = [1, 0], sizes = [1, 32], strides = [1, 1]} : vector<2x32xf32> to vector<1x32xf32>
    %95 = vector.broadcast %94 : vector<1x32xf32> to vector<64x32xf32>
    %96 = arith.mulf %65, %95 : vector<64x32xf32>
    %97 = arith.truncf %96 : vector<64x32xf32> to vector<64x32xbf16>
    %cst_42 = arith.constant dense<0.000000e+00> : vector<64x64xf32>
    %98 = tpu.matmul %97, %72, %cst_42 {dimension_numbers = #tpu.dot_dimension_numbers<[1], [1], [0], [0], [0, 0, 1, 0], [], []>} : vector<64x32xbf16>, vector<64x32xbf16>, vector<64x64xf32> -> vector<64x64xf32>
    %99 = math.exp %98 : vector<64x64xf32>
    %100 = arith.extf %74 : vector<64x64xbf16> to vector<64x64xf32>
    %101 = arith.mulf %99, %100 : vector<64x64xf32>
    %cst_43 = arith.constant dense<0.000000e+00> : vector<64xf32>
    %102 = vector.multi_reduction <add>, %101, %cst_43 [1] : vector<64x64xf32> to vector<64xf32>
    %103 = vector.shape_cast %102 : vector<64xf32> to vector<64x1xf32>
    %104 = tpu.reciprocal %103 {approx = true} : vector<64x1xf32> -> vector<64x1xf32>
    %105 = vector.broadcast %104 : vector<64x1xf32> to vector<64x64xf32>
    %106 = arith.mulf %101, %105 : vector<64x64xf32>
    %107 = arith.truncf %106 : vector<64x64xf32> to vector<64x64xbf16>
    %cst_44 = arith.constant dense<0.000000e+00> : vector<64x32xf32>
    %108 = tpu.matmul %107, %73, %cst_44 {dimension_numbers = #tpu.dot_dimension_numbers<[1], [0], [0], [1], [0, 0, 1, 1], [], []>} : vector<64x64xbf16>, vector<64x32xbf16>, vector<64x32xf32> -> vector<64x32xf32>
    %109 = vector.broadcast %94 : vector<1x32xf32> to vector<64x32xf32>
    %110 = arith.mulf %108, %109 : vector<64x32xf32>
    %111 = arith.addf %93, %110 : vector<64x32xf32>
    %c784 = arith.constant 784 : index
    %c0_45 = arith.constant 0 : index
    %112 = vector.load %arg2[%c784, %c0_45] : memref<1488x128xbf16, #tpu.memory_space<vmem>>, vector<32x32xbf16>
    %113 = arith.truncf %111 : vector<64x32xf32> to vector<64x32xbf16>
    %cst_46 = arith.constant dense<0.000000e+00> : vector<64x32xf32>
    %114 = tpu.matmul %113, %112, %cst_46 {dimension_numbers = #tpu.dot_dimension_numbers<[1], [0], [0], [1], [0, 0, 1, 1], [], []>} : vector<64x32xbf16>, vector<32x32xbf16>, vector<64x32xf32> -> vector<64x32xf32>
    %115 = arith.extf %40 : vector<64x32xbf16> to vector<64x32xf32>
    %116 = arith.addf %115, %114 : vector<64x32xf32>
    %117 = arith.truncf %116 : vector<64x32xf32> to vector<64x32xbf16>
    %c0_47 = arith.constant 0 : index
    %c0_48 = arith.constant 0 : index
    %118 = vector.load %arg6[%c0_47, %c0_48] : memref<16x64xbf16, #tpu.memory_space<vmem>>, vector<16x64xbf16>
    %cst_49 = arith.constant dense<0.000000e+00> : vector<16x32xf32>
    %119 = tpu.matmul %118, %117, %cst_49 {dimension_numbers = #tpu.dot_dimension_numbers<[1], [0], [0], [1], [0, 0, 1, 1], [], []>} : vector<16x64xbf16>, vector<64x32xbf16>, vector<16x32xf32> -> vector<16x32xf32>
    %c40 = arith.constant 40 : index
    %c0_50 = arith.constant 0 : index
    %120 = vector.load %arg3[%c40, %c0_50] : memref<152x128xf32, #tpu.memory_space<vmem>>, vector<1x32xf32>
    %121 = vector.broadcast %120 : vector<1x32xf32> to vector<16x32xf32>
    %122 = arith.mulf %119, %121 : vector<16x32xf32>
    %123 = arith.truncf %122 : vector<16x32xf32> to vector<16x32xbf16>
    %c816 = arith.constant 816 : index
    %c0_51 = arith.constant 0 : index
    %124 = vector.load %arg2[%c816, %c0_51] : memref<1488x128xbf16, #tpu.memory_space<vmem>>, vector<32x64xbf16>
    %cst_52 = arith.constant dense<0.000000e+00> : vector<16x64xf32>
    %125 = tpu.matmul %123, %124, %cst_52 {dimension_numbers = #tpu.dot_dimension_numbers<[1], [0], [0], [1], [0, 0, 1, 1], [], []>} : vector<16x32xbf16>, vector<32x64xbf16>, vector<16x64xf32> -> vector<16x64xf32>
    %c32 = arith.constant 32 : index
    %c0_53 = arith.constant 0 : index
    %126 = vector.load %arg3[%c32, %c0_53] : memref<152x128xf32, #tpu.memory_space<vmem>>, vector<1x64xf32>
    %127 = vector.broadcast %126 : vector<1x64xf32> to vector<16x64xf32>
    %128 = arith.addf %125, %127 : vector<16x64xf32>
    %cst_54 = arith.constant 0.000000e+00 : f32
    %129 = vector.broadcast %cst_54 : f32 to vector<16x64xf32>
    %130 = arith.cmpf oge, %128, %129 : vector<16x64xf32>
    %cst_55 = arith.constant 2.000000e-01 : f32
    %131 = vector.broadcast %cst_55 : f32 to vector<16x64xf32>
    %132 = arith.mulf %131, %128 : vector<16x64xf32>
    %133 = arith.select %130, %128, %132 : vector<16x64xi1>, vector<16x64xf32>
    %c5_i32 = arith.constant 5 : i32
    %134 = tpu.dynamic_rotate %133 by %c5_i32 dim 0 : vector<16x64xf32>, i32 -> vector<16x64xf32>
    %c4_i32 = arith.constant 4 : i32
    %135 = tpu.dynamic_rotate %133 by %c4_i32 dim 0 : vector<16x64xf32>, i32 -> vector<16x64xf32>
    %c3_i32 = arith.constant 3 : i32
    %136 = tpu.dynamic_rotate %133 by %c3_i32 dim 0 : vector<16x64xf32>, i32 -> vector<16x64xf32>
    %c1_i32_56 = arith.constant 1 : i32
    %137 = tpu.dynamic_rotate %133 by %c1_i32_56 dim 0 : vector<16x64xf32>, i32 -> vector<16x64xf32>
    %c15_i32 = arith.constant 15 : i32
    %138 = tpu.dynamic_rotate %133 by %c15_i32 dim 0 : vector<16x64xf32>, i32 -> vector<16x64xf32>
    %c13_i32 = arith.constant 13 : i32
    %139 = tpu.dynamic_rotate %133 by %c13_i32 dim 0 : vector<16x64xf32>, i32 -> vector<16x64xf32>
    %c12_i32 = arith.constant 12 : i32
    %140 = tpu.dynamic_rotate %133 by %c12_i32 dim 0 : vector<16x64xf32>, i32 -> vector<16x64xf32>
    %c11_i32 = arith.constant 11 : i32
    %141 = tpu.dynamic_rotate %133 by %c11_i32 dim 0 : vector<16x64xf32>, i32 -> vector<16x64xf32>
    %142 = tpu.concatenate %134, %135, %136, %137, %133, %138, %139, %140, %141 in 1 : vector<16x64xf32>, vector<16x64xf32>, vector<16x64xf32>, vector<16x64xf32>, vector<16x64xf32>, vector<16x64xf32>, vector<16x64xf32>, vector<16x64xf32>, vector<16x64xf32> -> vector<16x576xf32>
    %143 = arith.truncf %142 : vector<16x576xf32> to vector<16x576xbf16>
    %c0_57 = arith.constant 0 : index
    %c0_58 = arith.constant 0 : index
    %144 = vector.load %arg5[%c0_57, %c0_58] : memref<16x576xbf16, #tpu.memory_space<vmem>>, vector<16x576xbf16>
    %145 = arith.mulf %143, %144 : vector<16x576xbf16>
    %c848 = arith.constant 848 : index
    %c0_59 = arith.constant 0 : index
    %146 = vector.load %arg2[%c848, %c0_59] : memref<1488x128xbf16, #tpu.memory_space<vmem>>, vector<576x64xbf16>
    %cst_60 = arith.constant dense<0.000000e+00> : vector<16x64xf32>
    %147 = tpu.matmul %145, %146, %cst_60 {dimension_numbers = #tpu.dot_dimension_numbers<[1], [0], [0], [1], [0, 0, 1, 1], [], []>} : vector<16x576xbf16>, vector<576x64xbf16>, vector<16x64xf32> -> vector<16x64xf32>
    %cst_61 = arith.constant 0.000000e+00 : f32
    %148 = vector.broadcast %cst_61 : f32 to vector<16x64xf32>
    %149 = arith.cmpf oge, %147, %148 : vector<16x64xf32>
    %cst_62 = arith.constant 2.000000e-01 : f32
    %150 = vector.broadcast %cst_62 : f32 to vector<16x64xf32>
    %151 = arith.mulf %150, %147 : vector<16x64xf32>
    %152 = arith.select %149, %147, %151 : vector<16x64xi1>, vector<16x64xf32>
    %c1424 = arith.constant 1424 : index
    %c0_63 = arith.constant 0 : index
    %153 = vector.load %arg2[%c1424, %c0_63] : memref<1488x128xbf16, #tpu.memory_space<vmem>>, vector<64x32xbf16>
    %154 = arith.truncf %152 : vector<16x64xf32> to vector<16x64xbf16>
    %cst_64 = arith.constant dense<0.000000e+00> : vector<16x32xf32>
    %155 = tpu.matmul %154, %153, %cst_64 {dimension_numbers = #tpu.dot_dimension_numbers<[1], [0], [0], [1], [0, 0, 1, 1], [], []>} : vector<16x64xbf16>, vector<64x32xbf16>, vector<16x32xf32> -> vector<16x32xf32>
    %156 = arith.extf %123 : vector<16x32xbf16> to vector<16x32xf32>
    %157 = arith.addf %156, %155 : vector<16x32xf32>
    %158 = arith.truncf %157 : vector<16x32xf32> to vector<16x32xbf16>
    %159 = arith.extf %158 : vector<16x32xbf16> to vector<16x32xf32>
    %c88 = arith.constant 88 : index
    %c0_65 = arith.constant 0 : index
    %160 = vector.load %arg3[%c88, %c0_65] : memref<152x128xf32, #tpu.memory_space<vmem>>, vector<16x32xf32>
    %161 = arith.mulf %159, %160 : vector<16x32xf32>
    %c104 = arith.constant 104 : index
    %c0_66 = arith.constant 0 : index
    %162 = vector.load %arg3[%c104, %c0_66] : memref<152x128xf32, #tpu.memory_space<vmem>>, vector<1x16xf32>
    %cst_67 = arith.constant dense<0.000000e+00> : vector<1x32xf32>
    %163 = tpu.matmul %162, %161, %cst_67 {dimension_numbers = #tpu.dot_dimension_numbers<[1], [0], [0], [1], [0, 0, 1, 1], [], []>} : vector<1x16xf32>, vector<16x32xf32>, vector<1x32xf32> -> vector<1x32xf32>
    %c112 = arith.constant 112 : index
    %c0_68 = arith.constant 0 : index
    %164 = vector.load %arg3[%c112, %c0_68] : memref<152x128xf32, #tpu.memory_space<vmem>>, vector<32x64xf32>
    %cst_69 = arith.constant dense<0.000000e+00> : vector<1x64xf32>
    %165 = tpu.matmul %163, %164, %cst_69 {dimension_numbers = #tpu.dot_dimension_numbers<[1], [0], [0], [1], [0, 0, 1, 1], [], []>} : vector<1x32xf32>, vector<32x64xf32>, vector<1x64xf32> -> vector<1x64xf32>
    %cst_70 = arith.constant 0.000000e+00 : f32
    %166 = vector.broadcast %cst_70 : f32 to vector<1x64xf32>
    %167 = arith.cmpf oge, %165, %166 : vector<1x64xf32>
    %cst_71 = arith.constant 2.000000e-01 : f32
    %168 = vector.broadcast %cst_71 : f32 to vector<1x64xf32>
    %169 = arith.mulf %168, %165 : vector<1x64xf32>
    %170 = arith.select %167, %165, %169 : vector<1x64xi1>, vector<1x64xf32>
    %c144 = arith.constant 144 : index
    %c0_72 = arith.constant 0 : index
    %171 = vector.load %arg3[%c144, %c0_72] : memref<152x128xf32, #tpu.memory_space<vmem>>, vector<1x64xf32>
    %172 = arith.mulf %170, %171 : vector<1x64xf32>
    %cst_73 = arith.constant dense<0.000000e+00> : vector<1xf32>
    %173 = vector.multi_reduction <add>, %172, %cst_73 [1] : vector<1x64xf32> to vector<1xf32>
    %174 = vector.shape_cast %173 : vector<1xf32> to vector<1x1xf32>
    %175 = vector.shape_cast %174 : vector<1x1xf32> to vector<1x1xf32>
    %176 = vector.broadcast %175 : vector<1x1xf32> to vector<1x128xf32>
    %cst_74 = arith.constant 0.000000e+00 : f32
    %177 = vector.broadcast %cst_74 : f32 to vector<7x128xf32>
    %178 = tpu.concatenate %176, %177 in 0 : vector<1x128xf32>, vector<7x128xf32> -> vector<8x128xf32>
    %179 = vector.shape_cast %178 : vector<8x128xf32> to vector<1x8x128xf32>
    %c0_75 = arith.constant 0 : index
    %c0_76 = arith.constant 0 : index
    %c0_77 = arith.constant 0 : index
    %180 = vector.load %arg8[%c0_75, %c0_76, %c0_77] : memref<1x8x128xf32, #tpu.memory_space<vmem>>, vector<1x8x128xf32>
    tpu.vector_store %arg8[%c0_75, %c0_76, %c0_77], %179 {strides = array<i32>} : memref<1x8x128xf32, #tpu.memory_space<vmem>>, vector<1x8x128xf32>,
    return
  }
  func.func @transform_0(%arg0: i32) -> (i32, i32, i32) {
    %c0_i32 = arith.constant 0 : i32
    %c0_i32_0 = arith.constant 0 : i32
    %c0_i32_1 = arith.constant 0 : i32
    return %arg0, %c0_i32, %c0_i32_0 : i32, i32, i32
  }
  func.func @transform_1(%arg0: i32) -> (i32, i32) {
    %c0_i32 = arith.constant 0 : i32
    %c0_i32_0 = arith.constant 0 : i32
    %c0_i32_1 = arith.constant 0 : i32
    return %c0_i32, %c0_i32_0 : i32, i32
  }
  func.func @transform_2(%arg0: i32) -> (i32, i32) {
    %c0_i32 = arith.constant 0 : i32
    %c0_i32_0 = arith.constant 0 : i32
    %c0_i32_1 = arith.constant 0 : i32
    return %c0_i32, %c0_i32_0 : i32, i32
  }
  func.func @transform_3(%arg0: i32) -> (i32, i32) {
    %c0_i32 = arith.constant 0 : i32
    %c0_i32_0 = arith.constant 0 : i32
    %c0_i32_1 = arith.constant 0 : i32
    return %c0_i32, %c0_i32_0 : i32, i32
  }
  func.func @transform_4(%arg0: i32) -> (i32, i32) {
    %c0_i32 = arith.constant 0 : i32
    %c0_i32_0 = arith.constant 0 : i32
    %c0_i32_1 = arith.constant 0 : i32
    return %c0_i32, %c0_i32_0 : i32, i32
  }
  func.func @transform_5(%arg0: i32) -> (i32, i32) {
    %c0_i32 = arith.constant 0 : i32
    %c0_i32_0 = arith.constant 0 : i32
    %c0_i32_1 = arith.constant 0 : i32
    return %c0_i32, %c0_i32_0 : i32, i32
  }
  func.func @transform_6(%arg0: i32) -> (i32, i32) {
    %c0_i32 = arith.constant 0 : i32
    %c0_i32_0 = arith.constant 0 : i32
    %c0_i32_1 = arith.constant 0 : i32
    return %c0_i32, %c0_i32_0 : i32, i32
  }
  func.func @transform_7(%arg0: i32) -> (i32, i32, i32) {
    %c0_i32 = arith.constant 0 : i32
    %c0_i32_0 = arith.constant 0 : i32
    %c0_i32_1 = arith.constant 0 : i32
    return %arg0, %c0_i32, %c0_i32_0 : i32, i32, i32
  }
}

</mosaic_0001>

<llo_original>
// kernel: discriminator_forward.1
$region0: #{discriminator_forward.1}
  #allocation0 [shape = 'u32[]', space=smem, size = 0x4, offset = 0x4, fixed_abs, tag = 'smem constant byte address 0x4 - core index']
  #allocation1 [shape = 'u32[144,128]{1,0:T(1,128)}', space=vmem, size = 0x12000, scoped, tag = 'internal scratch']
  %s0 = inlined_call_operand.vmem [shape: f32[2,64,8], index: 0, kind: input, shape index: {}]
  %s1 = inlined_call_operand.vmem [shape: bf16[1488,128], index: 1, kind: input, shape index: {}]
  %s2 = inlined_call_operand.vmem [shape: f32[152,128], index: 2, kind: input, shape index: {}]
  %s3 = inlined_call_operand.vmem [shape: bf16[64,576], index: 3, kind: input, shape index: {}]
  %s4 = inlined_call_operand.vmem [shape: bf16[16,576], index: 4, kind: input, shape index: {}]
  %s5 = inlined_call_operand.vmem [shape: bf16[16,64], index: 5, kind: input, shape index: {}]
  %s6 = inlined_call_operand.vmem [shape: bf16[64,64], index: 6, kind: input, shape index: {}]
  %s7 = inlined_call_operand.vmem [shape: f32[2,8,128], index: 7, kind: output, shape index: {}]
  %s8 = sld [smem:[#allocation0]]
  $region61: #{discriminator_forward.1} parent=0
    _
  %s10 = ssub.s32 1, %s8
  %s11 = scalar_select 0, %s10, %s8
  loop: start=0, step=1, limit=4
  $region2: #{discriminator_forward.1} parent=0 // loop_pre_header
    _
  $region3: #{discriminator_forward.1} parent=0 // loop_header
    %s13 = sphi 0, %s17
    %p14 = scmp.ge.s32.totalorder %s13, 4
    %s23 = sphi 0, %s25
    %s26 = sphi 0, %s23
    %s27 = sphi 0, %s26
    %s43 = sphi 0, %s27
    %s47 = sphi 0, %s47
    %s49 = sphi 0, %s47
    %s50 = sphi 0, %s49
    %s64 = sphi 0, %s50
    %s68 = sphi 0, %s68
    %s70 = sphi 0, %s68
    %s71 = sphi 0, %s70
    %s85 = sphi 0, %s71
    %s89 = sphi 0, %s89
    %s91 = sphi 0, %s89
    %s92 = sphi 0, %s91
    %s106 = sphi 0, %s92
    %s110 = sphi 0, %s110
    %s112 = sphi 0, %s110
    %s113 = sphi 0, %s112
    %s127 = sphi 0, %s113
    %s131 = sphi 0, %s131
    %s133 = sphi 0, %s131
    %s134 = sphi 0, %s133
    %s148 = sphi 0, %s134
    %s152 = sphi 0, %s152
    %s154 = sphi 0, %s152
    %s155 = sphi 0, %s154
    %s169 = sphi 0, %s155
    %s175 = sphi 0, %s177
    %s178 = sphi 0, %s175
    %s179 = sphi 0, %s178
    %s195 = sphi 0, %s179
  $region4: #{discriminator_forward.1} parent=0 // loop_header_branch
    %16 = sbr.rel (%p14) target = $region8
  $region5: #{discriminator_forward.1} parent=0 // loop_body
    %s18 = ssub.s32 %s13, 1
    %s19 = ssub.s32 %s13, 2
    %s20 = sadd.s32 %s13, 1
    %s21 = ssub.s32 %s13, %s20
    %p22 = scmp.eq.s32.totalorder %s21, 0
    %s24 = sadd.s32 %s23, 1
    %s25 = scalar_select %p22, %s23, %s24
    %p28 = pneg %p22
    %p29 = scmp.eq.s32.totalorder %s13, 1
    %p30 = por %p28, %p29
    %p31 = scmp.ne.s32.totalorder %s23, %s26
    %p32 = scmp.eq.s32.totalorder %s13, 0
    %p33 = por %p31, %p32
    %p34 = scmp.ne.s32.totalorder %s23, %s26
    %p35 = scmp.eq.s32.totalorder %s18, 1
    %p36 = por %p34, %p35
    %p37 = scmp.ne.s32.totalorder %s26, %s27
    %p38 = scmp.eq.s32.totalorder %s18, 0
    %p39 = por %p37, %p38
    %p40 = scmp.ne.s32.totalorder %s26, %s27
    %p41 = scmp.eq.s32.totalorder %s19, 1
    %p42 = por %p40, %p41
    %p44 = scmp.ne.s32.totalorder %s27, %s43
    %p45 = scmp.eq.s32.totalorder %s19, 0
    %p46 = por %p44, %p45
    %s48 = sadd.s32 %s47, 1
    %p51 = scmp.eq.s32.totalorder %s13, 1
    %p52 = scmp.ne.s32.totalorder %s47, %s49
    %p53 = scmp.eq.s32.totalorder %s13, 0
    %p54 = por %p52, %p53
    %p55 = scmp.ne.s32.totalorder %s47, %s49
    %p56 = scmp.eq.s32.totalorder %s18, 1
    %p57 = por %p55, %p56
    %p58 = scmp.ne.s32.totalorder %s49, %s50
    %p59 = scmp.eq.s32.totalorder %s18, 0
    %p60 = por %p58, %p59
    %p61 = scmp.ne.s32.totalorder %s49, %s50
    %p62 = scmp.eq.s32.totalorder %s19, 1
    %p63 = por %p61, %p62
    %p65 = scmp.ne.s32.totalorder %s50, %s64
    %p66 = scmp.eq.s32.totalorder %s19, 0
    %p67 = por %p65, %p66
    %s69 = sadd.s32 %s68, 1
    %p72 = scmp.eq.s32.totalorder %s13, 1
    %p73 = scmp.ne.s32.totalorder %s68, %s70
    %p74 = scmp.eq.s32.totalorder %s13, 0
    %p75 = por %p73, %p74
    %p76 = scmp.ne.s32.totalorder %s68, %s70
    %p77 = scmp.eq.s32.totalorder %s18, 1
    %p78 = por %p76, %p77
    %p79 = scmp.ne.s32.totalorder %s70, %s71
    %p80 = scmp.eq.s32.totalorder %s18, 0
    %p81 = por %p79, %p80
    %p82 = scmp.ne.s32.totalorder %s70, %s71
    %p83 = scmp.eq.s32.totalorder %s19, 1
    %p84 = por %p82, %p83
    %p86 = scmp.ne.s32.totalorder %s71, %s85
    %p87 = scmp.eq.s32.totalorder %s19, 0
    %p88 = por %p86, %p87
    %s90 = sadd.s32 %s89, 1
    %p93 = scmp.eq.s32.totalorder %s13, 1
    %p94 = scmp.ne.s32.totalorder %s89, %s91
    %p95 = scmp.eq.s32.totalorder %s13, 0
    %p96 = por %p94, %p95
    %p97 = scmp.ne.s32.totalorder %s89, %s91
    %p98 = scmp.eq.s32.totalorder %s18, 1
    %p99 = por %p97, %p98
    %p100 = scmp.ne.s32.totalorder %s91, %s92
    %p101 = scmp.eq.s32.totalorder %s18, 0
    %p102 = por %p100, %p101
    %p103 = scmp.ne.s32.totalorder %s91, %s92
    %p104 = scmp.eq.s32.totalorder %s19, 1
    %p105 = por %p103, %p104
    %p107 = scmp.ne.s32.totalorder %s92, %s106
    %p108 = scmp.eq.s32.totalorder %s19, 0
    %p109 = por %p107, %p108
    %s111 = sadd.s32 %s110, 1
    %p114 = scmp.eq.s32.totalorder %s13, 1
    %p115 = scmp.ne.s32.totalorder %s110, %s112
    %p116 = scmp.eq.s32.totalorder %s13, 0
    %p117 = por %p115, %p116
    %p118 = scmp.ne.s32.totalorder %s110, %s112
    %p119 = scmp.eq.s32.totalorder %s18, 1
    %p120 = por %p118, %p119
    %p121 = scmp.ne.s32.totalorder %s112, %s113
    %p122 = scmp.eq.s32.totalorder %s18, 0
    %p123 = por %p121, %p122
    %p124 = scmp.ne.s32.totalorder %s112, %s113
    %p125 = scmp.eq.s32.totalorder %s19, 1
    %p126 = por %p124, %p125
    %p128 = scmp.ne.s32.totalorder %s113, %s127
    %p129 = scmp.eq.s32.totalorder %s19, 0
    %p130 = por %p128, %p129
    %s132 = sadd.s32 %s131, 1
    %p135 = scmp.eq.s32.totalorder %s13, 1
    %p136 = scmp.ne.s32.totalorder %s131, %s133
    %p137 = scmp.eq.s32.totalorder %s13, 0
    %p138 = por %p136, %p137
    %p139 = scmp.ne.s32.totalorder %s131, %s133
    %p140 = scmp.eq.s32.totalorder %s18, 1
    %p141 = por %p139, %p140
    %p142 = scmp.ne.s32.totalorder %s133, %s134
    %p143 = scmp.eq.s32.totalorder %s18, 0
    %p144 = por %p142, %p143
    %p145 = scmp.ne.s32.totalorder %s133, %s134
    %p146 = scmp.eq.s32.totalorder %s19, 1
    %p147 = por %p145, %p146
    %p149 = scmp.ne.s32.totalorder %s134, %s148
    %p150 = scmp.eq.s32.totalorder %s19, 0
    %p151 = por %p149, %p150
    %s153 = sadd.s32 %s152, 1
    %p156 = scmp.eq.s32.totalorder %s13, 1
    %p157 = scmp.ne.s32.totalorder %s152, %s154
    %p158 = scmp.eq.s32.totalorder %s13, 0
    %p159 = por %p157, %p158
    %p160 = scmp.ne.s32.totalorder %s152, %s154
    %p161 = scmp.eq.s32.totalorder %s18, 1
    %p162 = por %p160, %p161
    %p163 = scmp.ne.s32.totalorder %s154, %s155
    %p164 = scmp.eq.s32.totalorder %s18, 0
    %p165 = por %p163, %p164
    %p166 = scmp.ne.s32.totalorder %s154, %s155
    %p167 = scmp.eq.s32.totalorder %s19, 1
    %p168 = por %p166, %p167
    %p170 = scmp.ne.s32.totalorder %s155, %s169
    %p171 = scmp.eq.s32.totalorder %s19, 0
    %p172 = por %p170, %p171
    %s173 = ssub.s32 %s13, %s20
    %p174 = scmp.eq.s32.totalorder %s173, 0
    %s176 = sadd.s32 %s175, 1
    %s177 = scalar_select %p174, %s175, %s176
    %p180 = pneg %p174
    %p181 = scmp.eq.s32.totalorder %s13, 1
    %p182 = por %p180, %p181
    %p183 = scmp.ne.s32.totalorder %s175, %s178
    %p184 = scmp.eq.s32.totalorder %s13, 0
    %p185 = por %p183, %p184
    %p186 = scmp.ne.s32.totalorder %s175, %s178
    %p187 = scmp.eq.s32.totalorder %s18, 1
    %p188 = por %p186, %p187
    %p189 = scmp.ne.s32.totalorder %s178, %s179
    %p190 = scmp.eq.s32.totalorder %s18, 0
    %p191 = por %p189, %p190
    %p192 = scmp.ne.s32.totalorder %s178, %s179
    %p193 = scmp.eq.s32.totalorder %s19, 1
    %p194 = por %p192, %p193
    %p196 = scmp.ne.s32.totalorder %s179, %s195
    %p197 = scmp.eq.s32.totalorder %s19, 0
    %p198 = por %p196, %p197
    %p199 = scmp.le.s32.totalorder 1, %s13
    %p200 = scmp.lt.s32.totalorder %s13, 3
    %p201 = pnand %p199, %p200
    %p202 = pneg %p201
    // Predicated region
    $region9: #{discriminator_forward.1} parent=5 // pred_check
      _
    $region10: #{discriminator_forward.1} parent=5 // pred_check_branch
      %204 = sbr.rel (%p201) target = $region12
    $region11: #{discriminator_forward.1} parent=5 // pred_region
      %s205 = ssub.s32 %s13, 1
      // Predicated region
      $region13: #{discriminator_forward.1} parent=11 // pred_check
        %p206 = pneg %p60
      $region14: #{discriminator_forward.1} parent=11 // pred_check_branch
        %208 = sbr.rel (%p206) target = $region16
      $region15: #{discriminator_forward.1} parent=11 // pred_region
        _
      $region16: #{discriminator_forward.1} parent=11 // pred_fallthru
        _
      // Predicated region
      $region17: #{discriminator_forward.1} parent=11 // pred_check
        %p209 = pneg %p81
      $region18: #{discriminator_forward.1} parent=11 // pred_check_branch
        %211 = sbr.rel (%p209) target = $region20
      $region19: #{discriminator_forward.1} parent=11 // pred_region
        _
      $region20: #{discriminator_forward.1} parent=11 // pred_fallthru
        _
      // Predicated region
      $region21: #{discriminator_forward.1} parent=11 // pred_check
        %p212 = pneg %p102
      $region22: #{discriminator_forward.1} parent=11 // pred_check_branch
        %214 = sbr.rel (%p212) target = $region24
      $region23: #{discriminator_forward.1} parent=11 // pred_region
        _
      $region24: #{discriminator_forward.1} parent=11 // pred_fallthru
        _
      // Predicated region
      $region25: #{discriminator_forward.1} parent=11 // pred_check
        %p215 = pneg %p123
      $region26: #{discriminator_forward.1} parent=11 // pred_check_branch
        %217 = sbr.rel (%p215) target = $region28
      $region27: #{discriminator_forward.1} parent=11 // pred_region
        _
      $region28: #{discriminator_forward.1} parent=11 // pred_fallthru
        _
      // Predicated region
      $region29: #{discriminator_forward.1} parent=11 // pred_check
        %p218 = pneg %p144
      $region30: #{discriminator_forward.1} parent=11 // pred_check_branch
        %220 = sbr.rel (%p218) target = $region32
      $region31: #{discriminator_forward.1} parent=11 // pred_region
        _
      $region32: #{discriminator_forward.1} parent=11 // pred_fallthru
        _
      // Predicated region
      $region33: #{discriminator_forward.1} parent=11 // pred_check
        %p221 = pneg %p165
      $region34: #{discriminator_forward.1} parent=11 // pred_check_branch
        %223 = sbr.rel (%p221) target = $region36
      $region35: #{discriminator_forward.1} parent=11 // pred_region
        _
      $region36: #{discriminator_forward.1} parent=11 // pred_fallthru
        _
    $region12: #{discriminator_forward.1} parent=5 // pred_fallthru
      _
    %p224 = scmp.lt.s32.totalorder %s13, 2
    // Predicated region
    $region37: #{discriminator_forward.1} parent=5 // pred_check
      %p225 = pneg %p224
    $region38: #{discriminator_forward.1} parent=5 // pred_check_branch
      %227 = sbr.rel (%p225) target = $region40
    $region39: #{discriminator_forward.1} parent=5 // pred_region
      // Predicated region
      $region41: #{discriminator_forward.1} parent=39 // pred_check
        %p228 = pneg %p33
      $region42: #{discriminator_forward.1} parent=39 // pred_check_branch
        %230 = sbr.rel (%p228) target = $region44
      $region43: #{discriminator_forward.1} parent=39 // pred_region
        %p231 = scmp.lt.s32.totalorder %s13, 1
        %s232 = scalar_select %p231, %s13, 1
        %s233 = smul.addr %s232, 8
        %s234 = smul.addr %s233, 8
        %s235 = scalar_lea.vmem %s0, %s234
      $region44: #{discriminator_forward.1} parent=39 // pred_fallthru
        _
    $region40: #{discriminator_forward.1} parent=5 // pred_fallthru
      _
    %p236 = scmp.le.s32.totalorder 1, %s13
    %p237 = scmp.lt.s32.totalorder %s13, 3
    %p238 = pnand %p236, %p237
    %p239 = pneg %p238
    // Predicated region
    $region45: #{discriminator_forward.1} parent=5 // pred_check
      _
    $region46: #{discriminator_forward.1} parent=5 // pred_check_branch
      %241 = sbr.rel (%p238) target = $region48
    $region47: #{discriminator_forward.1} parent=5 // pred_region
      %s242 = ssub.s32 %s13, 1
      %p243 = scmp.lt.s32.totalorder %s18, 1
      %s244 = scalar_select %p243, %s18, 1
      %s245 = smul.addr %s244, 8
      %s246 = smul.addr %s245, 8
      %s247 = scalar_lea.vmem %s0, %s246
      %p248 = pneg %p39
      %p249 = pneg %p36
      %p250 = pneg %p60
      %p251 = pneg %p57
      %p252 = pneg %p81
      %p253 = pneg %p78
      %p254 = pneg %p102
      %p255 = pneg %p99
      %p256 = pneg %p123
      %p257 = pneg %p120
      %p258 = pneg %p144
      %p259 = pneg %p141
      %p260 = pneg %p165
      %p261 = pneg %p162
      %p262 = pneg %p191
      %p263 = pneg %p188
      %p264 = scmp.lt.s32.totalorder %s18, 1
      %s265 = scalar_select %p264, %s18, 1
      %s266 = smul.addr %s265, 8
      %s267 = scalar_lea.vmem %s7, %s266
      %p268 = scmp.lt.s32.totalorder %s18, 1
      %s269 = scalar_select %p268, %s18, 1
      %s270 = smul.addr %s269, 8
      %s271 = smul.addr %s270, 8
      %s272 = scalar_lea.vmem %s0, %s271
      %p273 = scmp.lt.s32.totalorder %s18, 1
      %s274 = scalar_select %p273, %s18, 1
      %s275 = smul.addr %s274, 8
      %s276 = scalar_lea.vmem %s7, %s275
      %v278 = vld [vmem:[%s272] sm:$0xff]
      %v279 = vld [vmem:[%s272 + $0x8] sm:$0xff]
      %v280 = vld [vmem:[%s272 + $0x10] sm:$0xff]
      %v281 = vld [vmem:[%s272 + $0x18] sm:$0xff]
      %v282 = vld [vmem:[%s272 + $0x20] sm:$0xff]
      %v283 = vld [vmem:[%s272 + $0x28] sm:$0xff]
      %v284 = vld [vmem:[%s272 + $0x30] sm:$0xff]
      %v285 = vld [vmem:[%s272 + $0x38] sm:$0xff]
      %v286 = vld [vmem:[%s1] sm:$0xf]
      %v287 = vpack.c.bf16 %v279, %v278
      %v288 = vpack.c.bf16 %v281, %v280
      %v289 = vpack.c.bf16 %v283, %v282
      %v290 = vpack.c.bf16 %v285, %v284
      %vm291 = vcmask 64512
      %v293 = vsel %vm291, %v287, 0
      %v296 = vsel %vm291, %v288, 0
      %v299 = vsel %vm291, %v289, 0
      %v302 = vsel %vm291, %v290, 0
      %vm304 = vcmask 1043456
      %v306 = vsel %vm304, %v286, 0
      %308 = vmatprep.subr.bf16.mxu0 0
      %309 = vmatpush1.bf16.msra.mxu0 %v306
      %310 = vmatprep.subr.bf16.mxu0 0
      %311 = vmatpush1.bf16.msra.mxu0 0
      %312 = vmatprep.subr.bf16.mxu0 0
      %313 = vmatpush1.bf16.msra.mxu0 0
      %314 = vmatprep.subr.bf16.mxu0 0
      %315 = vmatpush1.bf16.msra.mxu0 0
      %316 = vmatprep.subr.bf16.mxu0 0
      %317 = vmatpush1.bf16.msra.mxu0 0
      %318 = vmatprep.subr.bf16.mxu0 0
      %319 = vmatpush1.bf16.msra.mxu0 0
      %320 = vmatprep.subr.bf16.mxu0 0
      %321 = vmatpush1.bf16.msra.mxu0 0
      %322 = vmatprep.subr.bf16.mxu0 0
      %323 = vmatpush1.bf16.msra.mxu0 0
      %324 = vmatprep.subr.bf16.mxu0 0
      %325 = vmatpush1.bf16.msra.mxu0 0
      %326 = vmatprep.subr.bf16.mxu0 0
      %327 = vmatpush1.bf16.msra.mxu0 0
      %328 = vmatprep.subr.bf16.mxu0 0
      %329 = vmatpush1.bf16.msra.mxu0 0
      %330 = vmatprep.subr.bf16.mxu0 0
      %331 = vmatpush1.bf16.msra.mxu0 0
      %332 = vmatprep.subr.bf16.mxu0 0
      %333 = vmatpush1.bf16.msra.mxu0 0
      %334 = vmatprep.subr.bf16.mxu0 0
      %335 = vmatpush1.bf16.msra.mxu0 0
      %336 = vmatprep.subr.bf16.mxu0 0
      %337 = vmatpush1.bf16.msra.mxu0 0
      %338 = vmatprep.subr.bf16.mxu0 0
      %339 = vmatpush1.bf16.msra.mxu0 0
      %340 = vmatprep.mubr.bf16.mxu0 0
      %341 = vmatmul.mubr.bf16.gmra.mrb[0].mxu0 %v293
      %v342 = vpop.f32.mrb[0].mxu0
      %v343 = vadd.f32 0.0, %v342
      %v344 = vpop.f32.mrb[0].mxu0
      %v345 = vpop.f32.mrb[0].mxu0
      %v346 = vadd.f32 0.0, %v345
      %v347 = vpop.f32.mrb[0].mxu0
      %348 = vmatprep.mubr.bf16.mxu0 0
      %349 = vmatmul.mubr.bf16.gmra.mrb[0].mxu0 %v296
      %v350 = vpop.f32.mrb[0].mxu0
      %v351 = vadd.f32 0.0, %v350
      %v352 = vpop.f32.mrb[0].mxu0
      %v353 = vpop.f32.mrb[0].mxu0
      %v354 = vadd.f32 0.0, %v353
      %v355 = vpop.f32.mrb[0].mxu0
      %356 = vmatprep.mubr.bf16.mxu0 0
      %357 = vmatmul.mubr.bf16.gmra.mrb[0].mxu0 %v299
      %v358 = vpop.f32.mrb[0].mxu0
      %v359 = vadd.f32 0.0, %v358
      %v360 = vpop.f32.mrb[0].mxu0
      %v361 = vpop.f32.mrb[0].mxu0
      %v362 = vadd.f32 0.0, %v361
      %v363 = vpop.f32.mrb[0].mxu0
      %364 = vmatprep.mubr.bf16.mxu0 0
      %365 = vmatmul.mubr.bf16.gmra.mrb[0].mxu0 %v302
      %v366 = vpop.f32.mrb[0].mxu0
      %v367 = vadd.f32 0.0, %v366
      %v368 = vpop.f32.mrb[0].mxu0
      %v369 = vpop.f32.mrb[0].mxu0
      %v370 = vadd.f32 0.0, %v369
      %v371 = vpop.f32.mrb[0].mxu0
      %372 = vdwg.mxu0
      %v373 = vpack.c.bf16 %v346, %v343
      %v374 = vpack.c.bf16 %v354, %v351
      %v375 = vpack.c.bf16 %v362, %v359
      %v376 = vpack.c.bf16 %v370, %v367
      %v377 = vld [vmem:[%s1 + $0x8] sm:$0xf]
      %v378 = vld [vmem:[%s1 + $0xc] sm:$0xf]
      %v379 = vld [vmem:[%s1 + $0x10] sm:$0xf]
      %v380 = vld [vmem:[%s1 + $0x14] sm:$0xf]
      %v381 = vld [vmem:[%s2] sm:$0x1]
      %v382 = vlaneseq
      %v383 = vshrl.u32 %v382, 7
      %v384 = vsub.s32 0, %v383
      %v385 = vrot.slane %v381, %v384
      %v390 = vunpack.c.l.b16 %v377
      %v391 = vunpack.c.l.b16 %v378
      %v392 = vunpack.c.l.b16 %v379
      %v393 = vunpack.c.l.b16 %v380
      %v394 = vpack.c.b16 %v391, %v390
      %v395 = vpack.c.b16 %v393, %v392
      %vm398 = vcmask 261120
      %v400 = vsel %vm398, %v373, 0
      %v403 = vsel %vm398, %v374, 0
      %v406 = vsel %vm398, %v375, 0
      %v409 = vsel %vm398, %v376, 0
      %411 = vmatprep.subr.bf16.mxu0 0
      %412 = vmatpush1.bf16.msra.mxu0 %v394
      %413 = vmatprep.subr.bf16.mxu0 0
      %414 = vmatpush1.bf16.msra.mxu0 %v395
      %415 = vmatprep.subr.bf16.mxu0 0
      %416 = vmatpush1.bf16.msra.mxu0 0
      %417 = vmatprep.subr.bf16.mxu0 0
      %418 = vmatpush1.bf16.msra.mxu0 0
      %419 = vmatprep.subr.bf16.mxu0 0
      %420 = vmatpush1.bf16.msra.mxu0 0
      %421 = vmatprep.subr.bf16.mxu0 0
      %422 = vmatpush1.bf16.msra.mxu0 0
      %423 = vmatprep.subr.bf16.mxu0 0
      %424 = vmatpush1.bf16.msra.mxu0 0
      %425 = vmatprep.subr.bf16.mxu0 0
      %426 = vmatpush1.bf16.msra.mxu0 0
      %427 = vmatprep.subr.bf16.mxu0 0
      %428 = vmatpush1.bf16.msra.mxu0 0
      %429 = vmatprep.subr.bf16.mxu0 0
      %430 = vmatpush1.bf16.msra.mxu0 0
      %431 = vmatprep.subr.bf16.mxu0 0
      %432 = vmatpush1.bf16.msra.mxu0 0
      %433 = vmatprep.subr.bf16.mxu0 0
      %434 = vmatpush1.bf16.msra.mxu0 0
      %435 = vmatprep.subr.bf16.mxu0 0
      %436 = vmatpush1.bf16.msra.mxu0 0
      %437 = vmatprep.subr.bf16.mxu0 0
      %438 = vmatpush1.bf16.msra.mxu0 0
      %439 = vmatprep.subr.bf16.mxu0 0
      %440 = vmatpush1.bf16.msra.mxu0 0
      %441 = vmatprep.subr.bf16.mxu0 0
      %442 = vmatpush1.bf16.msra.mxu0 0
      %443 = vmatprep.mubr.bf16.mxu0 0
      %444 = vmatmul.mubr.bf16.gmra.mrb[0].mxu0 %v400
      %v445 = vpop.f32.mrb[0].mxu0
      %v446 = vadd.f32 %v385, %v445
      %v447 = vpop.f32.mrb[0].mxu0
      %v448 = vpop.f32.mrb[0].mxu0
      %v449 = vadd.f32 %v385, %v448
      %v450 = vpop.f32.mrb[0].mxu0
      %451 = vmatprep.mubr.bf16.mxu0 0
      %452 = vmatmul.mubr.bf16.gmra.mrb[0].mxu0 %v403
      %v453 = vpop.f32.mrb[0].mxu0
      %v454 = vadd.f32 %v385, %v453
      %v455 = vpop.f32.mrb[0].mxu0
      %v456 = vpop.f32.mrb[0].mxu0
      %v457 = vadd.f32 %v385, %v456
      %v458 = vpop.f32.mrb[0].mxu0
      %459 = vmatprep.mubr.bf16.mxu0 0
      %460 = vmatmul.mubr.bf16.gmra.mrb[0].mxu0 %v406
      %v461 = vpop.f32.mrb[0].mxu0
      %v462 = vadd.f32 %v385, %v461
      %v463 = vpop.f32.mrb[0].mxu0
      %v464 = vpop.f32.mrb[0].mxu0
      %v465 = vadd.f32 %v385, %v464
      %v466 = vpop.f32.mrb[0].mxu0
      %467 = vmatprep.mubr.bf16.mxu0 0
      %468 = vmatmul.mubr.bf16.gmra.mrb[0].mxu0 %v409
      %v469 = vpop.f32.mrb[0].mxu0
      %v470 = vadd.f32 %v385, %v469
      %v471 = vpop.f32.mrb[0].mxu0
      %v472 = vpop.f32.mrb[0].mxu0
      %v473 = vadd.f32 %v385, %v472
      %v474 = vpop.f32.mrb[0].mxu0
      %475 = vdwg.mxu0
      %vm476 = vcmp.ge.f32.partialorder %v446, 0.0
      %vm477 = vcmp.ge.f32.partialorder %v449, 0.0
      %vm478 = vcmp.ge.f32.partialorder %v454, 0.0
      %vm479 = vcmp.ge.f32.partialorder %v457, 0.0
      %vm480 = vcmp.ge.f32.partialorder %v462, 0.0
      %vm481 = vcmp.ge.f32.partialorder %v465, 0.0
      %vm482 = vcmp.ge.f32.partialorder %v470, 0.0
      %vm483 = vcmp.ge.f32.partialorder %v473, 0.0
      %v484 = vmul.f32 %v446, 0.2
      %v485 = vmul.f32 %v449, 0.2
      %v486 = vmul.f32 %v454, 0.2
      %v487 = vmul.f32 %v457, 0.2
      %v488 = vmul.f32 %v462, 0.2
      %v489 = vmul.f32 %v465, 0.2
      %v490 = vmul.f32 %v470, 0.2
      %v491 = vmul.f32 %v473, 0.2
      %v492 = vsel %vm476, %v446, %v484
      %v493 = vsel %vm477, %v449, %v485
      %v494 = vsel %vm478, %v454, %v486
      %v495 = vsel %vm479, %v457, %v487
      %v496 = vsel %vm480, %v462, %v488
      %v497 = vsel %vm481, %v465, %v489
      %v498 = vsel %vm482, %v470, %v490
      %v499 = vsel %vm483, %v473, %v491
      %v500 = vrot.slane %v492, 7
      %v501 = vrot.slane %v493, 7
      %v502 = vrot.slane %v494, 7
      %v503 = vrot.slane %v495, 7
      %v504 = vrot.slane %v496, 7
      %v505 = vrot.slane %v497, 7
      %v506 = vrot.slane %v498, 7
      %v507 = vrot.slane %v499, 7
      %v508 = vlaneseq
      %v509 = vshrl.u32 %v508, 7
      %vm510 = vcmp.lt.s32.totalorder %v509, 1
      %v511 = vsel %vm510, %v506, %v507
      %v512 = vsel %vm510, %v505, %v506
      %v513 = vsel %vm510, %v504, %v505
      %v514 = vsel %vm510, %v503, %v504
      %v515 = vsel %vm510, %v502, %v503
      %v516 = vsel %vm510, %v501, %v502
      %v517 = vsel %vm510, %v500, %v501
      %v518 = vsel %vm510, %v507, %v500
      %v519 = vrot.slane %v492, 1
      %v520 = vrot.slane %v493, 1
      %v521 = vrot.slane %v494, 1
      %v522 = vrot.slane %v495, 1
      %v523 = vrot.slane %v496, 1
      %v524 = vrot.slane %v497, 1
      %v525 = vrot.slane %v498, 1
      %v526 = vrot.slane %v499, 1
      %vm527 = vcmp.lt.s32.totalorder %v509, 7
      %v528 = vsel %vm527, %v525, %v526
      %v529 = vsel %vm527, %v524, %v525
      %v530 = vsel %vm527, %v523, %v524
      %v531 = vsel %vm527, %v522, %v523
      %v532 = vsel %vm527, %v521, %v522
      %v533 = vsel %vm527, %v520, %v521
      %v534 = vsel %vm527, %v519, %v520
      %v535 = vsel %vm527, %v526, %v519
      %544 = vrot.lane.b32.xlu0 %v499, 64
      %v545 = vpop.permute.xlu0 %544
      %546 = vrot.lane.b32.xlu0 %v492, 64
      %v547 = vpop.permute.xlu0 %546
      %548 = vrot.lane.b32.xlu0 %v493, 64
      %v549 = vpop.permute.xlu0 %548
      %550 = vrot.lane.b32.xlu0 %v494, 64
      %v551 = vpop.permute.xlu0 %550
      %552 = vrot.lane.b32.xlu0 %v495, 64
      %v553 = vpop.permute.xlu0 %552
      %554 = vrot.lane.b32.xlu0 %v496, 64
      %v555 = vpop.permute.xlu0 %554
      %556 = vrot.lane.b32.xlu0 %v497, 64
      %v557 = vpop.permute.xlu0 %556
      %558 = vrot.lane.b32.xlu0 %v498, 64
      %v559 = vpop.permute.xlu0 %558
      %576 = vrot.lane.b32.xlu0 %v518, 64
      %v577 = vpop.permute.xlu0 %576
      %578 = vrot.lane.b32.xlu0 %v517, 64
      %v579 = vpop.permute.xlu0 %578
      %580 = vrot.lane.b32.xlu0 %v516, 64
      %v581 = vpop.permute.xlu0 %580
      %582 = vrot.lane.b32.xlu0 %v515, 64
      %v583 = vpop.permute.xlu0 %582
      %584 = vrot.lane.b32.xlu0 %v514, 64
      %v585 = vpop.permute.xlu0 %584
      %586 = vrot.lane.b32.xlu0 %v513, 64
      %v587 = vpop.permute.xlu0 %586
      %588 = vrot.lane.b32.xlu0 %v512, 64
      %v589 = vpop.permute.xlu0 %588
      %590 = vrot.lane.b32.xlu0 %v511, 64
      %v591 = vpop.permute.xlu0 %590
      %608 = vrot.lane.b32.xlu0 %v534, 64
      %v609 = vpop.permute.xlu0 %608
      %610 = vrot.lane.b32.xlu0 %v533, 64
      %v611 = vpop.permute.xlu0 %610
      %612 = vrot.lane.b32.xlu0 %v532, 64
      %v613 = vpop.permute.xlu0 %612
      %614 = vrot.lane.b32.xlu0 %v531, 64
      %v615 = vpop.permute.xlu0 %614
      %616 = vrot.lane.b32.xlu0 %v530, 64
      %v617 = vpop.permute.xlu0 %616
      %618 = vrot.lane.b32.xlu0 %v529, 64
      %v619 = vpop.permute.xlu0 %618
      %620 = vrot.lane.b32.xlu0 %v528, 64
      %v621 = vpop.permute.xlu0 %620
      %622 = vrot.lane.b32.xlu0 %v535, 64
      %v623 = vpop.permute.xlu0 %622
      %vm632 = vcmask 523264
      %v633 = vsel %vm632, %v511, %v545
      %v634 = vsel %vm632, %v518, %v547
      %v635 = vsel %vm632, %v517, %v549
      %v636 = vsel %vm632, %v516, %v551
      %v637 = vsel %vm632, %v515, %v553
      %v638 = vsel %vm632, %v514, %v555
      %v639 = vsel %vm632, %v513, %v557
      %v640 = vsel %vm632, %v512, %v559
      %v641 = vsel %vm632, %v535, %v577
      %v642 = vsel %vm632, %v534, %v579
      %v643 = vsel %vm632, %v533, %v581
      %v644 = vsel %vm632, %v532, %v583
      %v645 = vsel %vm632, %v531, %v585
      %v646 = vsel %vm632, %v530, %v587
      %v647 = vsel %vm632, %v529, %v589
      %v648 = vsel %vm632, %v528, %v591
      %v649 = vsel %vm632, %v492, %v609
      %v650 = vsel %vm632, %v493, %v611
      %v651 = vsel %vm632, %v494, %v613
      %v652 = vsel %vm632, %v495, %v615
      %v653 = vsel %vm632, %v496, %v617
      %v654 = vsel %vm632, %v497, %v619
      %v655 = vsel %vm632, %v498, %v621
      %v656 = vsel %vm632, %v499, %v623
      %v657 = vpack.c.bf16 %v634, %v633
      %v658 = vpack.c.bf16 %v642, %v641
      %v659 = vpack.c.bf16 %v650, %v649
      %v660 = vpack.c.bf16 %v636, %v635
      %v661 = vpack.c.bf16 %v532, %v533
      %v662 = vpack.c.bf16 %v644, %v643
      %v663 = vpack.c.bf16 %v652, %v651
      %v664 = vpack.c.bf16 %v638, %v637
      %v665 = vpack.c.bf16 %v530, %v531
      %v666 = vpack.c.bf16 %v646, %v645
      %v667 = vpack.c.bf16 %v654, %v653
      %v668 = vpack.c.bf16 %v640, %v639
      %v669 = vpack.c.bf16 %v528, %v529
      %v670 = vpack.c.bf16 %v648, %v647
      %v671 = vpack.c.bf16 %v656, %v655
      %v672 = vpack.c.bf16 %v534, %v535
      %v673 = vld [vmem:[%s3] sm:$0xff]
      %v674 = vld [vmem:[%s3 + $0x8] sm:$0xff]
      %v675 = vld [vmem:[%s3 + $0x10] sm:$0xf]
      %v676 = vld [vmem:[%s3 + $0x14] sm:$0xff]
      %v677 = vld [vmem:[%s3 + $0x1c] sm:$0xff]
      %v678 = vld [vmem:[%s3 + $0x24] sm:$0xf]
      %v679 = vld [vmem:[%s3 + $0x28] sm:$0xff]
      %v680 = vld [vmem:[%s3 + $0x30] sm:$0xff]
      %v681 = vld [vmem:[%s3 + $0x38] sm:$0xf]
      %v682 = vld [vmem:[%s3 + $0x3c] sm:$0xff]
      %v683 = vld [vmem:[%s3 + $0x44] sm:$0xff]
      %v684 = vld [vmem:[%s3 + $0x4c] sm:$0xf]
      %v685 = vld [vmem:[%s3 + $0x50] sm:$0xff]
      %v686 = vld [vmem:[%s3 + $0x58] sm:$0xff]
      %v687 = vld [vmem:[%s3 + $0x60] sm:$0xf]
      %v688 = vld [vmem:[%s3 + $0x64] sm:$0xff]
      %v689 = vld [vmem:[%s3 + $0x6c] sm:$0xff]
      %v690 = vld [vmem:[%s3 + $0x74] sm:$0xf]
      %v691 = vld [vmem:[%s3 + $0x78] sm:$0xff]
      %v692 = vld [vmem:[%s3 + $0x80] sm:$0xff]
      %v693 = vld [vmem:[%s3 + $0x88] sm:$0xf]
      %v694 = vld [vmem:[%s3 + $0x8c] sm:$0xff]
      %v695 = vld [vmem:[%s3 + $0x94] sm:$0xff]
      %v696 = vld [vmem:[%s3 + $0x9c] sm:$0xf]
      %v721 = vunpack.c.l.b16 %v673
      %v722 = vunpack.c.h.b16 %v673
      %v723 = vunpack.c.l.b16 %v674
      %v724 = vunpack.c.h.b16 %v674
      %v725 = vunpack.c.l.b16 %v675
      %v726 = vunpack.c.l.b16 %v676
      %v727 = vunpack.c.h.b16 %v676
      %v728 = vunpack.c.l.b16 %v677
      %v729 = vunpack.c.h.b16 %v677
      %v730 = vunpack.c.l.b16 %v678
      %v731 = vunpack.c.l.b16 %v679
      %v732 = vunpack.c.h.b16 %v679
      %v733 = vunpack.c.l.b16 %v680
      %v734 = vunpack.c.h.b16 %v680
      %v735 = vunpack.c.l.b16 %v681
      %v736 = vunpack.c.l.b16 %v682
      %v737 = vunpack.c.h.b16 %v682
      %v738 = vunpack.c.l.b16 %v683
      %v739 = vunpack.c.h.b16 %v683
      %v740 = vunpack.c.l.b16 %v684
      %v741 = vunpack.c.l.b16 %v685
      %v742 = vunpack.c.h.b16 %v685
      %v743 = vunpack.c.l.b16 %v686
      %v744 = vunpack.c.h.b16 %v686
      %v745 = vunpack.c.l.b16 %v687
      %v746 = vunpack.c.l.b16 %v688
      %v747 = vunpack.c.h.b16 %v688
      %v748 = vunpack.c.l.b16 %v689
      %v749 = vunpack.c.h.b16 %v689
      %v750 = vunpack.c.l.b16 %v690
      %v751 = vunpack.c.l.b16 %v691
      %v752 = vunpack.c.h.b16 %v691
      %v753 = vunpack.c.l.b16 %v692
      %v754 = vunpack.c.h.b16 %v692
      %v755 = vunpack.c.l.b16 %v693
      %v756 = vunpack.c.l.b16 %v694
      %v757 = vunpack.c.h.b16 %v694
      %v758 = vunpack.c.l.b16 %v695
      %v759 = vunpack.c.h.b16 %v695
      %v760 = vunpack.c.l.b16 %v696
      %v761 = vpack.c.b16 %v726, %v721
      %v762 = vpack.c.b16 %v727, %v722
      %v763 = vpack.c.b16 %v728, %v723
      %v764 = vpack.c.b16 %v729, %v724
      %v765 = vpack.c.b16 %v730, %v725
      %v766 = vpack.c.b16 %v736, %v731
      %v767 = vpack.c.b16 %v737, %v732
      %v768 = vpack.c.b16 %v738, %v733
      %v769 = vpack.c.b16 %v739, %v734
      %v770 = vpack.c.b16 %v740, %v735
      %v771 = vpack.c.b16 %v746, %v741
      %v772 = vpack.c.b16 %v747, %v742
      %v773 = vpack.c.b16 %v748, %v743
      %v774 = vpack.c.b16 %v749, %v744
      %v775 = vpack.c.b16 %v750, %v745
      %v776 = vpack.c.b16 %v756, %v751
      %v777 = vpack.c.b16 %v757, %v752
      %v778 = vpack.c.b16 %v758, %v753
      %v779 = vpack.c.b16 %v759, %v754
      %v780 = vpack.c.b16 %v760, %v755
      %v801 = vmul.bf16 %v657, %v761
      %v802 = vmul.bf16 %v658, %v762
      %v803 = vmul.bf16 %v659, %v763
      %v804 = vmul.bf16 %v660, %v764
      %v805 = vmul.bf16 %v661, %v765
      %v806 = vmul.bf16 %v660, %v766
      %v807 = vmul.bf16 %v662, %v767
      %v808 = vmul.bf16 %v663, %v768
      %v809 = vmul.bf16 %v664, %v769
      %v810 = vmul.bf16 %v665, %v770
      %v811 = vmul.bf16 %v664, %v771
      %v812 = vmul.bf16 %v666, %v772
      %v813 = vmul.bf16 %v667, %v773
      %v814 = vmul.bf16 %v668, %v774
      %v815 = vmul.bf16 %v669, %v775
      %v816 = vmul.bf16 %v668, %v776
      %v817 = vmul.bf16 %v670, %v777
      %v818 = vmul.bf16 %v671, %v778
      %v819 = vmul.bf16 %v657, %v779
      %v820 = vmul.bf16 %v672, %v780
      %v821 = vld [vmem:[%s1 + $0x18] sm:$0xf]
      %v822 = vld [vmem:[%s1 + $0x1c] sm:$0xf]
      %v823 = vld [vmem:[%s1 + $0x20] sm:$0xf]
      %v824 = vld [vmem:[%s1 + $0x24] sm:$0xf]
      %v825 = vld [vmem:[%s1 + $0x28] sm:$0xf]
      %v826 = vld [vmem:[%s1 + $0x2c] sm:$0xf]
      %v827 = vld [vmem:[%s1 + $0x30] sm:$0xf]
      %v828 = vld [vmem:[%s1 + $0x34] sm:$0xf]
      %v829 = vld [vmem:[%s1 + $0x38] sm:$0xf]
      %v830 = vld [vmem:[%s1 + $0x3c] sm:$0xf]
      %v831 = vld [vmem:[%s1 + $0x40] sm:$0xf]
      %v832 = vld [vmem:[%s1 + $0x44] sm:$0xf]
      %v833 = vld [vmem:[%s1 + $0x48] sm:$0xf]
      %v834 = vld [vmem:[%s1 + $0x4c] sm:$0xf]
      %v835 = vld [vmem:[%s1 + $0x50] sm:$0xf]
      %v836 = vld [vmem:[%s1 + $0x54] sm:$0xf]
      %v837 = vld [vmem:[%s1 + $0x58] sm:$0xf]
      %v838 = vld [vmem:[%s1 + $0x5c] sm:$0xf]
      %v839 = vld [vmem:[%s1 + $0x60] sm:$0xf]
      %v840 = vld [vmem:[%s1 + $0x64] sm:$0xf]
      %v841 = vld [vmem:[%s1 + $0x68] sm:$0xf]
      %v842 = vld [vmem:[%s1 + $0x6c] sm:$0xf]
      %v843 = vld [vmem:[%s1 + $0x70] sm:$0xf]
      %v844 = vld [vmem:[%s1 + $0x74] sm:$0xf]
      %v845 = vld [vmem:[%s1 + $0x78] sm:$0xf]
      %v846 = vld [vmem:[%s1 + $0x7c] sm:$0xf]
      %v847 = vld [vmem:[%s1 + $0x80] sm:$0xf]
      %v848 = vld [vmem:[%s1 + $0x84] sm:$0xf]
      %v849 = vld [vmem:[%s1 + $0x88] sm:$0xf]
      %v850 = vld [vmem:[%s1 + $0x8c] sm:$0xf]
      %v851 = vld [vmem:[%s1 + $0x90] sm:$0xf]
      %v852 = vld [vmem:[%s1 + $0x94] sm:$0xf]
      %v853 = vld [vmem:[%s1 + $0x98] sm:$0xf]
      %v854 = vld [vmem:[%s1 + $0x9c] sm:$0xf]
      %v855 = vld [vmem:[%s1 + $0xa0] sm:$0xf]
      %v856 = vld [vmem:[%s1 + $0xa4] sm:$0xf]
      %v857 = vld [vmem:[%s1 + $0xa8] sm:$0xf]
      %v858 = vld [vmem:[%s1 + $0xac] sm:$0xf]
      %v859 = vld [vmem:[%s1 + $0xb0] sm:$0xf]
      %v860 = vld [vmem:[%s1 + $0xb4] sm:$0xf]
      %v861 = vld [vmem:[%s1 + $0xb8] sm:$0xf]
      %v862 = vld [vmem:[%s1 + $0xbc] sm:$0xf]
      %v863 = vld [vmem:[%s1 + $0xc0] sm:$0xf]
      %v864 = vld [vmem:[%s1 + $0xc4] sm:$0xf]
      %v865 = vld [vmem:[%s1 + $0xc8] sm:$0xf]
      %v866 = vld [vmem:[%s1 + $0xcc] sm:$0xf]
      %v867 = vld [vmem:[%s1 + $0xd0] sm:$0xf]
      %v868 = vld [vmem:[%s1 + $0xd4] sm:$0xf]
      %v869 = vld [vmem:[%s1 + $0xd8] sm:$0xf]
      %v870 = vld [vmem:[%s1 + $0xdc] sm:$0xf]
      %v871 = vld [vmem:[%s1 + $0xe0] sm:$0xf]
      %v872 = vld [vmem:[%s1 + $0xe4] sm:$0xf]
      %v873 = vld [vmem:[%s1 + $0xe8] sm:$0xf]
      %v874 = vld [vmem:[%s1 + $0xec] sm:$0xf]
      %v875 = vld [vmem:[%s1 + $0xf0] sm:$0xf]
      %v876 = vld [vmem:[%s1 + $0xf4] sm:$0xf]
      %v877 = vld [vmem:[%s1 + $0xf8] sm:$0xf]
      %v878 = vld [vmem:[%s1 + $0xfc] sm:$0xf]
      %v879 = vld [vmem:[%s1 + $0x100] sm:$0xf]
      %v880 = vld [vmem:[%s1 + $0x104] sm:$0xf]
      %v881 = vld [vmem:[%s1 + $0x108] sm:$0xf]
      %v882 = vld [vmem:[%s1 + $0x10c] sm:$0xf]
      %v883 = vld [vmem:[%s1 + $0x110] sm:$0xf]
      %v884 = vld [vmem:[%s1 + $0x114] sm:$0xf]
      %v885 = vld [vmem:[%s1 + $0x118] sm:$0xf]
      %v886 = vld [vmem:[%s1 + $0x11c] sm:$0xf]
      %v887 = vld [vmem:[%s1 + $0x120] sm:$0xf]
      %v888 = vld [vmem:[%s1 + $0x124] sm:$0xf]
      %v889 = vld [vmem:[%s1 + $0x128] sm:$0xf]
      %v890 = vld [vmem:[%s1 + $0x12c] sm:$0xf]
      %v891 = vld [vmem:[%s1 + $0x130] sm:$0xf]
      %v892 = vld [vmem:[%s1 + $0x134] sm:$0xf]
      %v965 = vunpack.c.l.b16 %v821
      %v966 = vunpack.c.l.b16 %v822
      %v967 = vunpack.c.l.b16 %v823
      %v968 = vunpack.c.l.b16 %v824
      %v969 = vunpack.c.l.b16 %v825
      %v970 = vunpack.c.l.b16 %v826
      %v971 = vunpack.c.l.b16 %v827
      %v972 = vunpack.c.l.b16 %v828
      %v973 = vunpack.c.l.b16 %v829
      %v974 = vunpack.c.l.b16 %v830
      %v975 = vunpack.c.l.b16 %v831
      %v976 = vunpack.c.l.b16 %v832
      %v977 = vunpack.c.l.b16 %v833
      %v978 = vunpack.c.l.b16 %v834
      %v979 = vunpack.c.l.b16 %v835
      %v980 = vunpack.c.l.b16 %v836
      %v981 = vunpack.c.l.b16 %v837
      %v982 = vunpack.c.l.b16 %v838
      %v983 = vunpack.c.l.b16 %v839
      %v984 = vunpack.c.l.b16 %v840
      %v985 = vunpack.c.l.b16 %v841
      %v986 = vunpack.c.l.b16 %v842
      %v987 = vunpack.c.l.b16 %v843
      %v988 = vunpack.c.l.b16 %v844
      %v989 = vunpack.c.l.b16 %v845
      %v990 = vunpack.c.l.b16 %v846
      %v991 = vunpack.c.l.b16 %v847
      %v992 = vunpack.c.l.b16 %v848
      %v993 = vunpack.c.l.b16 %v849
      %v994 = vunpack.c.l.b16 %v850
      %v995 = vunpack.c.l.b16 %v851
      %v996 = vunpack.c.l.b16 %v852
      %v997 = vunpack.c.l.b16 %v853
      %v998 = vunpack.c.l.b16 %v854
      %v999 = vunpack.c.l.b16 %v855
      %v1000 = vunpack.c.l.b16 %v856
      %v1001 = vunpack.c.l.b16 %v857
      %v1002 = vunpack.c.l.b16 %v858
      %v1003 = vunpack.c.l.b16 %v859
      %v1004 = vunpack.c.l.b16 %v860
      %v1005 = vunpack.c.l.b16 %v861
      %v1006 = vunpack.c.l.b16 %v862
      %v1007 = vunpack.c.l.b16 %v863
      %v1008 = vunpack.c.l.b16 %v864
      %v1009 = vunpack.c.l.b16 %v865
      %v1010 = vunpack.c.l.b16 %v866
      %v1011 = vunpack.c.l.b16 %v867
      %v1012 = vunpack.c.l.b16 %v868
      %v1013 = vunpack.c.l.b16 %v869
      %v1014 = vunpack.c.l.b16 %v870
      %v1015 = vunpack.c.l.b16 %v871
      %v1016 = vunpack.c.l.b16 %v872
      %v1017 = vunpack.c.l.b16 %v873
      %v1018 = vunpack.c.l.b16 %v874
      %v1019 = vunpack.c.l.b16 %v875
      %v1020 = vunpack.c.l.b16 %v876
      %v1021 = vunpack.c.l.b16 %v877
      %v1022 = vunpack.c.l.b16 %v878
      %v1023 = vunpack.c.l.b16 %v879
      %v1024 = vunpack.c.l.b16 %v880
      %v1025 = vunpack.c.l.b16 %v881
      %v1026 = vunpack.c.l.b16 %v882
      %v1027 = vunpack.c.l.b16 %v883
      %v1028 = vunpack.c.l.b16 %v884
      %v1029 = vunpack.c.l.b16 %v885
      %v1030 = vunpack.c.l.b16 %v886
      %v1031 = vunpack.c.l.b16 %v887
      %v1032 = vunpack.c.l.b16 %v888
      %v1033 = vunpack.c.l.b16 %v889
      %v1034 = vunpack.c.l.b16 %v890
      %v1035 = vunpack.c.l.b16 %v891
      %v1036 = vunpack.c.l.b16 %v892
      %v1037 = vpack.c.b16 %v966, %v965
      %v1038 = vpack.c.b16 %v968, %v967
      %v1039 = vpack.c.b16 %v970, %v969
      %v1040 = vpack.c.b16 %v972, %v971
      %v1041 = vpack.c.b16 %v974, %v973
      %v1042 = vpack.c.b16 %v976, %v975
      %v1043 = vpack.c.b16 %v978, %v977
      %v1044 = vpack.c.b16 %v980, %v979
      %v1045 = vpack.c.b16 %v982, %v981
      %v1046 = vpack.c.b16 %v984, %v983
      %v1047 = vpack.c.b16 %v986, %v985
      %v1048 = vpack.c.b16 %v988, %v987
      %v1049 = vpack.c.b16 %v990, %v989
      %v1050 = vpack.c.b16 %v992, %v991
      %v1051 = vpack.c.b16 %v994, %v993
      %v1052 = vpack.c.b16 %v996, %v995
      %v1053 = vpack.c.b16 %v998, %v997
      %v1054 = vpack.c.b16 %v1000, %v999
      %v1055 = vpack.c.b16 %v1002, %v1001
      %v1056 = vpack.c.b16 %v1004, %v1003
      %v1057 = vpack.c.b16 %v1006, %v1005
      %v1058 = vpack.c.b16 %v1008, %v1007
      %v1059 = vpack.c.b16 %v1010, %v1009
      %v1060 = vpack.c.b16 %v1012, %v1011
      %v1061 = vpack.c.b16 %v1014, %v1013
      %v1062 = vpack.c.b16 %v1016, %v1015
      %v1063 = vpack.c.b16 %v1018, %v1017
      %v1064 = vpack.c.b16 %v1020, %v1019
      %v1065 = vpack.c.b16 %v1022, %v1021
      %v1066 = vpack.c.b16 %v1024, %v1023
      %v1067 = vpack.c.b16 %v1026, %v1025
      %v1068 = vpack.c.b16 %v1028, %v1027
      %v1069 = vpack.c.b16 %v1030, %v1029
      %v1070 = vpack.c.b16 %v1032, %v1031
      %v1071 = vpack.c.b16 %v1034, %v1033
      %v1072 = vpack.c.b16 %v1036, %v1035
      %v1110 = vsel %vm632, %v805, 0
      %v1113 = vsel %vm632, %v810, 0
      %v1116 = vsel %vm632, %v815, 0
      %v1119 = vsel %vm632, %v820, 0
      %1121 = vmatprep.subr.bf16.mxu0 0
      %1122 = vmatpush1.bf16.msra.mxu0 %v1037
      %1123 = vmatprep.subr.bf16.mxu0 0
      %1124 = vmatpush1.bf16.msra.mxu0 %v1038
      %1125 = vmatprep.subr.bf16.mxu0 0
      %1126 = vmatpush1.bf16.msra.mxu0 %v1039
      %1127 = vmatprep.subr.bf16.mxu0 0
      %1128 = vmatpush1.bf16.msra.mxu0 %v1040
      %1129 = vmatprep.subr.bf16.mxu0 0
      %1130 = vmatpush1.bf16.msra.mxu0 %v1041
      %1131 = vmatprep.subr.bf16.mxu0 0
      %1132 = vmatpush1.bf16.msra.mxu0 %v1042
      %1133 = vmatprep.subr.bf16.mxu0 0
      %1134 = vmatpush1.bf16.msra.mxu0 %v1043
      %1135 = vmatprep.subr.bf16.mxu0 0
      %1136 = vmatpush1.bf16.msra.mxu0 %v1044
      %1137 = vmatprep.subr.bf16.mxu0 0
      %1138 = vmatpush1.bf16.msra.mxu0 %v1045
      %1139 = vmatprep.subr.bf16.mxu0 0
      %1140 = vmatpush1.bf16.msra.mxu0 %v1046
      %1141 = vmatprep.subr.bf16.mxu0 0
      %1142 = vmatpush1.bf16.msra.mxu0 %v1047
      %1143 = vmatprep.subr.bf16.mxu0 0
      %1144 = vmatpush1.bf16.msra.mxu0 %v1048
      %1145 = vmatprep.subr.bf16.mxu0 0
      %1146 = vmatpush1.bf16.msra.mxu0 %v1049
      %1147 = vmatprep.subr.bf16.mxu0 0
      %1148 = vmatpush1.bf16.msra.mxu0 %v1050
      %1149 = vmatprep.subr.bf16.mxu0 0
      %1150 = vmatpush1.bf16.msra.mxu0 %v1051
      %1151 = vmatprep.subr.bf16.mxu0 0
      %1152 = vmatpush1.bf16.msra.mxu0 %v1052
      %1153 = vmatprep.mubr.bf16.mxu0 %v802
      %1154 = vmatmul.mubr.bf16.gmra.mrb[0].mxu0 %v801
      %v1155 = vpop.f32.mrb[0].mxu0
      %v1156 = vadd.f32 0.0, %v1155
      %v1157 = vpop.f32.mrb[0].mxu0
      %v1158 = vpop.f32.mrb[0].mxu0
      %v1159 = vadd.f32 0.0, %v1158
      %v1160 = vpop.f32.mrb[0].mxu0
      %1161 = vmatprep.mubr.bf16.mxu0 %v807
      %1162 = vmatmul.mubr.bf16.gmra.mrb[0].mxu0 %v806
      %v1163 = vpop.f32.mrb[0].mxu0
      %v1164 = vadd.f32 0.0, %v1163
      %v1165 = vpop.f32.mrb[0].mxu0
      %v1166 = vpop.f32.mrb[0].mxu0
      %v1167 = vadd.f32 0.0, %v1166
      %v1168 = vpop.f32.mrb[0].mxu0
      %1169 = vmatprep.mubr.bf16.mxu0 %v812
      %1170 = vmatmul.mubr.bf16.gmra.mrb[0].mxu0 %v811
      %v1171 = vpop.f32.mrb[0].mxu0
      %v1172 = vadd.f32 0.0, %v1171
      %v1173 = vpop.f32.mrb[0].mxu0
      %v1174 = vpop.f32.mrb[0].mxu0
      %v1175 = vadd.f32 0.0, %v1174
      %v1176 = vpop.f32.mrb[0].mxu0
      %1177 = vmatprep.mubr.bf16.mxu0 %v817
      %1178 = vmatmul.mubr.bf16.gmra.mrb[0].mxu0 %v816
      %v1179 = vpop.f32.mrb[0].mxu0
      %v1180 = vadd.f32 0.0, %v1179
      %v1181 = vpop.f32.mrb[0].mxu0
      %v1182 = vpop.f32.mrb[0].mxu0
      %v1183 = vadd.f32 0.0, %v1182
      %v1184 = vpop.f32.mrb[0].mxu0
      %1185 = vdwg.mxu0
      %1186 = vmatprep.subr.bf16.mxu0 0
      %1187 = vmatpush1.bf16.msra.mxu0 %v1053
      %1188 = vmatprep.subr.bf16.mxu0 0
      %1189 = vmatpush1.bf16.msra.mxu0 %v1054
      %1190 = vmatprep.subr.bf16.mxu0 0
      %1191 = vmatpush1.bf16.msra.mxu0 %v1055
      %1192 = vmatprep.subr.bf16.mxu0 0
      %1193 = vmatpush1.bf16.msra.mxu0 %v1056
      %1194 = vmatprep.subr.bf16.mxu0 0
      %1195 = vmatpush1.bf16.msra.mxu0 %v1057
      %1196 = vmatprep.subr.bf16.mxu0 0
      %1197 = vmatpush1.bf16.msra.mxu0 %v1058
      %1198 = vmatprep.subr.bf16.mxu0 0
      %1199 = vmatpush1.bf16.msra.mxu0 %v1059
      %1200 = vmatprep.subr.bf16.mxu0 0
      %1201 = vmatpush1.bf16.msra.mxu0 %v1060
      %1202 = vmatprep.subr.bf16.mxu0 0
      %1203 = vmatpush1.bf16.msra.mxu0 %v1061
      %1204 = vmatprep.subr.bf16.mxu0 0
      %1205 = vmatpush1.bf16.msra.mxu0 %v1062
      %1206 = vmatprep.subr.bf16.mxu0 0
      %1207 = vmatpush1.bf16.msra.mxu0 %v1063
      %1208 = vmatprep.subr.bf16.mxu0 0
      %1209 = vmatpush1.bf16.msra.mxu0 %v1064
      %1210 = vmatprep.subr.bf16.mxu0 0
      %1211 = vmatpush1.bf16.msra.mxu0 %v1065
      %1212 = vmatprep.subr.bf16.mxu0 0
      %1213 = vmatpush1.bf16.msra.mxu0 %v1066
      %1214 = vmatprep.subr.bf16.mxu0 0
      %1215 = vmatpush1.bf16.msra.mxu0 %v1067
      %1216 = vmatprep.subr.bf16.mxu0 0
      %1217 = vmatpush1.bf16.msra.mxu0 %v1068
      %1218 = vmatprep.mubr.bf16.mxu0 %v804
      %1219 = vmatmul.mubr.bf16.gmra.mrb[0].mxu0 %v803
      %v1220 = vpop.f32.mrb[0].mxu0
      %v1221 = vadd.f32 %v1156, %v1220
      %v1222 = vpop.f32.mrb[0].mxu0
      %v1223 = vpop.f32.mrb[0].mxu0
      %v1224 = vadd.f32 %v1159, %v1223
      %v1225 = vpop.f32.mrb[0].mxu0
      %1226 = vmatprep.mubr.bf16.mxu0 %v809
      %1227 = vmatmul.mubr.bf16.gmra.mrb[0].mxu0 %v808
      %v1228 = vpop.f32.mrb[0].mxu0
      %v1229 = vadd.f32 %v1164, %v1228
      %v1230 = vpop.f32.mrb[0].mxu0
      %v1231 = vpop.f32.mrb[0].mxu0
      %v1232 = vadd.f32 %v1167, %v1231
      %v1233 = vpop.f32.mrb[0].mxu0
      %1234 = vmatprep.mubr.bf16.mxu0 %v814
      %1235 = vmatmul.mubr.bf16.gmra.mrb[0].mxu0 %v813
      %v1236 = vpop.f32.mrb[0].mxu0
      %v1237 = vadd.f32 %v1172, %v1236
      %v1238 = vpop.f32.mrb[0].mxu0
      %v1239 = vpop.f32.mrb[0].mxu0
      %v1240 = vadd.f32 %v1175, %v1239
      %v1241 = vpop.f32.mrb[0].mxu0
      %1242 = vmatprep.mubr.bf16.mxu0 %v819
      %1243 = vmatmul.mubr.bf16.gmra.mrb[0].mxu0 %v818
      %v1244 = vpop.f32.mrb[0].mxu0
      %v1245 = vadd.f32 %v1180, %v1244
      %v1246 = vpop.f32.mrb[0].mxu0
      %v1247 = vpop.f32.mrb[0].mxu0
      %v1248 = vadd.f32 %v1183, %v1247
      %v1249 = vpop.f32.mrb[0].mxu0
      %1250 = vdwg.mxu0
      %1251 = vmatprep.subr.bf16.mxu0 0
      %1252 = vmatpush1.bf16.msra.mxu0 %v1069
      %1253 = vmatprep.subr.bf16.mxu0 0
      %1254 = vmatpush1.bf16.msra.mxu0 %v1070
      %1255 = vmatprep.subr.bf16.mxu0 0
      %1256 = vmatpush1.bf16.msra.mxu0 %v1071
      %1257 = vmatprep.subr.bf16.mxu0 0
      %1258 = vmatpush1.bf16.msra.mxu0 %v1072
      %1259 = vmatprep.subr.bf16.mxu0 0
      %1260 = vmatpush1.bf16.msra.mxu0 0
      %1261 = vmatprep.subr.bf16.mxu0 0
      %1262 = vmatpush1.bf16.msra.mxu0 0
      %1263 = vmatprep.subr.bf16.mxu0 0
      %1264 = vmatpush1.bf16.msra.mxu0 0
      %1265 = vmatprep.subr.bf16.mxu0 0
      %1266 = vmatpush1.bf16.msra.mxu0 0
      %1267 = vmatprep.subr.bf16.mxu0 0
      %1268 = vmatpush1.bf16.msra.mxu0 0
      %1269 = vmatprep.subr.bf16.mxu0 0
      %1270 = vmatpush1.bf16.msra.mxu0 0
      %1271 = vmatprep.subr.bf16.mxu0 0
      %1272 = vmatpush1.bf16.msra.mxu0 0
      %1273 = vmatprep.subr.bf16.mxu0 0
      %1274 = vmatpush1.bf16.msra.mxu0 0
      %1275 = vmatprep.subr.bf16.mxu0 0
      %1276 = vmatpush1.bf16.msra.mxu0 0
      %1277 = vmatprep.subr.bf16.mxu0 0
      %1278 = vmatpush1.bf16.msra.mxu0 0
      %1279 = vmatprep.subr.bf16.mxu0 0
      %1280 = vmatpush1.bf16.msra.mxu0 0
      %1281 = vmatprep.subr.bf16.mxu0 0
      %1282 = vmatpush1.bf16.msra.mxu0 0
      %1283 = vmatprep.mubr.bf16.mxu0 0
      %1284 = vmatmul.mubr.bf16.gmra.mrb[0].mxu0 %v1110
      %v1285 = vpop.f32.mrb[0].mxu0
      %v1286 = vadd.f32 %v1221, %v1285
      %v1287 = vpop.f32.mrb[0].mxu0
      %v1288 = vpop.f32.mrb[0].mxu0
      %v1289 = vadd.f32 %v1224, %v1288
      %v1290 = vpop.f32.mrb[0].mxu0
      %1291 = vmatprep.mubr.bf16.mxu0 0
      %1292 = vmatmul.mubr.bf16.gmra.mrb[0].mxu0 %v1113
      %v1293 = vpop.f32.mrb[0].mxu0
      %v1294 = vadd.f32 %v1229, %v1293
      %v1295 = vpop.f32.mrb[0].mxu0
      %v1296 = vpop.f32.mrb[0].mxu0
      %v1297 = vadd.f32 %v1232, %v1296
      %v1298 = vpop.f32.mrb[0].mxu0
      %1299 = vmatprep.mubr.bf16.mxu0 0
      %1300 = vmatmul.mubr.bf16.gmra.mrb[0].mxu0 %v1116
      %v1301 = vpop.f32.mrb[0].mxu0
      %v1302 = vadd.f32 %v1237, %v1301
      %v1303 = vpop.f32.mrb[0].mxu0
      %v1304 = vpop.f32.mrb[0].mxu0
      %v1305 = vadd.f32 %v1240, %v1304
      %v1306 = vpop.f32.mrb[0].mxu0
      %1307 = vmatprep.mubr.bf16.mxu0 0
      %1308 = vmatmul.mubr.bf16.gmra.mrb[0].mxu0 %v1119
      %v1309 = vpop.f32.mrb[0].mxu0
      %v1310 = vadd.f32 %v1245, %v1309
      %v1311 = vpop.f32.mrb[0].mxu0
      %v1312 = vpop.f32.mrb[0].mxu0
      %v1313 = vadd.f32 %v1248, %v1312
      %v1314 = vpop.f32.mrb[0].mxu0
      %1315 = vdwg.mxu0
      %vm1316 = vcmp.ge.f32.partialorder %v1286, 0.0
      %vm1317 = vcmp.ge.f32.partialorder %v1289, 0.0
      %vm1318 = vcmp.ge.f32.partialorder %v1294, 0.0
      %vm1319 = vcmp.ge.f32.partialorder %v1297, 0.0
      %vm1320 = vcmp.ge.f32.partialorder %v1302, 0.0
      %vm1321 = vcmp.ge.f32.partialorder %v1305, 0.0
      %vm1322 = vcmp.ge.f32.partialorder %v1310, 0.0
      %vm1323 = vcmp.ge.f32.partialorder %v1313, 0.0
      %v1324 = vmul.f32 %v1286, 0.2
      %v1325 = vmul.f32 %v1289, 0.2
      %v1326 = vmul.f32 %v1294, 0.2
      %v1327 = vmul.f32 %v1297, 0.2
      %v1328 = vmul.f32 %v1302, 0.2
      %v1329 = vmul.f32 %v1305, 0.2
      %v1330 = vmul.f32 %v1310, 0.2
      %v1331 = vmul.f32 %v1313, 0.2
      %v1332 = vsel %vm1316, %v1286, %v1324
      %v1333 = vsel %vm1317, %v1289, %v1325
      %v1334 = vsel %vm1318, %v1294, %v1326
      %v1335 = vsel %vm1319, %v1297, %v1327
      %v1336 = vsel %vm1320, %v1302, %v1328
      %v1337 = vsel %vm1321, %v1305, %v1329
      %v1338 = vsel %vm1322, %v1310, %v1330
      %v1339 = vsel %vm1323, %v1313, %v1331
      %v1340 = vld [vmem:[%s1 + $0x138] sm:$0xf]
      %v1341 = vld [vmem:[%s1 + $0x13c] sm:$0xf]
      %v1342 = vld [vmem:[%s1 + $0x140] sm:$0xf]
      %v1343 = vld [vmem:[%s1 + $0x144] sm:$0xf]
      %v1344 = vld [vmem:[%s1 + $0x148] sm:$0xf]
      %v1345 = vld [vmem:[%s1 + $0x14c] sm:$0xf]
      %v1346 = vld [vmem:[%s1 + $0x150] sm:$0xf]
      %v1347 = vld [vmem:[%s1 + $0x154] sm:$0xf]
      %v1348 = vpack.c.bf16 %v1333, %v1332
      %v1349 = vpack.c.bf16 %v1335, %v1334
      %v1350 = vpack.c.bf16 %v1337, %v1336
      %v1351 = vpack.c.bf16 %v1339, %v1338
      %v1360 = vunpack.c.l.b16 %v1340
      %v1361 = vunpack.c.l.b16 %v1341
      %v1362 = vunpack.c.l.b16 %v1342
      %v1363 = vunpack.c.l.b16 %v1343
      %v1364 = vunpack.c.l.b16 %v1344
      %v1365 = vunpack.c.l.b16 %v1345
      %v1366 = vunpack.c.l.b16 %v1346
      %v1367 = vunpack.c.l.b16 %v1347
      %v1368 = vpack.c.b16 %v1361, %v1360
      %v1369 = vpack.c.b16 %v1363, %v1362
      %v1370 = vpack.c.b16 %v1365, %v1364
      %v1371 = vpack.c.b16 %v1367, %v1366
      %v1377 = vsel %vm632, %v1348, 0
      %v1380 = vsel %vm632, %v1349, 0
      %v1383 = vsel %vm632, %v1350, 0
      %v1386 = vsel %vm632, %v1351, 0
      %1388 = vmatprep.subr.bf16.mxu0 0
      %1389 = vmatpush1.bf16.msra.mxu0 %v1368
      %1390 = vmatprep.subr.bf16.mxu0 0
      %1391 = vmatpush1.bf16.msra.mxu0 %v1369
      %1392 = vmatprep.subr.bf16.mxu0 0
      %1393 = vmatpush1.bf16.msra.mxu0 %v1370
      %1394 = vmatprep.subr.bf16.mxu0 0
      %1395 = vmatpush1.bf16.msra.mxu0 %v1371
      %1396 = vmatprep.subr.bf16.mxu0 0
      %1397 = vmatpush1.bf16.msra.mxu0 0
      %1398 = vmatprep.subr.bf16.mxu0 0
      %1399 = vmatpush1.bf16.msra.mxu0 0
      %1400 = vmatprep.subr.bf16.mxu0 0
      %1401 = vmatpush1.bf16.msra.mxu0 0
      %1402 = vmatprep.subr.bf16.mxu0 0
      %1403 = vmatpush1.bf16.msra.mxu0 0
      %1404 = vmatprep.subr.bf16.mxu0 0
      %1405 = vmatpush1.bf16.msra.mxu0 0
      %1406 = vmatprep.subr.bf16.mxu0 0
      %1407 = vmatpush1.bf16.msra.mxu0 0
      %1408 = vmatprep.subr.bf16.mxu0 0
      %1409 = vmatpush1.bf16.msra.mxu0 0
      %1410 = vmatprep.subr.bf16.mxu0 0
      %1411 = vmatpush1.bf16.msra.mxu0 0
      %1412 = vmatprep.subr.bf16.mxu0 0
      %1413 = vmatpush1.bf16.msra.mxu0 0
      %1414 = vmatprep.subr.bf16.mxu0 0
      %1415 = vmatpush1.bf16.msra.mxu0 0
      %1416 = vmatprep.subr.bf16.mxu0 0
      %1417 = vmatpush1.bf16.msra.mxu0 0
      %1418 = vmatprep.subr.bf16.mxu0 0
      %1419 = vmatpush1.bf16.msra.mxu0 0
      %1420 = vmatprep.mubr.bf16.mxu0 0
      %1421 = vmatmul.mubr.bf16.gmra.mrb[0].mxu0 %v1377
      %v1422 = vpop.f32.mrb[0].mxu0
      %v1423 = vadd.f32 0.0, %v1422
      %v1424 = vpop.f32.mrb[0].mxu0
      %v1425 = vpop.f32.mrb[0].mxu0
      %v1426 = vadd.f32 0.0, %v1425
      %v1427 = vpop.f32.mrb[0].mxu0
      %1428 = vmatprep.mubr.bf16.mxu0 0
      %1429 = vmatmul.mubr.bf16.gmra.mrb[0].mxu0 %v1380
      %v1430 = vpop.f32.mrb[0].mxu0
      %v1431 = vadd.f32 0.0, %v1430
      %v1432 = vpop.f32.mrb[0].mxu0
      %v1433 = vpop.f32.mrb[0].mxu0
      %v1434 = vadd.f32 0.0, %v1433
      %v1435 = vpop.f32.mrb[0].mxu0
      %1436 = vmatprep.mubr.bf16.mxu0 0
      %1437 = vmatmul.mubr.bf16.gmra.mrb[0].mxu0 %v1383
      %v1438 = vpop.f32.mrb[0].mxu0
      %v1439 = vadd.f32 0.0, %v1438
      %v1440 = vpop.f32.mrb[0].mxu0
      %v1441 = vpop.f32.mrb[0].mxu0
      %v1442 = vadd.f32 0.0, %v1441
      %v1443 = vpop.f32.mrb[0].mxu0
      %1444 = vmatprep.mubr.bf16.mxu0 0
      %1445 = vmatmul.mubr.bf16.gmra.mrb[0].mxu0 %v1386
      %v1446 = vpop.f32.mrb[0].mxu0
      %v1447 = vadd.f32 0.0, %v1446
      %v1448 = vpop.f32.mrb[0].mxu0
      %v1449 = vpop.f32.mrb[0].mxu0
      %v1450 = vadd.f32 0.0, %v1449
      %v1451 = vpop.f32.mrb[0].mxu0
      %1452 = vdwg.mxu0
      %v1453 = vunpack.c.l.bf16 %v373
      %v1454 = vunpack.c.h.bf16 %v373
      %v1455 = vunpack.c.l.bf16 %v374
      %v1456 = vunpack.c.h.bf16 %v374
      %v1457 = vunpack.c.l.bf16 %v375
      %v1458 = vunpack.c.h.bf16 %v375
      %v1459 = vunpack.c.l.bf16 %v376
      %v1460 = vunpack.c.h.bf16 %v376
      %v1461 = vadd.f32 %v1453, %v1423
      %v1462 = vadd.f32 %v1454, %v1426
      %v1463 = vadd.f32 %v1455, %v1431
      %v1464 = vadd.f32 %v1456, %v1434
      %v1465 = vadd.f32 %v1457, %v1439
      %v1466 = vadd.f32 %v1458, %v1442
      %v1467 = vadd.f32 %v1459, %v1447
      %v1468 = vadd.f32 %v1460, %v1450
      %v1469 = vpack.c.bf16 %v1462, %v1461
      %v1470 = vpack.c.bf16 %v1464, %v1463
      %v1471 = vpack.c.bf16 %v1466, %v1465
      %v1472 = vpack.c.bf16 %v1468, %v1467
      %v1473 = vld [vmem:[%s1 + $0x158] sm:$0xf]
      %v1474 = vld [vmem:[%s1 + $0x15c] sm:$0xf]
      %v1475 = vld [vmem:[%s1 + $0x160] sm:$0xf]
      %v1476 = vld [vmem:[%s1 + $0x164] sm:$0xf]
      %v1477 = vld [vmem:[%s2 + $0x8] sm:$0x1]
      %v1478 = vlaneseq
      %v1479 = vshrl.u32 %v1478, 7
      %v1480 = vsub.s32 0, %v1479
      %v1481 = vrot.slane %v1477, %v1480
      %v1486 = vunpack.c.l.b16 %v1473
      %v1487 = vunpack.c.l.b16 %v1474
      %v1488 = vunpack.c.l.b16 %v1475
      %v1489 = vunpack.c.l.b16 %v1476
      %v1490 = vpack.c.b16 %v1487, %v1486
      %v1491 = vpack.c.b16 %v1489, %v1488
      %v1495 = vsel %vm398, %v1469, 0
      %v1498 = vsel %vm398, %v1470, 0
      %v1501 = vsel %vm398, %v1471, 0
      %v1504 = vsel %vm398, %v1472, 0
      %1506 = vmatprep.subr.bf16.mxu0 0
      %1507 = vmatpush1.bf16.msra.mxu0 %v1490
      %1508 = vmatprep.subr.bf16.mxu0 0
      %1509 = vmatpush1.bf16.msra.mxu0 %v1491
      %1510 = vmatprep.subr.bf16.mxu0 0
      %1511 = vmatpush1.bf16.msra.mxu0 0
      %1512 = vmatprep.subr.bf16.mxu0 0
      %1513 = vmatpush1.bf16.msra.mxu0 0
      %1514 = vmatprep.subr.bf16.mxu0 0
      %1515 = vmatpush1.bf16.msra.mxu0 0
      %1516 = vmatprep.subr.bf16.mxu0 0
      %1517 = vmatpush1.bf16.msra.mxu0 0
      %1518 = vmatprep.subr.bf16.mxu0 0
      %1519 = vmatpush1.bf16.msra.mxu0 0
      %1520 = vmatprep.subr.bf16.mxu0 0
      %1521 = vmatpush1.bf16.msra.mxu0 0
      %1522 = vmatprep.subr.bf16.mxu0 0
      %1523 = vmatpush1.bf16.msra.mxu0 0
      %1524 = vmatprep.subr.bf16.mxu0 0
      %1525 = vmatpush1.bf16.msra.mxu0 0
      %1526 = vmatprep.subr.bf16.mxu0 0
      %1527 = vmatpush1.bf16.msra.mxu0 0
      %1528 = vmatprep.subr.bf16.mxu0 0
      %1529 = vmatpush1.bf16.msra.mxu0 0
      %1530 = vmatprep.subr.bf16.mxu0 0
      %1531 = vmatpush1.bf16.msra.mxu0 0
      %1532 = vmatprep.subr.bf16.mxu0 0
      %1533 = vmatpush1.bf16.msra.mxu0 0
      %1534 = vmatprep.subr.bf16.mxu0 0
      %1535 = vmatpush1.bf16.msra.mxu0 0
      %1536 = vmatprep.subr.bf16.mxu0 0
      %1537 = vmatpush1.bf16.msra.mxu0 0
      %1538 = vmatprep.mubr.bf16.mxu0 0
      %1539 = vmatmul.mubr.bf16.gmra.mrb[0].mxu0 %v1495
      %v1540 = vpop.f32.mrb[0].mxu0
      %v1541 = vadd.f32 %v1481, %v1540
      %v1542 = vpop.f32.mrb[0].mxu0
      %v1543 = vpop.f32.mrb[0].mxu0
      %v1544 = vadd.f32 %v1481, %v1543
      %v1545 = vpop.f32.mrb[0].mxu0
      %1546 = vmatprep.mubr.bf16.mxu0 0
      %1547 = vmatmul.mubr.bf16.gmra.mrb[0].mxu0 %v1498
      %v1548 = vpop.f32.mrb[0].mxu0
      %v1549 = vadd.f32 %v1481, %v1548
      %v1550 = vpop.f32.mrb[0].mxu0
      %v1551 = vpop.f32.mrb[0].mxu0
      %v1552 = vadd.f32 %v1481, %v1551
      %v1553 = vpop.f32.mrb[0].mxu0
      %1554 = vmatprep.mubr.bf16.mxu0 0
      %1555 = vmatmul.mubr.bf16.gmra.mrb[0].mxu0 %v1501
      %v1556 = vpop.f32.mrb[0].mxu0
      %v1557 = vadd.f32 %v1481, %v1556
      %v1558 = vpop.f32.mrb[0].mxu0
      %v1559 = vpop.f32.mrb[0].mxu0
      %v1560 = vadd.f32 %v1481, %v1559
      %v1561 = vpop.f32.mrb[0].mxu0
      %1562 = vmatprep.mubr.bf16.mxu0 0
      %1563 = vmatmul.mubr.bf16.gmra.mrb[0].mxu0 %v1504
      %v1564 = vpop.f32.mrb[0].mxu0
      %v1565 = vadd.f32 %v1481, %v1564
      %v1566 = vpop.f32.mrb[0].mxu0
      %v1567 = vpop.f32.mrb[0].mxu0
      %v1568 = vadd.f32 %v1481, %v1567
      %v1569 = vpop.f32.mrb[0].mxu0
      %1570 = vdwg.mxu0
      %v1571 = vld [vmem:[%s1 + $0x168] sm:$0xf]
      %v1572 = vld [vmem:[%s1 + $0x16c] sm:$0xf]
      %v1573 = vld [vmem:[%s1 + $0x170] sm:$0xf]
      %v1574 = vld [vmem:[%s1 + $0x174] sm:$0xf]
      %v1575 = vld [vmem:[%s2 + $0x10] sm:$0x1]
      %v1576 = vlaneseq
      %v1577 = vshrl.u32 %v1576, 7
      %v1578 = vsub.s32 0, %v1577
      %v1579 = vrot.slane %v1575, %v1578
      %v1584 = vunpack.c.l.b16 %v1571
      %v1585 = vunpack.c.l.b16 %v1572
      %v1586 = vunpack.c.l.b16 %v1573
      %v1587 = vunpack.c.l.b16 %v1574
      %v1588 = vpack.c.b16 %v1585, %v1584
      %v1589 = vpack.c.b16 %v1587, %v1586
      %1592 = vmatprep.subr.bf16.mxu0 0
      %1593 = vmatpush1.bf16.msra.mxu0 %v1588
      %1594 = vmatprep.subr.bf16.mxu0 0
      %1595 = vmatpush1.bf16.msra.mxu0 %v1589
      %1596 = vmatprep.subr.bf16.mxu0 0
      %1597 = vmatpush1.bf16.msra.mxu0 0
      %1598 = vmatprep.subr.bf16.mxu0 0
      %1599 = vmatpush1.bf16.msra.mxu0 0
      %1600 = vmatprep.subr.bf16.mxu0 0
      %1601 = vmatpush1.bf16.msra.mxu0 0
      %1602 = vmatprep.subr.bf16.mxu0 0
      %1603 = vmatpush1.bf16.msra.mxu0 0
      %1604 = vmatprep.subr.bf16.mxu0 0
      %1605 = vmatpush1.bf16.msra.mxu0 0
      %1606 = vmatprep.subr.bf16.mxu0 0
      %1607 = vmatpush1.bf16.msra.mxu0 0
      %1608 = vmatprep.subr.bf16.mxu0 0
      %1609 = vmatpush1.bf16.msra.mxu0 0
      %1610 = vmatprep.subr.bf16.mxu0 0
      %1611 = vmatpush1.bf16.msra.mxu0 0
      %1612 = vmatprep.subr.bf16.mxu0 0
      %1613 = vmatpush1.bf16.msra.mxu0 0
      %1614 = vmatprep.subr.bf16.mxu0 0
      %1615 = vmatpush1.bf16.msra.mxu0 0
      %1616 = vmatprep.subr.bf16.mxu0 0
      %1617 = vmatpush1.bf16.msra.mxu0 0
      %1618 = vmatprep.subr.bf16.mxu0 0
      %1619 = vmatpush1.bf16.msra.mxu0 0
      %1620 = vmatprep.subr.bf16.mxu0 0
      %1621 = vmatpush1.bf16.msra.mxu0 0
      %1622 = vmatprep.subr.bf16.mxu0 0
      %1623 = vmatpush1.bf16.msra.mxu0 0
      %1624 = vmatprep.mubr.bf16.mxu0 0
      %1625 = vmatmul.mubr.bf16.gmra.mrb[0].mxu0 %v1495
      %v1626 = vpop.f32.mrb[0].mxu0
      %v1627 = vadd.f32 %v1579, %v1626
      %v1628 = vpop.f32.mrb[0].mxu0
      %v1629 = vpop.f32.mrb[0].mxu0
      %v1630 = vadd.f32 %v1579, %v1629
      %v1631 = vpop.f32.mrb[0].mxu0
      %1632 = vmatprep.mubr.bf16.mxu0 0
      %1633 = vmatmul.mubr.bf16.gmra.mrb[0].mxu0 %v1498
      %v1634 = vpop.f32.mrb[0].mxu0
      %v1635 = vadd.f32 %v1579, %v1634
      %v1636 = vpop.f32.mrb[0].mxu0
      %v1637 = vpop.f32.mrb[0].mxu0
      %v1638 = vadd.f32 %v1579, %v1637
      %v1639 = vpop.f32.mrb[0].mxu0
      %1640 = vmatprep.mubr.bf16.mxu0 0
      %1641 = vmatmul.mubr.bf16.gmra.mrb[0].mxu0 %v1501
      %v1642 = vpop.f32.mrb[0].mxu0
      %v1643 = vadd.f32 %v1579, %v1642
      %v1644 = vpop.f32.mrb[0].mxu0
      %v1645 = vpop.f32.mrb[0].mxu0
      %v1646 = vadd.f32 %v1579, %v1645
      %v1647 = vpop.f32.mrb[0].mxu0
      %1648 = vmatprep.mubr.bf16.mxu0 0
      %1649 = vmatmul.mubr.bf16.gmra.mrb[0].mxu0 %v1504
      %v1650 = vpop.f32.mrb[0].mxu0
      %v1651 = vadd.f32 %v1579, %v1650
      %v1652 = vpop.f32.mrb[0].mxu0
      %v1653 = vpop.f32.mrb[0].mxu0
      %v1654 = vadd.f32 %v1579, %v1653
      %v1655 = vpop.f32.mrb[0].mxu0
      %1656 = vdwg.mxu0
      %v1657 = vld [vmem:[%s1 + $0x178] sm:$0xf]
      %v1658 = vld [vmem:[%s1 + $0x17c] sm:$0xf]
      %v1659 = vld [vmem:[%s1 + $0x180] sm:$0xf]
      %v1660 = vld [vmem:[%s1 + $0x184] sm:$0xf]
      %v1661 = vld [vmem:[%s2 + $0x18] sm:$0x1]
      %v1662 = vlaneseq
      %v1663 = vshrl.u32 %v1662, 7
      %v1664 = vsub.s32 0, %v1663
      %v1665 = vrot.slane %v1661, %v1664
      %v1670 = vunpack.c.l.b16 %v1657
      %v1671 = vunpack.c.l.b16 %v1658
      %v1672 = vunpack.c.l.b16 %v1659
      %v1673 = vunpack.c.l.b16 %v1660
      %v1674 = vpack.c.b16 %v1671, %v1670
      %v1675 = vpack.c.b16 %v1673, %v1672
      %1678 = vmatprep.subr.bf16.mxu0 0
      %1679 = vmatpush1.bf16.msra.mxu0 %v1674
      %1680 = vmatprep.subr.bf16.mxu0 0
      %1681 = vmatpush1.bf16.msra.mxu0 %v1675
      %1682 = vmatprep.subr.bf16.mxu0 0
      %1683 = vmatpush1.bf16.msra.mxu0 0
      %1684 = vmatprep.subr.bf16.mxu0 0
      %1685 = vmatpush1.bf16.msra.mxu0 0
      %1686 = vmatprep.subr.bf16.mxu0 0
      %1687 = vmatpush1.bf16.msra.mxu0 0
      %1688 = vmatprep.subr.bf16.mxu0 0
      %1689 = vmatpush1.bf16.msra.mxu0 0
      %1690 = vmatprep.subr.bf16.mxu0 0
      %1691 = vmatpush1.bf16.msra.mxu0 0
      %1692 = vmatprep.subr.bf16.mxu0 0
      %1693 = vmatpush1.bf16.msra.mxu0 0
      %1694 = vmatprep.subr.bf16.mxu0 0
      %1695 = vmatpush1.bf16.msra.mxu0 0
      %1696 = vmatprep.subr.bf16.mxu0 0
      %1697 = vmatpush1.bf16.msra.mxu0 0
      %1698 = vmatprep.subr.bf16.mxu0 0
      %1699 = vmatpush1.bf16.msra.mxu0 0
      %1700 = vmatprep.subr.bf16.mxu0 0
      %1701 = vmatpush1.bf16.msra.mxu0 0
      %1702 = vmatprep.subr.bf16.mxu0 0
      %1703 = vmatpush1.bf16.msra.mxu0 0
      %1704 = vmatprep.subr.bf16.mxu0 0
      %1705 = vmatpush1.bf16.msra.mxu0 0
      %1706 = vmatprep.subr.bf16.mxu0 0
      %1707 = vmatpush1.bf16.msra.mxu0 0
      %1708 = vmatprep.subr.bf16.mxu0 0
      %1709 = vmatpush1.bf16.msra.mxu0 0
      %1710 = vmatprep.mubr.bf16.mxu0 0
      %1711 = vmatmul.mubr.bf16.gmra.mrb[0].mxu0 %v1495
      %v1712 = vpop.f32.mrb[0].mxu0
      %v1713 = vadd.f32 %v1665, %v1712
      %v1714 = vpop.f32.mrb[0].mxu0
      %v1715 = vpop.f32.mrb[0].mxu0
      %v1716 = vadd.f32 %v1665, %v1715
      %v1717 = vpop.f32.mrb[0].mxu0
      %1718 = vmatprep.mubr.bf16.mxu0 0
      %1719 = vmatmul.mubr.bf16.gmra.mrb[0].mxu0 %v1498
      %v1720 = vpop.f32.mrb[0].mxu0
      %v1721 = vadd.f32 %v1665, %v1720
      %v1722 = vpop.f32.mrb[0].mxu0
      %v1723 = vpop.f32.mrb[0].mxu0
      %v1724 = vadd.f32 %v1665, %v1723
      %v1725 = vpop.f32.mrb[0].mxu0
      %1726 = vmatprep.mubr.bf16.mxu0 0
      %1727 = vmatmul.mubr.bf16.gmra.mrb[0].mxu0 %v1501
      %v1728 = vpop.f32.mrb[0].mxu0
      %v1729 = vadd.f32 %v1665, %v1728
      %v1730 = vpop.f32.mrb[0].mxu0
      %v1731 = vpop.f32.mrb[0].mxu0
      %v1732 = vadd.f32 %v1665, %v1731
      %v1733 = vpop.f32.mrb[0].mxu0
      %1734 = vmatprep.mubr.bf16.mxu0 0
      %1735 = vmatmul.mubr.bf16.gmra.mrb[0].mxu0 %v1504
      %v1736 = vpop.f32.mrb[0].mxu0
      %v1737 = vadd.f32 %v1665, %v1736
      %v1738 = vpop.f32.mrb[0].mxu0
      %v1739 = vpop.f32.mrb[0].mxu0
      %v1740 = vadd.f32 %v1665, %v1739
      %v1741 = vpop.f32.mrb[0].mxu0
      %1742 = vdwg.mxu0
      %v1743 = vld [vmem:[%s2 + $0x30] sm:$0xff]
      %v1744 = vld [vmem:[%s2 + $0x38] sm:$0xff]
      %v1745 = vld [vmem:[%s2 + $0x40] sm:$0xff]
      %v1746 = vld [vmem:[%s2 + $0x48] sm:$0xff]
      %v1747 = vld [vmem:[%s2 + $0x50] sm:$0x3]
      %v1748 = vmul.f32 %v1541, %v1541
      %v1749 = vmul.f32 %v1544, %v1544
      %v1750 = vmul.f32 %v1549, %v1549
      %v1751 = vmul.f32 %v1552, %v1552
      %v1752 = vmul.f32 %v1557, %v1557
      %v1753 = vmul.f32 %v1560, %v1560
      %v1754 = vmul.f32 %v1565, %v1565
      %v1755 = vmul.f32 %v1568, %v1568
      %v1757 = vsel %vm398, %v1748, 0
      %v1760 = vsel %vm398, %v1749, 0
      %v1763 = vsel %vm398, %v1750, 0
      %v1766 = vsel %vm398, %v1751, 0
      %v1769 = vsel %vm398, %v1752, 0
      %v1772 = vsel %vm398, %v1753, 0
      %v1775 = vsel %vm398, %v1754, 0
      %v1778 = vsel %vm398, %v1755, 0
      %1780 = vmatprep.subr.mxu0 0.0
      %1781 = vmatpush1.msra.mxu0 %v1743
      %1782 = vmatprep.subr.mxu0 0.0
      %1783 = vmatpush1.msra.mxu0 %v1744
      %1784 = vmatprep.subr.mxu0 0.0
      %1785 = vmatpush1.msra.mxu0 %v1745
      %1786 = vmatprep.subr.mxu0 0.0
      %1787 = vmatpush1.msra.mxu0 %v1746
      %1788 = vmatprep.subr.mxu0 0.0
      %1789 = vmatpush1.msra.mxu0 0.0
      %1790 = vmatprep.subr.mxu0 0.0
      %1791 = vmatpush1.msra.mxu0 0.0
      %1792 = vmatprep.subr.mxu0 0.0
      %1793 = vmatpush1.msra.mxu0 0.0
      %1794 = vmatprep.subr.mxu0 0.0
      %1795 = vmatpush1.msra.mxu0 0.0
      %1796 = vmatprep.subr.mxu0 0.0
      %1797 = vmatpush1.msra.mxu0 0.0
      %1798 = vmatprep.subr.mxu0 0.0
      %1799 = vmatpush1.msra.mxu0 0.0
      %1800 = vmatprep.subr.mxu0 0.0
      %1801 = vmatpush1.msra.mxu0 0.0
      %1802 = vmatprep.subr.mxu0 0.0
      %1803 = vmatpush1.msra.mxu0 0.0
      %1804 = vmatprep.subr.mxu0 0.0
      %1805 = vmatpush1.msra.mxu0 0.0
      %1806 = vmatprep.subr.mxu0 0.0
      %1807 = vmatpush1.msra.mxu0 0.0
      %1808 = vmatprep.subr.mxu0 0.0
      %1809 = vmatpush1.msra.mxu0 0.0
      %1810 = vmatprep.subr.mxu0 0.0
      %1811 = vmatpush1.msra.mxu0 0.0
      %1812 = vmatprep.subr.mxu0 0.0
      %1813 = vmatpush1.msra.mxu0 0.0
      %1814 = vmatprep.subr.mxu0 0.0
      %1815 = vmatpush1.msra.mxu0 0.0
      %1816 = vmatprep.subr.mxu0 0.0
      %1817 = vmatpush1.msra.mxu0 0.0
      %1818 = vmatprep.subr.mxu0 0.0
      %1819 = vmatpush1.msra.mxu0 0.0
      %1820 = vmatprep.subr.mxu0 0.0
      %1821 = vmatpush1.msra.mxu0 0.0
      %1822 = vmatprep.subr.mxu0 0.0
      %1823 = vmatpush1.msra.mxu0 0.0
      %1824 = vmatprep.subr.mxu0 0.0
      %1825 = vmatpush1.msra.mxu0 0.0
      %1826 = vmatprep.subr.mxu0 0.0
      %1827 = vmatpush1.msra.mxu0 0.0
      %1828 = vmatprep.subr.mxu0 0.0
      %1829 = vmatpush1.msra.mxu0 0.0
      %1830 = vmatprep.subr.mxu0 0.0
      %1831 = vmatpush1.msra.mxu0 0.0
      %1832 = vmatprep.subr.mxu0 0.0
      %1833 = vmatpush1.msra.mxu0 0.0
      %1834 = vmatprep.subr.mxu0 0.0
      %1835 = vmatpush1.msra.mxu0 0.0
      %1836 = vmatprep.subr.mxu0 0.0
      %1837 = vmatpush1.msra.mxu0 0.0
      %1838 = vmatprep.subr.mxu0 0.0
      %1839 = vmatpush1.msra.mxu0 0.0
      %1840 = vmatprep.subr.mxu0 0.0
      %1841 = vmatpush1.msra.mxu0 0.0
      %1842 = vmatprep.subr.mxu0 0.0
      %1843 = vmatpush1.msra.mxu0 0.0
      %1844 = vmatprep.mubr.f32.mxu0 0.0
      %1845 = vmatmul.mubr.f32.gmra.mrb[0].mxu0 %v1757
      %v1846 = vpop.f32.mrb[0].mxu0
      %v1847 = vadd.f32 0.0, %v1846
      %v1848 = vpop.f32.mrb[0].mxu0
      %1849 = vmatprep.mubr.f32.mxu0 0.0
      %1850 = vmatmul.mubr.f32.gmra.mrb[0].mxu0 %v1760
      %v1851 = vpop.f32.mrb[0].mxu0
      %v1852 = vadd.f32 0.0, %v1851
      %v1853 = vpop.f32.mrb[0].mxu0
      %1854 = vmatprep.mubr.f32.mxu0 0.0
      %1855 = vmatmul.mubr.f32.gmra.mrb[0].mxu0 %v1763
      %v1856 = vpop.f32.mrb[0].mxu0
      %v1857 = vadd.f32 0.0, %v1856
      %v1858 = vpop.f32.mrb[0].mxu0
      %1859 = vmatprep.mubr.f32.mxu0 0.0
      %1860 = vmatmul.mubr.f32.gmra.mrb[0].mxu0 %v1766
      %v1861 = vpop.f32.mrb[0].mxu0
      %v1862 = vadd.f32 0.0, %v1861
      %v1863 = vpop.f32.mrb[0].mxu0
      %1864 = vmatprep.mubr.f32.mxu0 0.0
      %1865 = vmatmul.mubr.f32.gmra.mrb[0].mxu0 %v1769
      %v1866 = vpop.f32.mrb[0].mxu0
      %v1867 = vadd.f32 0.0, %v1866
      %v1868 = vpop.f32.mrb[0].mxu0
      %1869 = vmatprep.mubr.f32.mxu0 0.0
      %1870 = vmatmul.mubr.f32.gmra.mrb[0].mxu0 %v1772
      %v1871 = vpop.f32.mrb[0].mxu0
      %v1872 = vadd.f32 0.0, %v1871
      %v1873 = vpop.f32.mrb[0].mxu0
      %1874 = vmatprep.mubr.f32.mxu0 0.0
      %1875 = vmatmul.mubr.f32.gmra.mrb[0].mxu0 %v1775
      %v1876 = vpop.f32.mrb[0].mxu0
      %v1877 = vadd.f32 0.0, %v1876
      %v1878 = vpop.f32.mrb[0].mxu0
      %1879 = vmatprep.mubr.f32.mxu0 0.0
      %1880 = vmatmul.mubr.f32.gmra.mrb[0].mxu0 %v1778
      %v1881 = vpop.f32.mrb[0].mxu0
      %v1882 = vadd.f32 0.0, %v1881
      %v1883 = vpop.f32.mrb[0].mxu0
      %1884 = vdwg.mxu0
      %v1885 = vmax.f32 %v1847, 1e-24
      %v1886 = vmax.f32 %v1852, 1e-24
      %v1887 = vmax.f32 %v1857, 1e-24
      %v1888 = vmax.f32 %v1862, 1e-24
      %v1889 = vmax.f32 %v1867, 1e-24
      %v1890 = vmax.f32 %v1872, 1e-24
      %v1891 = vmax.f32 %v1877, 1e-24
      %v1892 = vmax.f32 %v1882, 1e-24
      %v1893 = vrsqrt.pop %v1885
      %v1894 = vrsqrt.pop %v1886
      %v1895 = vrsqrt.pop %v1887
      %v1896 = vrsqrt.pop %v1888
      %v1897 = vrsqrt.pop %v1889
      %v1898 = vrsqrt.pop %v1890
      %v1899 = vrsqrt.pop %v1891
      %v1900 = vrsqrt.pop %v1892
      %v1901 = vmul.f32 %v1893, 0.25
      %v1902 = vmul.f32 %v1894, 0.25
      %v1903 = vmul.f32 %v1895, 0.25
      %v1904 = vmul.f32 %v1896, 0.25
      %v1905 = vmul.f32 %v1897, 0.25
      %v1906 = vmul.f32 %v1898, 0.25
      %v1907 = vmul.f32 %v1899, 0.25
      %v1908 = vmul.f32 %v1900, 0.25
      %v1909 = vmul.f32 %v1541, %v1901
      %v1910 = vmul.f32 %v1544, %v1902
      %v1911 = vmul.f32 %v1549, %v1903
      %v1912 = vmul.f32 %v1552, %v1904
      %v1913 = vmul.f32 %v1557, %v1905
      %v1914 = vmul.f32 %v1560, %v1906
      %v1915 = vmul.f32 %v1565, %v1907
      %v1916 = vmul.f32 %v1568, %v1908
      %v1917 = vmul.f32 %v1627, %v1627
      %v1918 = vmul.f32 %v1630, %v1630
      %v1919 = vmul.f32 %v1635, %v1635
      %v1920 = vmul.f32 %v1638, %v1638
      %v1921 = vmul.f32 %v1643, %v1643
      %v1922 = vmul.f32 %v1646, %v1646
      %v1923 = vmul.f32 %v1651, %v1651
      %v1924 = vmul.f32 %v1654, %v1654
      %v1926 = vsel %vm398, %v1917, 0
      %v1929 = vsel %vm398, %v1918, 0
      %v1932 = vsel %vm398, %v1919, 0
      %v1935 = vsel %vm398, %v1920, 0
      %v1938 = vsel %vm398, %v1921, 0
      %v1941 = vsel %vm398, %v1922, 0
      %v1944 = vsel %vm398, %v1923, 0
      %v1947 = vsel %vm398, %v1924, 0
      %1949 = vmatprep.subr.mxu0 0.0
      %1950 = vmatpush1.msra.mxu0 %v1743
      %1951 = vmatprep.subr.mxu0 0.0
      %1952 = vmatpush1.msra.mxu0 %v1744
      %1953 = vmatprep.subr.mxu0 0.0
      %1954 = vmatpush1.msra.mxu0 %v1745
      %1955 = vmatprep.subr.mxu0 0.0
      %1956 = vmatpush1.msra.mxu0 %v1746
      %1957 = vmatprep.subr.mxu0 0.0
      %1958 = vmatpush1.msra.mxu0 0.0
      %1959 = vmatprep.subr.mxu0 0.0
      %1960 = vmatpush1.msra.mxu0 0.0
      %1961 = vmatprep.subr.mxu0 0.0
      %1962 = vmatpush1.msra.mxu0 0.0
      %1963 = vmatprep.subr.mxu0 0.0
      %1964 = vmatpush1.msra.mxu0 0.0
      %1965 = vmatprep.subr.mxu0 0.0
      %1966 = vmatpush1.msra.mxu0 0.0
      %1967 = vmatprep.subr.mxu0 0.0
      %1968 = vmatpush1.msra.mxu0 0.0
      %1969 = vmatprep.subr.mxu0 0.0
      %1970 = vmatpush1.msra.mxu0 0.0
      %1971 = vmatprep.subr.mxu0 0.0
      %1972 = vmatpush1.msra.mxu0 0.0
      %1973 = vmatprep.subr.mxu0 0.0
      %1974 = vmatpush1.msra.mxu0 0.0
      %1975 = vmatprep.subr.mxu0 0.0
      %1976 = vmatpush1.msra.mxu0 0.0
      %1977 = vmatprep.subr.mxu0 0.0
      %1978 = vmatpush1.msra.mxu0 0.0
      %1979 = vmatprep.subr.mxu0 0.0
      %1980 = vmatpush1.msra.mxu0 0.0
      %1981 = vmatprep.subr.mxu0 0.0
      %1982 = vmatpush1.msra.mxu0 0.0
      %1983 = vmatprep.subr.mxu0 0.0
      %1984 = vmatpush1.msra.mxu0 0.0
      %1985 = vmatprep.subr.mxu0 0.0
      %1986 = vmatpush1.msra.mxu0 0.0
      %1987 = vmatprep.subr.mxu0 0.0
      %1988 = vmatpush1.msra.mxu0 0.0
      %1989 = vmatprep.subr.mxu0 0.0
      %1990 = vmatpush1.msra.mxu0 0.0
      %1991 = vmatprep.subr.mxu0 0.0
      %1992 = vmatpush1.msra.mxu0 0.0
      %1993 = vmatprep.subr.mxu0 0.0
      %1994 = vmatpush1.msra.mxu0 0.0
      %1995 = vmatprep.subr.mxu0 0.0
      %1996 = vmatpush1.msra.mxu0 0.0
      %1997 = vmatprep.subr.mxu0 0.0
      %1998 = vmatpush1.msra.mxu0 0.0
      %1999 = vmatprep.subr.mxu0 0.0
      %2000 = vmatpush1.msra.mxu0 0.0
      %2001 = vmatprep.subr.mxu0 0.0
      %2002 = vmatpush1.msra.mxu0 0.0
      %2003 = vmatprep.subr.mxu0 0.0
      %2004 = vmatpush1.msra.mxu0 0.0
      %2005 = vmatprep.subr.mxu0 0.0
      %2006 = vmatpush1.msra.mxu0 0.0
      %2007 = vmatprep.subr.mxu0 0.0
      %2008 = vmatpush1.msra.mxu0 0.0
      %2009 = vmatprep.subr.mxu0 0.0
      %2010 = vmatpush1.msra.mxu0 0.0
      %2011 = vmatprep.subr.mxu0 0.0
      %2012 = vmatpush1.msra.mxu0 0.0
      %2013 = vmatprep.mubr.f32.mxu0 0.0
      %2014 = vmatmul.mubr.f32.gmra.mrb[0].mxu0 %v1926
      %v2015 = vpop.f32.mrb[0].mxu0
      %v2016 = vadd.f32 0.0, %v2015
      %v2017 = vpop.f32.mrb[0].mxu0
      %2018 = vmatprep.mubr.f32.mxu0 0.0
      %2019 = vmatmul.mubr.f32.gmra.mrb[0].mxu0 %v1929
      %v2020 = vpop.f32.mrb[0].mxu0
      %v2021 = vadd.f32 0.0, %v2020
      %v2022 = vpop.f32.mrb[0].mxu0
      %2023 = vmatprep.mubr.f32.mxu0 0.0
      %2024 = vmatmul.mubr.f32.gmra.mrb[0].mxu0 %v1932
      %v2025 = vpop.f32.mrb[0].mxu0
      %v2026 = vadd.f32 0.0, %v2025
      %v2027 = vpop.f32.mrb[0].mxu0
      %2028 = vmatprep.mubr.f32.mxu0 0.0
      %2029 = vmatmul.mubr.f32.gmra.mrb[0].mxu0 %v1935
      %v2030 = vpop.f32.mrb[0].mxu0
      %v2031 = vadd.f32 0.0, %v2030
      %v2032 = vpop.f32.mrb[0].mxu0
      %2033 = vmatprep.mubr.f32.mxu0 0.0
      %2034 = vmatmul.mubr.f32.gmra.mrb[0].mxu0 %v1938
      %v2035 = vpop.f32.mrb[0].mxu0
      %v2036 = vadd.f32 0.0, %v2035
      %v2037 = vpop.f32.mrb[0].mxu0
      %2038 = vmatprep.mubr.f32.mxu0 0.0
      %2039 = vmatmul.mubr.f32.gmra.mrb[0].mxu0 %v1941
      %v2040 = vpop.f32.mrb[0].mxu0
      %v2041 = vadd.f32 0.0, %v2040
      %v2042 = vpop.f32.mrb[0].mxu0
      %2043 = vmatprep.mubr.f32.mxu0 0.0
      %2044 = vmatmul.mubr.f32.gmra.mrb[0].mxu0 %v1944
      %v2045 = vpop.f32.mrb[0].mxu0
      %v2046 = vadd.f32 0.0, %v2045
      %v2047 = vpop.f32.mrb[0].mxu0
      %2048 = vmatprep.mubr.f32.mxu0 0.0
      %2049 = vmatmul.mubr.f32.gmra.mrb[0].mxu0 %v1947
      %v2050 = vpop.f32.mrb[0].mxu0
      %v2051 = vadd.f32 0.0, %v2050
      %v2052 = vpop.f32.mrb[0].mxu0
      %2053 = vdwg.mxu0
      %v2054 = vmax.f32 %v2016, 1e-24
      %v2055 = vmax.f32 %v2021, 1e-24
      %v2056 = vmax.f32 %v2026, 1e-24
      %v2057 = vmax.f32 %v2031, 1e-24
      %v2058 = vmax.f32 %v2036, 1e-24
      %v2059 = vmax.f32 %v2041, 1e-24
      %v2060 = vmax.f32 %v2046, 1e-24
      %v2061 = vmax.f32 %v2051, 1e-24
      %v2062 = vrsqrt.pop %v2054
      %v2063 = vrsqrt.pop %v2055
      %v2064 = vrsqrt.pop %v2056
      %v2065 = vrsqrt.pop %v2057
      %v2066 = vrsqrt.pop %v2058
      %v2067 = vrsqrt.pop %v2059
      %v2068 = vrsqrt.pop %v2060
      %v2069 = vrsqrt.pop %v2061
      %v2070 = vmul.f32 %v1627, %v2062
      %v2071 = vmul.f32 %v1630, %v2063
      %v2072 = vmul.f32 %v1635, %v2064
      %v2073 = vmul.f32 %v1638, %v2065
      %v2074 = vmul.f32 %v1643, %v2066
      %v2075 = vmul.f32 %v1646, %v2067
      %v2076 = vmul.f32 %v1651, %v2068
      %v2077 = vmul.f32 %v1654, %v2069
      %v2078 = vpack.c.bf16 %v2071, %v2070
      %v2079 = vpack.c.bf16 %v2073, %v2072
      %v2080 = vpack.c.bf16 %v2075, %v2074
      %v2081 = vpack.c.bf16 %v2077, %v2076
      %v2082 = vpack.c.bf16 %v1716, %v1713
      %v2083 = vpack.c.bf16 %v1724, %v1721
      %v2084 = vpack.c.bf16 %v1732, %v1729
      %v2085 = vpack.c.bf16 %v1740, %v1737
      %v2086 = vld [vmem:[%s6] sm:$0xf]
      %v2087 = vld [vmem:[%s6 + $0x4] sm:$0xf]
      %v2088 = vld [vmem:[%s6 + $0x8] sm:$0xf]
      %v2089 = vld [vmem:[%s6 + $0xc] sm:$0xf]
      %v2090 = vld [vmem:[%s6 + $0x10] sm:$0xf]
      %v2091 = vld [vmem:[%s6 + $0x14] sm:$0xf]
      %v2092 = vld [vmem:[%s6 + $0x18] sm:$0xf]
      %v2093 = vld [vmem:[%s6 + $0x1c] sm:$0xf]
      %v2094 = vlaneseq
      %v2095 = vshrl.u32 %v2094, 7
      %v2096 = vsub.s32 0, %v2095
      %v2097 = vrot.slane %v1747, %v2096
      %v2098 = vmul.f32 %v1909, %v2097
      %v2099 = vmul.f32 %v1910, %v2097
      %v2100 = vmul.f32 %v1911, %v2097
      %v2101 = vmul.f32 %v1912, %v2097
      %v2102 = vmul.f32 %v1913, %v2097
      %v2103 = vmul.f32 %v1914, %v2097
      %v2104 = vmul.f32 %v1915, %v2097
      %v2105 = vmul.f32 %v1916, %v2097
      %v2106 = vpack.c.bf16 %v2099, %v2098
      %v2107 = vpack.c.bf16 %v2101, %v2100
      %v2108 = vpack.c.bf16 %v2103, %v2102
      %v2109 = vpack.c.bf16 %v2105, %v2104
      %v2111 = vsel %vm398, %v2106, 0
      %v2114 = vsel %vm398, %v2107, 0
      %v2117 = vsel %vm398, %v2108, 0
      %v2120 = vsel %vm398, %v2109, 0
      %v2123 = vsel %vm398, %v2078, 0
      %v2126 = vsel %vm398, %v2079, 0
      %v2129 = vsel %vm398, %v2080, 0
      %v2132 = vsel %vm398, %v2081, 0
      %2134 = vmatprep.subr.bf16.mxu0 0
      %2135 = vmatpush1.bf16.xpose.msra.mxu0 %v2123
      %2136 = vmatprep.subr.bf16.mxu0 0
      %2137 = vmatpush1.bf16.xpose.msra.mxu0 %v2126
      %2138 = vmatprep.subr.bf16.mxu0 0
      %2139 = vmatpush1.bf16.xpose.msra.mxu0 %v2129
      %2140 = vmatprep.subr.bf16.mxu0 0
      %2141 = vmatpush1.bf16.xpose.msra.mxu0 %v2132
      %2142 = vmatprep.subr.bf16.mxu0 0
      %2143 = vmatpush1.bf16.xpose.msra.mxu0 0
      %2144 = vmatprep.subr.bf16.mxu0 0
      %2145 = vmatpush1.bf16.xpose.msra.mxu0 0
      %2146 = vmatprep.subr.bf16.mxu0 0
      %2147 = vmatpush1.bf16.xpose.msra.mxu0 0
      %2148 = vmatprep.subr.bf16.mxu0 0
      %2149 = vmatpush1.bf16.xpose.msra.mxu0 0
      %2150 = vmatprep.subr.bf16.mxu0 0
      %2151 = vmatpush1.bf16.xpose.msra.mxu0 0
      %2152 = vmatprep.subr.bf16.mxu0 0
      %2153 = vmatpush1.bf16.xpose.msra.mxu0 0
      %2154 = vmatprep.subr.bf16.mxu0 0
      %2155 = vmatpush1.bf16.xpose.msra.mxu0 0
      %2156 = vmatprep.subr.bf16.mxu0 0
      %2157 = vmatpush1.bf16.xpose.msra.mxu0 0
      %2158 = vmatprep.subr.bf16.mxu0 0
      %2159 = vmatpush1.bf16.xpose.msra.mxu0 0
      %2160 = vmatprep.subr.bf16.mxu0 0
      %2161 = vmatpush1.bf16.xpose.msra.mxu0 0
      %2162 = vmatprep.subr.bf16.mxu0 0
      %2163 = vmatpush1.bf16.xpose.msra.mxu0 0
      %2164 = vmatprep.subr.bf16.mxu0 0
      %2165 = vmatpush1.bf16.xpose.msra.mxu0 0
      %2166 = vmatprep.mubr.bf16.mxu0 0
      %2167 = vmatmul.mubr.bf16.gmra.mrb[0].mxu0 %v2111
      %v2168 = vpop.f32.mrb[0].mxu0
      %v2169 = vadd.f32 0.0, %v2168
      %v2170 = vpop.f32.mrb[0].mxu0
      %v2171 = vpop.f32.mrb[0].mxu0
      %v2172 = vadd.f32 0.0, %v2171
      %v2173 = vpop.f32.mrb[0].mxu0
      %2174 = vmatprep.mubr.bf16.mxu0 0
      %2175 = vmatmul.mubr.bf16.gmra.mrb[0].mxu0 %v2114
      %v2176 = vpop.f32.mrb[0].mxu0
      %v2177 = vadd.f32 0.0, %v2176
      %v2178 = vpop.f32.mrb[0].mxu0
      %v2179 = vpop.f32.mrb[0].mxu0
      %v2180 = vadd.f32 0.0, %v2179
      %v2181 = vpop.f32.mrb[0].mxu0
      %2182 = vmatprep.mubr.bf16.mxu0 0
      %2183 = vmatmul.mubr.bf16.gmra.mrb[0].mxu0 %v2117
      %v2184 = vpop.f32.mrb[0].mxu0
      %v2185 = vadd.f32 0.0, %v2184
      %v2186 = vpop.f32.mrb[0].mxu0
      %v2187 = vpop.f32.mrb[0].mxu0
      %v2188 = vadd.f32 0.0, %v2187
      %v2189 = vpop.f32.mrb[0].mxu0
      %2190 = vmatprep.mubr.bf16.mxu0 0
      %2191 = vmatmul.mubr.bf16.gmra.mrb[0].mxu0 %v2120
      %v2192 = vpop.f32.mrb[0].mxu0
      %v2193 = vadd.f32 0.0, %v2192
      %v2194 = vpop.f32.mrb[0].mxu0
      %v2195 = vpop.f32.mrb[0].mxu0
      %v2196 = vadd.f32 0.0, %v2195
      %v2197 = vpop.f32.mrb[0].mxu0
      %2198 = vdwg.mxu0
      %v2199 = vmul.f32 %v2169, 1.442695
      %v2200 = vpow.pop %v2199
      %v2201 = vmul.f32 %v2172, 1.442695
      %v2202 = vpow.pop %v2201
      %v2203 = vmul.f32 %v2177, 1.442695
      %v2204 = vpow.pop %v2203
      %v2205 = vmul.f32 %v2180, 1.442695
      %v2206 = vpow.pop %v2205
      %v2207 = vmul.f32 %v2185, 1.442695
      %v2208 = vpow.pop %v2207
      %v2209 = vmul.f32 %v2188, 1.442695
      %v2210 = vpow.pop %v2209
      %v2211 = vmul.f32 %v2193, 1.442695
      %v2212 = vpow.pop %v2211
      %v2213 = vmul.f32 %v2196, 1.442695
      %v2214 = vpow.pop %v2213
      %v2215 = vunpack.c.l.bf16 %v2086
      %v2216 = vunpack.c.l.bf16 %v2087
      %v2217 = vunpack.c.l.bf16 %v2088
      %v2218 = vunpack.c.l.bf16 %v2089
      %v2219 = vunpack.c.l.bf16 %v2090
      %v2220 = vunpack.c.l.bf16 %v2091
      %v2221 = vunpack.c.l.bf16 %v2092
      %v2222 = vunpack.c.l.bf16 %v2093
      %v2223 = vmul.f32 %v2200, %v2215
      %v2224 = vmul.f32 %v2202, %v2216
      %v2225 = vmul.f32 %v2204, %v2217
      %v2226 = vmul.f32 %v2206, %v2218
      %v2227 = vmul.f32 %v2208, %v2219
      %v2228 = vmul.f32 %v2210, %v2220
      %v2229 = vmul.f32 %v2212, %v2221
      %v2230 = vmul.f32 %v2214, %v2222
      %v2231 = vsel %vm632, %v2223, 0.0
      %2232 = vadd.xlane.f32.xlu0 %v2231
      %v2233 = vpop.xlane.xlu0 %2232
      %v2234 = vsel %vm632, %v2224, 0.0
      %2235 = vadd.xlane.f32.xlu0 %v2234
      %v2236 = vpop.xlane.xlu0 %2235
      %v2237 = vsel %vm632, %v2225, 0.0
      %2238 = vadd.xlane.f32.xlu0 %v2237
      %v2239 = vpop.xlane.xlu0 %2238
      %v2240 = vsel %vm632, %v2226, 0.0
      %2241 = vadd.xlane.f32.xlu0 %v2240
      %v2242 = vpop.xlane.xlu0 %2241
      %v2243 = vsel %vm632, %v2227, 0.0
      %2244 = vadd.xlane.f32.xlu0 %v2243
      %v2245 = vpop.xlane.xlu0 %2244
      %v2246 = vsel %vm632, %v2228, 0.0
      %2247 = vadd.xlane.f32.xlu0 %v2246
      %v2248 = vpop.xlane.xlu0 %2247
      %v2249 = vsel %vm632, %v2229, 0.0
      %2250 = vadd.xlane.f32.xlu0 %v2249
      %v2251 = vpop.xlane.xlu0 %2250
      %v2252 = vsel %vm632, %v2230, 0.0
      %2253 = vadd.xlane.f32.xlu0 %v2252
      %v2254 = vpop.xlane.xlu0 %2253
      %v2255 = vrcp.pop %v2233
      %v2256 = vrcp.pop %v2236
      %v2257 = vrcp.pop %v2239
      %v2258 = vrcp.pop %v2242
      %v2259 = vrcp.pop %v2245
      %v2260 = vrcp.pop %v2248
      %v2261 = vrcp.pop %v2251
      %v2262 = vrcp.pop %v2254
      %v2263 = vmul.f32 %v2223, %v2255
      %v2264 = vmul.f32 %v2224, %v2256
      %v2265 = vmul.f32 %v2225, %v2257
      %v2266 = vmul.f32 %v2226, %v2258
      %v2267 = vmul.f32 %v2227, %v2259
      %v2268 = vmul.f32 %v2228, %v2260
      %v2269 = vmul.f32 %v2229, %v2261
      %v2270 = vmul.f32 %v2230, %v2262
      %v2271 = vpack.c.bf16 %v2264, %v2263
      %v2272 = vpack.c.bf16 %v2266, %v2265
      %v2273 = vpack.c.bf16 %v2268, %v2267
      %v2274 = vpack.c.bf16 %v2270, %v2269
      %v2276 = vsel %vm632, %v2271, 0
      %v2279 = vsel %vm632, %v2272, 0
      %v2282 = vsel %vm632, %v2273, 0
      %v2285 = vsel %vm632, %v2274, 0
      %2287 = vmatprep.subr.bf16.mxu0 0
      %2288 = vmatpush1.bf16.msra.mxu0 %v2082
      %2289 = vmatprep.subr.bf16.mxu0 0
      %2290 = vmatpush1.bf16.msra.mxu0 %v2083
      %2291 = vmatprep.subr.bf16.mxu0 0
      %2292 = vmatpush1.bf16.msra.mxu0 %v2084
      %2293 = vmatprep.subr.bf16.mxu0 0
      %2294 = vmatpush1.bf16.msra.mxu0 %v2085
      %2295 = vmatprep.subr.bf16.mxu0 0
      %2296 = vmatpush1.bf16.msra.mxu0 0
      %2297 = vmatprep.subr.bf16.mxu0 0
      %2298 = vmatpush1.bf16.msra.mxu0 0
      %2299 = vmatprep.subr.bf16.mxu0 0
      %2300 = vmatpush1.bf16.msra.mxu0 0
      %2301 = vmatprep.subr.bf16.mxu0 0
      %2302 = vmatpush1.bf16.msra.mxu0 0
      %2303 = vmatprep.subr.bf16.mxu0 0
      %2304 = vmatpush1.bf16.msra.mxu0 0
      %2305 = vmatprep.subr.bf16.mxu0 0
      %2306 = vmatpush1.bf16.msra.mxu0 0
      %2307 = vmatprep.subr.bf16.mxu0 0
      %2308 = vmatpush1.bf16.msra.mxu0 0
      %2309 = vmatprep.subr.bf16.mxu0 0
      %2310 = vmatpush1.bf16.msra.mxu0 0
      %2311 = vmatprep.subr.bf16.mxu0 0
      %2312 = vmatpush1.bf16.msra.mxu0 0
      %2313 = vmatprep.subr.bf16.mxu0 0
      %2314 = vmatpush1.bf16.msra.mxu0 0
      %2315 = vmatprep.subr.bf16.mxu0 0
      %2316 = vmatpush1.bf16.msra.mxu0 0
      %2317 = vmatprep.subr.bf16.mxu0 0
      %2318 = vmatpush1.bf16.msra.mxu0 0
      %2319 = vmatprep.mubr.bf16.mxu0 0
      %2320 = vmatmul.mubr.bf16.gmra.mrb[0].mxu0 %v2276
      %v2321 = vpop.f32.mrb[0].mxu0
      %v2322 = vadd.f32 0.0, %v2321
      %v2323 = vpop.f32.mrb[0].mxu0
      %v2324 = vpop.f32.mrb[0].mxu0
      %v2325 = vadd.f32 0.0, %v2324
      %v2326 = vpop.f32.mrb[0].mxu0
      %2327 = vmatprep.mubr.bf16.mxu0 0
      %2328 = vmatmul.mubr.bf16.gmra.mrb[0].mxu0 %v2279
      %v2329 = vpop.f32.mrb[0].mxu0
      %v2330 = vadd.f32 0.0, %v2329
      %v2331 = vpop.f32.mrb[0].mxu0
      %v2332 = vpop.f32.mrb[0].mxu0
      %v2333 = vadd.f32 0.0, %v2332
      %v2334 = vpop.f32.mrb[0].mxu0
      %2335 = vmatprep.mubr.bf16.mxu0 0
      %2336 = vmatmul.mubr.bf16.gmra.mrb[0].mxu0 %v2282
      %v2337 = vpop.f32.mrb[0].mxu0
      %v2338 = vadd.f32 0.0, %v2337
      %v2339 = vpop.f32.mrb[0].mxu0
      %v2340 = vpop.f32.mrb[0].mxu0
      %v2341 = vadd.f32 0.0, %v2340
      %v2342 = vpop.f32.mrb[0].mxu0
      %2343 = vmatprep.mubr.bf16.mxu0 0
      %2344 = vmatmul.mubr.bf16.gmra.mrb[0].mxu0 %v2285
      %v2345 = vpop.f32.mrb[0].mxu0
      %v2346 = vadd.f32 0.0, %v2345
      %v2347 = vpop.f32.mrb[0].mxu0
      %v2348 = vpop.f32.mrb[0].mxu0
      %v2349 = vadd.f32 0.0, %v2348
      %v2350 = vpop.f32.mrb[0].mxu0
      %2351 = vdwg.mxu0
      %v2352 = vmul.f32 %v2322, %v2097
      %v2353 = vmul.f32 %v2325, %v2097
      %v2354 = vmul.f32 %v2330, %v2097
      %v2355 = vmul.f32 %v2333, %v2097
      %v2356 = vmul.f32 %v2338, %v2097
      %v2357 = vmul.f32 %v2341, %v2097
      %v2358 = vmul.f32 %v2346, %v2097
      %v2359 = vmul.f32 %v2349, %v2097
      %v2360 = vadd.f32 %v2352, 0.0
      %v2361 = vadd.f32 %v2353, 0.0
      %v2362 = vadd.f32 %v2354, 0.0
      %v2363 = vadd.f32 %v2355, 0.0
      %v2364 = vadd.f32 %v2356, 0.0
      %v2365 = vadd.f32 %v2357, 0.0
      %v2366 = vadd.f32 %v2358, 0.0
      %v2367 = vadd.f32 %v2359, 0.0
      %v2368 = vlaneseq
      %v2369 = vshrl.u32 %v2368, 7
      %v2370 = vsub.s32 1, %v2369
      %v2371 = vrot.slane %v1747, %v2370
      %v2372 = vmul.f32 %v1909, %v2371
      %v2373 = vmul.f32 %v1910, %v2371
      %v2374 = vmul.f32 %v1911, %v2371
      %v2375 = vmul.f32 %v1912, %v2371
      %v2376 = vmul.f32 %v1913, %v2371
      %v2377 = vmul.f32 %v1914, %v2371
      %v2378 = vmul.f32 %v1915, %v2371
      %v2379 = vmul.f32 %v1916, %v2371
      %v2380 = vpack.c.bf16 %v2373, %v2372
      %v2381 = vpack.c.bf16 %v2375, %v2374
      %v2382 = vpack.c.bf16 %v2377, %v2376
      %v2383 = vpack.c.bf16 %v2379, %v2378
      %v2385 = vsel %vm398, %v2380, 0
      %v2388 = vsel %vm398, %v2381, 0
      %v2391 = vsel %vm398, %v2382, 0
      %v2394 = vsel %vm398, %v2383, 0
      %2396 = vmatprep.subr.bf16.mxu0 0
      %2397 = vmatpush1.bf16.xpose.msra.mxu0 %v2123
      %2398 = vmatprep.subr.bf16.mxu0 0
      %2399 = vmatpush1.bf16.xpose.msra.mxu0 %v2126
      %2400 = vmatprep.subr.bf16.mxu0 0
      %2401 = vmatpush1.bf16.xpose.msra.mxu0 %v2129
      %2402 = vmatprep.subr.bf16.mxu0 0
      %2403 = vmatpush1.bf16.xpose.msra.mxu0 %v2132
      %2404 = vmatprep.subr.bf16.mxu0 0
      %2405 = vmatpush1.bf16.xpose.msra.mxu0 0
      %2406 = vmatprep.subr.bf16.mxu0 0
      %2407 = vmatpush1.bf16.xpose.msra.mxu0 0
      %2408 = vmatprep.subr.bf16.mxu0 0
      %2409 = vmatpush1.bf16.xpose.msra.mxu0 0
      %2410 = vmatprep.subr.bf16.mxu0 0
      %2411 = vmatpush1.bf16.xpose.msra.mxu0 0
      %2412 = vmatprep.subr.bf16.mxu0 0
      %2413 = vmatpush1.bf16.xpose.msra.mxu0 0
      %2414 = vmatprep.subr.bf16.mxu0 0
      %2415 = vmatpush1.bf16.xpose.msra.mxu0 0
      %2416 = vmatprep.subr.bf16.mxu0 0
      %2417 = vmatpush1.bf16.xpose.msra.mxu0 0
      %2418 = vmatprep.subr.bf16.mxu0 0
      %2419 = vmatpush1.bf16.xpose.msra.mxu0 0
      %2420 = vmatprep.subr.bf16.mxu0 0
      %2421 = vmatpush1.bf16.xpose.msra.mxu0 0
      %2422 = vmatprep.subr.bf16.mxu0 0
      %2423 = vmatpush1.bf16.xpose.msra.mxu0 0
      %2424 = vmatprep.subr.bf16.mxu0 0
      %2425 = vmatpush1.bf16.xpose.msra.mxu0 0
      %2426 = vmatprep.subr.bf16.mxu0 0
      %2427 = vmatpush1.bf16.xpose.msra.mxu0 0
      %2428 = vmatprep.mubr.bf16.mxu0 0
      %2429 = vmatmul.mubr.bf16.gmra.mrb[0].mxu0 %v2385
      %v2430 = vpop.f32.mrb[0].mxu0
      %v2431 = vadd.f32 0.0, %v2430
      %v2432 = vpop.f32.mrb[0].mxu0
      %v2433 = vpop.f32.mrb[0].mxu0
      %v2434 = vadd.f32 0.0, %v2433
      %v2435 = vpop.f32.mrb[0].mxu0
      %2436 = vmatprep.mubr.bf16.mxu0 0
      %2437 = vmatmul.mubr.bf16.gmra.mrb[0].mxu0 %v2388
      %v2438 = vpop.f32.mrb[0].mxu0
      %v2439 = vadd.f32 0.0, %v2438
      %v2440 = vpop.f32.mrb[0].mxu0
      %v2441 = vpop.f32.mrb[0].mxu0
      %v2442 = vadd.f32 0.0, %v2441
      %v2443 = vpop.f32.mrb[0].mxu0
      %2444 = vmatprep.mubr.bf16.mxu0 0
      %2445 = vmatmul.mubr.bf16.gmra.mrb[0].mxu0 %v2391
      %v2446 = vpop.f32.mrb[0].mxu0
      %v2447 = vadd.f32 0.0, %v2446
      %v2448 = vpop.f32.mrb[0].mxu0
      %v2449 = vpop.f32.mrb[0].mxu0
      %v2450 = vadd.f32 0.0, %v2449
      %v2451 = vpop.f32.mrb[0].mxu0
      %2452 = vmatprep.mubr.bf16.mxu0 0
      %2453 = vmatmul.mubr.bf16.gmra.mrb[0].mxu0 %v2394
      %v2454 = vpop.f32.mrb[0].mxu0
      %v2455 = vadd.f32 0.0, %v2454
      %v2456 = vpop.f32.mrb[0].mxu0
      %v2457 = vpop.f32.mrb[0].mxu0
      %v2458 = vadd.f32 0.0, %v2457
      %v2459 = vpop.f32.mrb[0].mxu0
      %2460 = vdwg.mxu0
      %v2461 = vmul.f32 %v2431, 1.442695
      %v2462 = vpow.pop %v2461
      %v2463 = vmul.f32 %v2434, 1.442695
      %v2464 = vpow.pop %v2463
      %v2465 = vmul.f32 %v2439, 1.442695
      %v2466 = vpow.pop %v2465
      %v2467 = vmul.f32 %v2442, 1.442695
      %v2468 = vpow.pop %v2467
      %v2469 = vmul.f32 %v2447, 1.442695
      %v2470 = vpow.pop %v2469
      %v2471 = vmul.f32 %v2450, 1.442695
      %v2472 = vpow.pop %v2471
      %v2473 = vmul.f32 %v2455, 1.442695
      %v2474 = vpow.pop %v2473
      %v2475 = vmul.f32 %v2458, 1.442695
      %v2476 = vpow.pop %v2475
      %v2477 = vmul.f32 %v2462, %v2215
      %v2478 = vmul.f32 %v2464, %v2216
      %v2479 = vmul.f32 %v2466, %v2217
      %v2480 = vmul.f32 %v2468, %v2218
      %v2481 = vmul.f32 %v2470, %v2219
      %v2482 = vmul.f32 %v2472, %v2220
      %v2483 = vmul.f32 %v2474, %v2221
      %v2484 = vmul.f32 %v2476, %v2222
      %v2485 = vsel %vm632, %v2477, 0.0
      %2486 = vadd.xlane.f32.xlu0 %v2485
      %v2487 = vpop.xlane.xlu0 %2486
      %v2488 = vsel %vm632, %v2478, 0.0
      %2489 = vadd.xlane.f32.xlu0 %v2488
      %v2490 = vpop.xlane.xlu0 %2489
      %v2491 = vsel %vm632, %v2479, 0.0
      %2492 = vadd.xlane.f32.xlu0 %v2491
      %v2493 = vpop.xlane.xlu0 %2492
      %v2494 = vsel %vm632, %v2480, 0.0
      %2495 = vadd.xlane.f32.xlu0 %v2494
      %v2496 = vpop.xlane.xlu0 %2495
      %v2497 = vsel %vm632, %v2481, 0.0
      %2498 = vadd.xlane.f32.xlu0 %v2497
      %v2499 = vpop.xlane.xlu0 %2498
      %v2500 = vsel %vm632, %v2482, 0.0
      %2501 = vadd.xlane.f32.xlu0 %v2500
      %v2502 = vpop.xlane.xlu0 %2501
      %v2503 = vsel %vm632, %v2483, 0.0
      %2504 = vadd.xlane.f32.xlu0 %v2503
      %v2505 = vpop.xlane.xlu0 %2504
      %v2506 = vsel %vm632, %v2484, 0.0
      %2507 = vadd.xlane.f32.xlu0 %v2506
      %v2508 = vpop.xlane.xlu0 %2507
      %v2509 = vrcp.pop %v2487
      %v2510 = vrcp.pop %v2490
      %v2511 = vrcp.pop %v2493
      %v2512 = vrcp.pop %v2496
      %v2513 = vrcp.pop %v2499
      %v2514 = vrcp.pop %v2502
      %v2515 = vrcp.pop %v2505
      %v2516 = vrcp.pop %v2508
      %v2517 = vmul.f32 %v2477, %v2509
      %v2518 = vmul.f32 %v2478, %v2510
      %v2519 = vmul.f32 %v2479, %v2511
      %v2520 = vmul.f32 %v2480, %v2512
      %v2521 = vmul.f32 %v2481, %v2513
      %v2522 = vmul.f32 %v2482, %v2514
      %v2523 = vmul.f32 %v2483, %v2515
      %v2524 = vmul.f32 %v2484, %v2516
      %v2525 = vpack.c.bf16 %v2518, %v2517
      %v2526 = vpack.c.bf16 %v2520, %v2519
      %v2527 = vpack.c.bf16 %v2522, %v2521
      %v2528 = vpack.c.bf16 %v2524, %v2523
      %v2530 = vsel %vm632, %v2525, 0
      %v2533 = vsel %vm632, %v2526, 0
      %v2536 = vsel %vm632, %v2527, 0
      %v2539 = vsel %vm632, %v2528, 0
      %2541 = vmatprep.subr.bf16.mxu0 0
      %2542 = vmatpush1.bf16.msra.mxu0 %v2082
      %2543 = vmatprep.subr.bf16.mxu0 0
      %2544 = vmatpush1.bf16.msra.mxu0 %v2083
      %2545 = vmatprep.subr.bf16.mxu0 0
      %2546 = vmatpush1.bf16.msra.mxu0 %v2084
      %2547 = vmatprep.subr.bf16.mxu0 0
      %2548 = vmatpush1.bf16.msra.mxu0 %v2085
      %2549 = vmatprep.subr.bf16.mxu0 0
      %2550 = vmatpush1.bf16.msra.mxu0 0
      %2551 = vmatprep.subr.bf16.mxu0 0
      %2552 = vmatpush1.bf16.msra.mxu0 0
      %2553 = vmatprep.subr.bf16.mxu0 0
      %2554 = vmatpush1.bf16.msra.mxu0 0
      %2555 = vmatprep.subr.bf16.mxu0 0
      %2556 = vmatpush1.bf16.msra.mxu0 0
      %2557 = vmatprep.subr.bf16.mxu0 0
      %2558 = vmatpush1.bf16.msra.mxu0 0
      %2559 = vmatprep.subr.bf16.mxu0 0
      %2560 = vmatpush1.bf16.msra.mxu0 0
      %2561 = vmatprep.subr.bf16.mxu0 0
      %2562 = vmatpush1.bf16.msra.mxu0 0
      %2563 = vmatprep.subr.bf16.mxu0 0
      %2564 = vmatpush1.bf16.msra.mxu0 0
      %2565 = vmatprep.subr.bf16.mxu0 0
      %2566 = vmatpush1.bf16.msra.mxu0 0
      %2567 = vmatprep.subr.bf16.mxu0 0
      %2568 = vmatpush1.bf16.msra.mxu0 0
      %2569 = vmatprep.subr.bf16.mxu0 0
      %2570 = vmatpush1.bf16.msra.mxu0 0
      %2571 = vmatprep.subr.bf16.mxu0 0
      %2572 = vmatpush1.bf16.msra.mxu0 0
      %2573 = vmatprep.mubr.bf16.mxu0 0
      %2574 = vmatmul.mubr.bf16.gmra.mrb[0].mxu0 %v2530
      %v2575 = vpop.f32.mrb[0].mxu0
      %v2576 = vadd.f32 0.0, %v2575
      %v2577 = vpop.f32.mrb[0].mxu0
      %v2578 = vpop.f32.mrb[0].mxu0
      %v2579 = vadd.f32 0.0, %v2578
      %v2580 = vpop.f32.mrb[0].mxu0
      %2581 = vmatprep.mubr.bf16.mxu0 0
      %2582 = vmatmul.mubr.bf16.gmra.mrb[0].mxu0 %v2533
      %v2583 = vpop.f32.mrb[0].mxu0
      %v2584 = vadd.f32 0.0, %v2583
      %v2585 = vpop.f32.mrb[0].mxu0
      %v2586 = vpop.f32.mrb[0].mxu0
      %v2587 = vadd.f32 0.0, %v2586
      %v2588 = vpop.f32.mrb[0].mxu0
      %2589 = vmatprep.mubr.bf16.mxu0 0
      %2590 = vmatmul.mubr.bf16.gmra.mrb[0].mxu0 %v2536
      %v2591 = vpop.f32.mrb[0].mxu0
      %v2592 = vadd.f32 0.0, %v2591
      %v2593 = vpop.f32.mrb[0].mxu0
      %v2594 = vpop.f32.mrb[0].mxu0
      %v2595 = vadd.f32 0.0, %v2594
      %v2596 = vpop.f32.mrb[0].mxu0
      %2597 = vmatprep.mubr.bf16.mxu0 0
      %2598 = vmatmul.mubr.bf16.gmra.mrb[0].mxu0 %v2539
      %v2599 = vpop.f32.mrb[0].mxu0
      %v2600 = vadd.f32 0.0, %v2599
      %v2601 = vpop.f32.mrb[0].mxu0
      %v2602 = vpop.f32.mrb[0].mxu0
      %v2603 = vadd.f32 0.0, %v2602
      %v2604 = vpop.f32.mrb[0].mxu0
      %2605 = vdwg.mxu0
      %v2606 = vmul.f32 %v2576, %v2371
      %v2607 = vmul.f32 %v2579, %v2371
      %v2608 = vmul.f32 %v2584, %v2371
      %v2609 = vmul.f32 %v2587, %v2371
      %v2610 = vmul.f32 %v2592, %v2371
      %v2611 = vmul.f32 %v2595, %v2371
      %v2612 = vmul.f32 %v2600, %v2371
      %v2613 = vmul.f32 %v2603, %v2371
      %v2614 = vadd.f32 %v2360, %v2606
      %v2615 = vadd.f32 %v2361, %v2607
      %v2616 = vadd.f32 %v2362, %v2608
      %v2617 = vadd.f32 %v2363, %v2609
      %v2618 = vadd.f32 %v2364, %v2610
      %v2619 = vadd.f32 %v2365, %v2611
      %v2620 = vadd.f32 %v2366, %v2612
      %v2621 = vadd.f32 %v2367, %v2613
      %v2622 = vld [vmem:[%s1 + $0x188] sm:$0xf]
      %v2623 = vld [vmem:[%s1 + $0x18c] sm:$0xf]
      %v2624 = vld [vmem:[%s1 + $0x190] sm:$0xf]
      %v2625 = vld [vmem:[%s1 + $0x194] sm:$0xf]
      %v2626 = vpack.c.bf16 %v2615, %v2614
      %v2627 = vpack.c.bf16 %v2617, %v2616
      %v2628 = vpack.c.bf16 %v2619, %v2618
      %v2629 = vpack.c.bf16 %v2621, %v2620
      %v2634 = vunpack.c.l.b16 %v2622
      %v2635 = vunpack.c.l.b16 %v2623
      %v2636 = vunpack.c.l.b16 %v2624
      %v2637 = vunpack.c.l.b16 %v2625
      %v2638 = vpack.c.b16 %v2635, %v2634
      %v2639 = vpack.c.b16 %v2637, %v2636
      %v2643 = vsel %vm398, %v2626, 0
      %v2646 = vsel %vm398, %v2627, 0
      %v2649 = vsel %vm398, %v2628, 0
      %v2652 = vsel %vm398, %v2629, 0
      %2654 = vmatprep.subr.bf16.mxu0 0
      %2655 = vmatpush1.bf16.msra.mxu0 %v2638
      %2656 = vmatprep.subr.bf16.mxu0 0
      %2657 = vmatpush1.bf16.msra.mxu0 %v2639
      %2658 = vmatprep.subr.bf16.mxu0 0
      %2659 = vmatpush1.bf16.msra.mxu0 0
      %2660 = vmatprep.subr.bf16.mxu0 0
      %2661 = vmatpush1.bf16.msra.mxu0 0
      %2662 = vmatprep.subr.bf16.mxu0 0
      %2663 = vmatpush1.bf16.msra.mxu0 0
      %2664 = vmatprep.subr.bf16.mxu0 0
      %2665 = vmatpush1.bf16.msra.mxu0 0
      %2666 = vmatprep.subr.bf16.mxu0 0
      %2667 = vmatpush1.bf16.msra.mxu0 0
      %2668 = vmatprep.subr.bf16.mxu0 0
      %2669 = vmatpush1.bf16.msra.mxu0 0
      %2670 = vmatprep.subr.bf16.mxu0 0
      %2671 = vmatpush1.bf16.msra.mxu0 0
      %2672 = vmatprep.subr.bf16.mxu0 0
      %2673 = vmatpush1.bf16.msra.mxu0 0
      %2674 = vmatprep.subr.bf16.mxu0 0
      %2675 = vmatpush1.bf16.msra.mxu0 0
      %2676 = vmatprep.subr.bf16.mxu0 0
      %2677 = vmatpush1.bf16.msra.mxu0 0
      %2678 = vmatprep.subr.bf16.mxu0 0
      %2679 = vmatpush1.bf16.msra.mxu0 0
      %2680 = vmatprep.subr.bf16.mxu0 0
      %2681 = vmatpush1.bf16.msra.mxu0 0
      %2682 = vmatprep.subr.bf16.mxu0 0
      %2683 = vmatpush1.bf16.msra.mxu0 0
      %2684 = vmatprep.subr.bf16.mxu0 0
      %2685 = vmatpush1.bf16.msra.mxu0 0
      %2686 = vmatprep.mubr.bf16.mxu0 0
      %2687 = vmatmul.mubr.bf16.gmra.mrb[0].mxu0 %v2643
      %v2688 = vpop.f32.mrb[0].mxu0
      %v2689 = vadd.f32 0.0, %v2688
      %v2690 = vpop.f32.mrb[0].mxu0
      %v2691 = vpop.f32.mrb[0].mxu0
      %v2692 = vadd.f32 0.0, %v2691
      %v2693 = vpop.f32.mrb[0].mxu0
      %2694 = vmatprep.mubr.bf16.mxu0 0
      %2695 = vmatmul.mubr.bf16.gmra.mrb[0].mxu0 %v2646
      %v2696 = vpop.f32.mrb[0].mxu0
      %v2697 = vadd.f32 0.0, %v2696
      %v2698 = vpop.f32.mrb[0].mxu0
      %v2699 = vpop.f32.mrb[0].mxu0
      %v2700 = vadd.f32 0.0, %v2699
      %v2701 = vpop.f32.mrb[0].mxu0
      %2702 = vmatprep.mubr.bf16.mxu0 0
      %2703 = vmatmul.mubr.bf16.gmra.mrb[0].mxu0 %v2649
      %v2704 = vpop.f32.mrb[0].mxu0
      %v2705 = vadd.f32 0.0, %v2704
      %v2706 = vpop.f32.mrb[0].mxu0
      %v2707 = vpop.f32.mrb[0].mxu0
      %v2708 = vadd.f32 0.0, %v2707
      %v2709 = vpop.f32.mrb[0].mxu0
      %2710 = vmatprep.mubr.bf16.mxu0 0
      %2711 = vmatmul.mubr.bf16.gmra.mrb[0].mxu0 %v2652
      %v2712 = vpop.f32.mrb[0].mxu0
      %v2713 = vadd.f32 0.0, %v2712
      %v2714 = vpop.f32.mrb[0].mxu0
      %v2715 = vpop.f32.mrb[0].mxu0
      %v2716 = vadd.f32 0.0, %v2715
      %v2717 = vpop.f32.mrb[0].mxu0
      %2718 = vdwg.mxu0
      %v2719 = vunpack.c.l.bf16 %v1469
      %v2720 = vunpack.c.h.bf16 %v1469
      %v2721 = vunpack.c.l.bf16 %v1470
      %v2722 = vunpack.c.h.bf16 %v1470
      %v2723 = vunpack.c.l.bf16 %v1471
      %v2724 = vunpack.c.h.bf16 %v1471
      %v2725 = vunpack.c.l.bf16 %v1472
      %v2726 = vunpack.c.h.bf16 %v1472
      %v2727 = vadd.f32 %v2719, %v2689
      %v2728 = vadd.f32 %v2720, %v2692
      %v2729 = vadd.f32 %v2721, %v2697
      %v2730 = vadd.f32 %v2722, %v2700
      %v2731 = vadd.f32 %v2723, %v2705
      %v2732 = vadd.f32 %v2724, %v2708
      %v2733 = vadd.f32 %v2725, %v2713
      %v2734 = vadd.f32 %v2726, %v2716
      %v2735 = vpack.c.bf16 %v2728, %v2727
      %v2736 = vpack.c.bf16 %v2730, %v2729
      %v2737 = vpack.c.bf16 %v2732, %v2731
      %v2738 = vpack.c.bf16 %v2734, %v2733
      %v2739 = vld [vmem:[%s5] sm:$0xf]
      %v2740 = vld [vmem:[%s5 + $0x4] sm:$0xf]
      %v2743 = vunpack.c.l.b16 %v2739
      %v2744 = vunpack.c.l.b16 %v2740
      %v2745 = vpack.c.b16 %v2744, %v2743
      %v2747 = vsel %vm632, %v2745, 0
      %2749 = vmatprep.subr.bf16.mxu0 0
      %2750 = vmatpush1.bf16.msra.mxu0 %v2735
      %2751 = vmatprep.subr.bf16.mxu0 0
      %2752 = vmatpush1.bf16.msra.mxu0 %v2736
      %2753 = vmatprep.subr.bf16.mxu0 0
      %2754 = vmatpush1.bf16.msra.mxu0 %v2737
      %2755 = vmatprep.subr.bf16.mxu0 0
      %2756 = vmatpush1.bf16.msra.mxu0 %v2738
      %2757 = vmatprep.subr.bf16.mxu0 0
      %2758 = vmatpush1.bf16.msra.mxu0 0
      %2759 = vmatprep.subr.bf16.mxu0 0
      %2760 = vmatpush1.bf16.msra.mxu0 0
      %2761 = vmatprep.subr.bf16.mxu0 0
      %2762 = vmatpush1.bf16.msra.mxu0 0
      %2763 = vmatprep.subr.bf16.mxu0 0
      %2764 = vmatpush1.bf16.msra.mxu0 0
      %2765 = vmatprep.subr.bf16.mxu0 0
      %2766 = vmatpush1.bf16.msra.mxu0 0
      %2767 = vmatprep.subr.bf16.mxu0 0
      %2768 = vmatpush1.bf16.msra.mxu0 0
      %2769 = vmatprep.subr.bf16.mxu0 0
      %2770 = vmatpush1.bf16.msra.mxu0 0
      %2771 = vmatprep.subr.bf16.mxu0 0
      %2772 = vmatpush1.bf16.msra.mxu0 0
      %2773 = vmatprep.subr.bf16.mxu0 0
      %2774 = vmatpush1.bf16.msra.mxu0 0
      %2775 = vmatprep.subr.bf16.mxu0 0
      %2776 = vmatpush1.bf16.msra.mxu0 0
      %2777 = vmatprep.subr.bf16.mxu0 0
      %2778 = vmatpush1.bf16.msra.mxu0 0
      %2779 = vmatprep.subr.bf16.mxu0 0
      %2780 = vmatpush1.bf16.msra.mxu0 0
      %2781 = vmatprep.mubr.bf16.mxu0 0
      %2782 = vmatmul.mubr.bf16.gmra.mrb[0].mxu0 %v2747
      %v2783 = vpop.f32.mrb[0].mxu0
      %v2784 = vadd.f32 0.0, %v2783
      %v2785 = vpop.f32.mrb[0].mxu0
      %v2786 = vpop.f32.mrb[0].mxu0
      %v2787 = vadd.f32 0.0, %v2786
      %v2788 = vpop.f32.mrb[0].mxu0
      %2789 = vdwg.mxu0
      %v2790 = vld [vmem:[%s2 + $0x28] sm:$0x1]
      %v2791 = vlaneseq
      %v2792 = vshrl.u32 %v2791, 7
      %v2793 = vsub.s32 0, %v2792
      %v2794 = vrot.slane %v2790, %v2793
      %v2795 = vmul.f32 %v2784, %v2794
      %v2796 = vmul.f32 %v2787, %v2794
      %v2797 = vpack.c.bf16 %v2796, %v2795
      %v2798 = vld [vmem:[%s1 + $0x198] sm:$0xf]
      %v2799 = vld [vmem:[%s1 + $0x19c] sm:$0xf]
      %v2800 = vld [vmem:[%s1 + $0x1a0] sm:$0xf]
      %v2801 = vld [vmem:[%s1 + $0x1a4] sm:$0xf]
      %v2802 = vld [vmem:[%s2 + $0x20] sm:$0x1]
      %v2803 = vlaneseq
      %v2804 = vshrl.u32 %v2803, 7
      %v2805 = vsub.s32 0, %v2804
      %v2806 = vrot.slane %v2802, %v2805
      %v2811 = vunpack.c.l.b16 %v2798
      %v2812 = vunpack.c.l.b16 %v2799
      %v2813 = vunpack.c.l.b16 %v2800
      %v2814 = vunpack.c.l.b16 %v2801
      %v2815 = vpack.c.b16 %v2812, %v2811
      %v2816 = vpack.c.b16 %v2814, %v2813
      %v2820 = vsel %vm398, %v2797, 0
      %2822 = vmatprep.subr.bf16.mxu0 0
      %2823 = vmatpush1.bf16.msra.mxu0 %v2815
      %2824 = vmatprep.subr.bf16.mxu0 0
      %2825 = vmatpush1.bf16.msra.mxu0 %v2816
      %2826 = vmatprep.subr.bf16.mxu0 0
      %2827 = vmatpush1.bf16.msra.mxu0 0
      %2828 = vmatprep.subr.bf16.mxu0 0
      %2829 = vmatpush1.bf16.msra.mxu0 0
      %2830 = vmatprep.subr.bf16.mxu0 0
      %2831 = vmatpush1.bf16.msra.mxu0 0
      %2832 = vmatprep.subr.bf16.mxu0 0
      %2833 = vmatpush1.bf16.msra.mxu0 0
      %2834 = vmatprep.subr.bf16.mxu0 0
      %2835 = vmatpush1.bf16.msra.mxu0 0
      %2836 = vmatprep.subr.bf16.mxu0 0
      %2837 = vmatpush1.bf16.msra.mxu0 0
      %2838 = vmatprep.subr.bf16.mxu0 0
      %2839 = vmatpush1.bf16.msra.mxu0 0
      %2840 = vmatprep.subr.bf16.mxu0 0
      %2841 = vmatpush1.bf16.msra.mxu0 0
      %2842 = vmatprep.subr.bf16.mxu0 0
      %2843 = vmatpush1.bf16.msra.mxu0 0
      %2844 = vmatprep.subr.bf16.mxu0 0
      %2845 = vmatpush1.bf16.msra.mxu0 0
      %2846 = vmatprep.subr.bf16.mxu0 0
      %2847 = vmatpush1.bf16.msra.mxu0 0
      %2848 = vmatprep.subr.bf16.mxu0 0
      %2849 = vmatpush1.bf16.msra.mxu0 0
      %2850 = vmatprep.subr.bf16.mxu0 0
      %2851 = vmatpush1.bf16.msra.mxu0 0
      %2852 = vmatprep.subr.bf16.mxu0 0
      %2853 = vmatpush1.bf16.msra.mxu0 0
      %2854 = vmatprep.mubr.bf16.mxu0 0
      %2855 = vmatmul.mubr.bf16.gmra.mrb[0].mxu0 %v2820
      %v2856 = vpop.f32.mrb[0].mxu0
      %v2857 = vadd.f32 %v2806, %v2856
      %v2858 = vpop.f32.mrb[0].mxu0
      %v2859 = vpop.f32.mrb[0].mxu0
      %v2860 = vadd.f32 %v2806, %v2859
      %v2861 = vpop.f32.mrb[0].mxu0
      %2862 = vdwg.mxu0
      %vm2863 = vcmp.ge.f32.partialorder %v2857, 0.0
      %vm2864 = vcmp.ge.f32.partialorder %v2860, 0.0
      %v2865 = vmul.f32 %v2857, 0.2
      %v2866 = vmul.f32 %v2860, 0.2
      %v2867 = vsel %vm2863, %v2857, %v2865
      %v2868 = vsel %vm2864, %v2860, %v2866
      %v2869 = vrot.slane %v2867, 3
      %v2870 = vrot.slane %v2868, 3
      %vm2871 = vcmp.lt.s32.totalorder %v509, 5
      %v2872 = vsel %vm2871, %v2869, %v2870
      %v2873 = vsel %vm2871, %v2870, %v2869
      %v2874 = vrot.slane %v2867, 4
      %v2875 = vrot.slane %v2868, 4
      %vm2876 = vcmp.lt.s32.totalorder %v509, 4
      %v2877 = vsel %vm2876, %v2874, %v2875
      %v2878 = vsel %vm2876, %v2875, %v2874
      %v2879 = vrot.slane %v2867, 5
      %v2880 = vrot.slane %v2868, 5
      %vm2881 = vcmp.lt.s32.totalorder %v509, 3
      %v2882 = vsel %vm2881, %v2879, %v2880
      %v2883 = vsel %vm2881, %v2880, %v2879
      %v2884 = vrot.slane %v2867, 7
      %v2885 = vrot.slane %v2868, 7
      %v2886 = vsel %vm510, %v2884, %v2885
      %v2887 = vsel %vm510, %v2885, %v2884
      %v2888 = vrot.slane %v2867, 1
      %v2889 = vrot.slane %v2868, 1
      %v2890 = vsel %vm527, %v2888, %v2889
      %v2891 = vsel %vm527, %v2889, %v2888
      %2894 = vrot.lane.b32.xlu0 %v2878, 64
      %v2895 = vpop.permute.xlu0 %2894
      %2896 = vrot.lane.b32.xlu0 %v2877, 64
      %v2897 = vpop.permute.xlu0 %2896
      %2902 = vrot.lane.b32.xlu0 %v2887, 64
      %v2903 = vpop.permute.xlu0 %2902
      %2904 = vrot.lane.b32.xlu0 %v2886, 64
      %v2905 = vpop.permute.xlu0 %2904
      %2910 = vrot.lane.b32.xlu0 %v2890, 64
      %v2911 = vpop.permute.xlu0 %2910
      %2912 = vrot.lane.b32.xlu0 %v2891, 64
      %v2913 = vpop.permute.xlu0 %2912
      %v2916 = vsel %vm632, %v2873, %v2895
      %v2917 = vsel %vm632, %v2872, %v2897
      %v2918 = vsel %vm632, %v2883, %v2903
      %v2919 = vsel %vm632, %v2882, %v2905
      %v2920 = vsel %vm632, %v2867, %v2911
      %v2921 = vsel %vm632, %v2868, %v2913
      %v2922 = vpack.c.bf16 %v2917, %v2916
      %v2923 = vpack.c.bf16 %v2919, %v2918
      %v2924 = vpack.c.bf16 %v2921, %v2920
      %v2925 = vpack.c.bf16 %v2916, %v2917
      %v2926 = vpack.c.bf16 %v2883, %v2882
      %v2927 = vld [vmem:[%s4] sm:$0xff]
      %v2928 = vld [vmem:[%s4 + $0x8] sm:$0xff]
      %v2929 = vld [vmem:[%s4 + $0x10] sm:$0xf]
      %v2930 = vld [vmem:[%s4 + $0x14] sm:$0xff]
      %v2931 = vld [vmem:[%s4 + $0x1c] sm:$0xff]
      %v2932 = vld [vmem:[%s4 + $0x24] sm:$0xf]
      %v2939 = vunpack.c.l.b16 %v2927
      %v2940 = vunpack.c.h.b16 %v2927
      %v2941 = vunpack.c.l.b16 %v2928
      %v2942 = vunpack.c.h.b16 %v2928
      %v2943 = vunpack.c.l.b16 %v2929
      %v2944 = vunpack.c.l.b16 %v2930
      %v2945 = vunpack.c.h.b16 %v2930
      %v2946 = vunpack.c.l.b16 %v2931
      %v2947 = vunpack.c.h.b16 %v2931
      %v2948 = vunpack.c.l.b16 %v2932
      %v2949 = vpack.c.b16 %v2944, %v2939
      %v2950 = vpack.c.b16 %v2945, %v2940
      %v2951 = vpack.c.b16 %v2946, %v2941
      %v2952 = vpack.c.b16 %v2947, %v2942
      %v2953 = vpack.c.b16 %v2948, %v2943
      %v2959 = vmul.bf16 %v2922, %v2949
      %v2960 = vmul.bf16 %v2923, %v2950
      %v2961 = vmul.bf16 %v2924, %v2951
      %v2962 = vmul.bf16 %v2925, %v2952
      %v2963 = vmul.bf16 %v2926, %v2953
      %v2964 = vld [vmem:[%s1 + $0x1a8] sm:$0xf]
      %v2965 = vld [vmem:[%s1 + $0x1ac] sm:$0xf]
      %v2966 = vld [vmem:[%s1 + $0x1b0] sm:$0xf]
      %v2967 = vld [vmem:[%s1 + $0x1b4] sm:$0xf]
      %v2968 = vld [vmem:[%s1 + $0x1b8] sm:$0xf]
      %v2969 = vld [vmem:[%s1 + $0x1bc] sm:$0xf]
      %v2970 = vld [vmem:[%s1 + $0x1c0] sm:$0xf]
      %v2971 = vld [vmem:[%s1 + $0x1c4] sm:$0xf]
      %v2972 = vld [vmem:[%s1 + $0x1c8] sm:$0xf]
      %v2973 = vld [vmem:[%s1 + $0x1cc] sm:$0xf]
      %v2974 = vld [vmem:[%s1 + $0x1d0] sm:$0xf]
      %v2975 = vld [vmem:[%s1 + $0x1d4] sm:$0xf]
      %v2976 = vld [vmem:[%s1 + $0x1d8] sm:$0xf]
      %v2977 = vld [vmem:[%s1 + $0x1dc] sm:$0xf]
      %v2978 = vld [vmem:[%s1 + $0x1e0] sm:$0xf]
      %v2979 = vld [vmem:[%s1 + $0x1e4] sm:$0xf]
      %v2980 = vld [vmem:[%s1 + $0x1e8] sm:$0xf]
      %v2981 = vld [vmem:[%s1 + $0x1ec] sm:$0xf]
      %v2982 = vld [vmem:[%s1 + $0x1f0] sm:$0xf]
      %v2983 = vld [vmem:[%s1 + $0x1f4] sm:$0xf]
      %v2984 = vld [vmem:[%s1 + $0x1f8] sm:$0xf]
      %v2985 = vld [vmem:[%s1 + $0x1fc] sm:$0xf]
      %v2986 = vld [vmem:[%s1 + $0x200] sm:$0xf]
      %v2987 = vld [vmem:[%s1 + $0x204] sm:$0xf]
      %v2988 = vld [vmem:[%s1 + $0x208] sm:$0xf]
      %v2989 = vld [vmem:[%s1 + $0x20c] sm:$0xf]
      %v2990 = vld [vmem:[%s1 + $0x210] sm:$0xf]
      %v2991 = vld [vmem:[%s1 + $0x214] sm:$0xf]
      %v2992 = vld [vmem:[%s1 + $0x218] sm:$0xf]
      %v2993 = vld [vmem:[%s1 + $0x21c] sm:$0xf]
      %v2994 = vld [vmem:[%s1 + $0x220] sm:$0xf]
      %v2995 = vld [vmem:[%s1 + $0x224] sm:$0xf]
      %v2996 = vld [vmem:[%s1 + $0x228] sm:$0xf]
      %v2997 = vld [vmem:[%s1 + $0x22c] sm:$0xf]
      %v2998 = vld [vmem:[%s1 + $0x230] sm:$0xf]
      %v2999 = vld [vmem:[%s1 + $0x234] sm:$0xf]
      %v3000 = vld [vmem:[%s1 + $0x238] sm:$0xf]
      %v3001 = vld [vmem:[%s1 + $0x23c] sm:$0xf]
      %v3002 = vld [vmem:[%s1 + $0x240] sm:$0xf]
      %v3003 = vld [vmem:[%s1 + $0x244] sm:$0xf]
      %v3004 = vld [vmem:[%s1 + $0x248] sm:$0xf]
      %v3005 = vld [vmem:[%s1 + $0x24c] sm:$0xf]
      %v3006 = vld [vmem:[%s1 + $0x250] sm:$0xf]
      %v3007 = vld [vmem:[%s1 + $0x254] sm:$0xf]
      %v3008 = vld [vmem:[%s1 + $0x258] sm:$0xf]
      %v3009 = vld [vmem:[%s1 + $0x25c] sm:$0xf]
      %v3010 = vld [vmem:[%s1 + $0x260] sm:$0xf]
      %v3011 = vld [vmem:[%s1 + $0x264] sm:$0xf]
      %v3012 = vld [vmem:[%s1 + $0x268] sm:$0xf]
      %v3013 = vld [vmem:[%s1 + $0x26c] sm:$0xf]
      %v3014 = vld [vmem:[%s1 + $0x270] sm:$0xf]
      %v3015 = vld [vmem:[%s1 + $0x274] sm:$0xf]
      %v3016 = vld [vmem:[%s1 + $0x278] sm:$0xf]
      %v3017 = vld [vmem:[%s1 + $0x27c] sm:$0xf]
      %v3018 = vld [vmem:[%s1 + $0x280] sm:$0xf]
      %v3019 = vld [vmem:[%s1 + $0x284] sm:$0xf]
      %v3020 = vld [vmem:[%s1 + $0x288] sm:$0xf]
      %v3021 = vld [vmem:[%s1 + $0x28c] sm:$0xf]
      %v3022 = vld [vmem:[%s1 + $0x290] sm:$0xf]
      %v3023 = vld [vmem:[%s1 + $0x294] sm:$0xf]
      %v3024 = vld [vmem:[%s1 + $0x298] sm:$0xf]
      %v3025 = vld [vmem:[%s1 + $0x29c] sm:$0xf]
      %v3026 = vld [vmem:[%s1 + $0x2a0] sm:$0xf]
      %v3027 = vld [vmem:[%s1 + $0x2a4] sm:$0xf]
      %v3028 = vld [vmem:[%s1 + $0x2a8] sm:$0xf]
      %v3029 = vld [vmem:[%s1 + $0x2ac] sm:$0xf]
      %v3030 = vld [vmem:[%s1 + $0x2b0] sm:$0xf]
      %v3031 = vld [vmem:[%s1 + $0x2b4] sm:$0xf]
      %v3032 = vld [vmem:[%s1 + $0x2b8] sm:$0xf]
      %v3033 = vld [vmem:[%s1 + $0x2bc] sm:$0xf]
      %v3034 = vld [vmem:[%s1 + $0x2c0] sm:$0xf]
      %v3035 = vld [vmem:[%s1 + $0x2c4] sm:$0xf]
      %v3108 = vunpack.c.l.b16 %v2964
      %v3109 = vunpack.c.l.b16 %v2965
      %v3110 = vunpack.c.l.b16 %v2966
      %v3111 = vunpack.c.l.b16 %v2967
      %v3112 = vunpack.c.l.b16 %v2968
      %v3113 = vunpack.c.l.b16 %v2969
      %v3114 = vunpack.c.l.b16 %v2970
      %v3115 = vunpack.c.l.b16 %v2971
      %v3116 = vunpack.c.l.b16 %v2972
      %v3117 = vunpack.c.l.b16 %v2973
      %v3118 = vunpack.c.l.b16 %v2974
      %v3119 = vunpack.c.l.b16 %v2975
      %v3120 = vunpack.c.l.b16 %v2976
      %v3121 = vunpack.c.l.b16 %v2977
      %v3122 = vunpack.c.l.b16 %v2978
      %v3123 = vunpack.c.l.b16 %v2979
      %v3124 = vunpack.c.l.b16 %v2980
      %v3125 = vunpack.c.l.b16 %v2981
      %v3126 = vunpack.c.l.b16 %v2982
      %v3127 = vunpack.c.l.b16 %v2983
      %v3128 = vunpack.c.l.b16 %v2984
      %v3129 = vunpack.c.l.b16 %v2985
      %v3130 = vunpack.c.l.b16 %v2986
      %v3131 = vunpack.c.l.b16 %v2987
      %v3132 = vunpack.c.l.b16 %v2988
      %v3133 = vunpack.c.l.b16 %v2989
      %v3134 = vunpack.c.l.b16 %v2990
      %v3135 = vunpack.c.l.b16 %v2991
      %v3136 = vunpack.c.l.b16 %v2992
      %v3137 = vunpack.c.l.b16 %v2993
      %v3138 = vunpack.c.l.b16 %v2994
      %v3139 = vunpack.c.l.b16 %v2995
      %v3140 = vunpack.c.l.b16 %v2996
      %v3141 = vunpack.c.l.b16 %v2997
      %v3142 = vunpack.c.l.b16 %v2998
      %v3143 = vunpack.c.l.b16 %v2999
      %v3144 = vunpack.c.l.b16 %v3000
      %v3145 = vunpack.c.l.b16 %v3001
      %v3146 = vunpack.c.l.b16 %v3002
      %v3147 = vunpack.c.l.b16 %v3003
      %v3148 = vunpack.c.l.b16 %v3004
      %v3149 = vunpack.c.l.b16 %v3005
      %v3150 = vunpack.c.l.b16 %v3006
      %v3151 = vunpack.c.l.b16 %v3007
      %v3152 = vunpack.c.l.b16 %v3008
      %v3153 = vunpack.c.l.b16 %v3009
      %v3154 = vunpack.c.l.b16 %v3010
      %v3155 = vunpack.c.l.b16 %v3011
      %v3156 = vunpack.c.l.b16 %v3012
      %v3157 = vunpack.c.l.b16 %v3013
      %v3158 = vunpack.c.l.b16 %v3014
      %v3159 = vunpack.c.l.b16 %v3015
      %v3160 = vunpack.c.l.b16 %v3016
      %v3161 = vunpack.c.l.b16 %v3017
      %v3162 = vunpack.c.l.b16 %v3018
      %v3163 = vunpack.c.l.b16 %v3019
      %v3164 = vunpack.c.l.b16 %v3020
      %v3165 = vunpack.c.l.b16 %v3021
      %v3166 = vunpack.c.l.b16 %v3022
      %v3167 = vunpack.c.l.b16 %v3023
      %v3168 = vunpack.c.l.b16 %v3024
      %v3169 = vunpack.c.l.b16 %v3025
      %v3170 = vunpack.c.l.b16 %v3026
      %v3171 = vunpack.c.l.b16 %v3027
      %v3172 = vunpack.c.l.b16 %v3028
      %v3173 = vunpack.c.l.b16 %v3029
      %v3174 = vunpack.c.l.b16 %v3030
      %v3175 = vunpack.c.l.b16 %v3031
      %v3176 = vunpack.c.l.b16 %v3032
      %v3177 = vunpack.c.l.b16 %v3033
      %v3178 = vunpack.c.l.b16 %v3034
      %v3179 = vunpack.c.l.b16 %v3035
      %v3180 = vpack.c.b16 %v3109, %v3108
      %v3181 = vpack.c.b16 %v3111, %v3110
      %v3182 = vpack.c.b16 %v3113, %v3112
      %v3183 = vpack.c.b16 %v3115, %v3114
      %v3184 = vpack.c.b16 %v3117, %v3116
      %v3185 = vpack.c.b16 %v3119, %v3118
      %v3186 = vpack.c.b16 %v3121, %v3120
      %v3187 = vpack.c.b16 %v3123, %v3122
      %v3188 = vpack.c.b16 %v3125, %v3124
      %v3189 = vpack.c.b16 %v3127, %v3126
      %v3190 = vpack.c.b16 %v3129, %v3128
      %v3191 = vpack.c.b16 %v3131, %v3130
      %v3192 = vpack.c.b16 %v3133, %v3132
      %v3193 = vpack.c.b16 %v3135, %v3134
      %v3194 = vpack.c.b16 %v3137, %v3136
      %v3195 = vpack.c.b16 %v3139, %v3138
      %v3196 = vpack.c.b16 %v3141, %v3140
      %v3197 = vpack.c.b16 %v3143, %v3142
      %v3198 = vpack.c.b16 %v3145, %v3144
      %v3199 = vpack.c.b16 %v3147, %v3146
      %v3200 = vpack.c.b16 %v3149, %v3148
      %v3201 = vpack.c.b16 %v3151, %v3150
      %v3202 = vpack.c.b16 %v3153, %v3152
      %v3203 = vpack.c.b16 %v3155, %v3154
      %v3204 = vpack.c.b16 %v3157, %v3156
      %v3205 = vpack.c.b16 %v3159, %v3158
      %v3206 = vpack.c.b16 %v3161, %v3160
      %v3207 = vpack.c.b16 %v3163, %v3162
      %v3208 = vpack.c.b16 %v3165, %v3164
      %v3209 = vpack.c.b16 %v3167, %v3166
      %v3210 = vpack.c.b16 %v3169, %v3168
      %v3211 = vpack.c.b16 %v3171, %v3170
      %v3212 = vpack.c.b16 %v3173, %v3172
      %v3213 = vpack.c.b16 %v3175, %v3174
      %v3214 = vpack.c.b16 %v3177, %v3176
      %v3215 = vpack.c.b16 %v3179, %v3178
      %v3253 = vsel %vm632, %v2963, 0
      %3255 = vmatprep.subr.bf16.mxu0 0
      %3256 = vmatpush1.bf16.msra.mxu0 %v3180
      %3257 = vmatprep.subr.bf16.mxu0 0
      %3258 = vmatpush1.bf16.msra.mxu0 %v3181
      %3259 = vmatprep.subr.bf16.mxu0 0
      %3260 = vmatpush1.bf16.msra.mxu0 %v3182
      %3261 = vmatprep.subr.bf16.mxu0 0
      %3262 = vmatpush1.bf16.msra.mxu0 %v3183
      %3263 = vmatprep.subr.bf16.mxu0 0
      %3264 = vmatpush1.bf16.msra.mxu0 %v3184
      %3265 = vmatprep.subr.bf16.mxu0 0
      %3266 = vmatpush1.bf16.msra.mxu0 %v3185
      %3267 = vmatprep.subr.bf16.mxu0 0
      %3268 = vmatpush1.bf16.msra.mxu0 %v3186
      %3269 = vmatprep.subr.bf16.mxu0 0
      %3270 = vmatpush1.bf16.msra.mxu0 %v3187
      %3271 = vmatprep.subr.bf16.mxu0 0
      %3272 = vmatpush1.bf16.msra.mxu0 %v3188
      %3273 = vmatprep.subr.bf16.mxu0 0
      %3274 = vmatpush1.bf16.msra.mxu0 %v3189
      %3275 = vmatprep.subr.bf16.mxu0 0
      %3276 = vmatpush1.bf16.msra.mxu0 %v3190
      %3277 = vmatprep.subr.bf16.mxu0 0
      %3278 = vmatpush1.bf16.msra.mxu0 %v3191
      %3279 = vmatprep.subr.bf16.mxu0 0
      %3280 = vmatpush1.bf16.msra.mxu0 %v3192
      %3281 = vmatprep.subr.bf16.mxu0 0
      %3282 = vmatpush1.bf16.msra.mxu0 %v3193
      %3283 = vmatprep.subr.bf16.mxu0 0
      %3284 = vmatpush1.bf16.msra.mxu0 %v3194
      %3285 = vmatprep.subr.bf16.mxu0 0
      %3286 = vmatpush1.bf16.msra.mxu0 %v3195
      %3287 = vmatprep.mubr.bf16.mxu0 %v2960
      %3288 = vmatmul.mubr.bf16.gmra.mrb[0].mxu0 %v2959
      %v3289 = vpop.f32.mrb[0].mxu0
      %v3290 = vadd.f32 0.0, %v3289
      %v3291 = vpop.f32.mrb[0].mxu0
      %v3292 = vpop.f32.mrb[0].mxu0
      %v3293 = vadd.f32 0.0, %v3292
      %v3294 = vpop.f32.mrb[0].mxu0
      %3295 = vdwg.mxu0
      %3296 = vmatprep.subr.bf16.mxu0 0
      %3297 = vmatpush1.bf16.msra.mxu0 %v3196
      %3298 = vmatprep.subr.bf16.mxu0 0
      %3299 = vmatpush1.bf16.msra.mxu0 %v3197
      %3300 = vmatprep.subr.bf16.mxu0 0
      %3301 = vmatpush1.bf16.msra.mxu0 %v3198
      %3302 = vmatprep.subr.bf16.mxu0 0
      %3303 = vmatpush1.bf16.msra.mxu0 %v3199
      %3304 = vmatprep.subr.bf16.mxu0 0
      %3305 = vmatpush1.bf16.msra.mxu0 %v3200
      %3306 = vmatprep.subr.bf16.mxu0 0
      %3307 = vmatpush1.bf16.msra.mxu0 %v3201
      %3308 = vmatprep.subr.bf16.mxu0 0
      %3309 = vmatpush1.bf16.msra.mxu0 %v3202
      %3310 = vmatprep.subr.bf16.mxu0 0
      %3311 = vmatpush1.bf16.msra.mxu0 %v3203
      %3312 = vmatprep.subr.bf16.mxu0 0
      %3313 = vmatpush1.bf16.msra.mxu0 %v3204
      %3314 = vmatprep.subr.bf16.mxu0 0
      %3315 = vmatpush1.bf16.msra.mxu0 %v3205
      %3316 = vmatprep.subr.bf16.mxu0 0
      %3317 = vmatpush1.bf16.msra.mxu0 %v3206
      %3318 = vmatprep.subr.bf16.mxu0 0
      %3319 = vmatpush1.bf16.msra.mxu0 %v3207
      %3320 = vmatprep.subr.bf16.mxu0 0
      %3321 = vmatpush1.bf16.msra.mxu0 %v3208
      %3322 = vmatprep.subr.bf16.mxu0 0
      %3323 = vmatpush1.bf16.msra.mxu0 %v3209
      %3324 = vmatprep.subr.bf16.mxu0 0
      %3325 = vmatpush1.bf16.msra.mxu0 %v3210
      %3326 = vmatprep.subr.bf16.mxu0 0
      %3327 = vmatpush1.bf16.msra.mxu0 %v3211
      %3328 = vmatprep.mubr.bf16.mxu0 %v2962
      %3329 = vmatmul.mubr.bf16.gmra.mrb[0].mxu0 %v2961
      %v3330 = vpop.f32.mrb[0].mxu0
      %v3331 = vadd.f32 %v3290, %v3330
      %v3332 = vpop.f32.mrb[0].mxu0
      %v3333 = vpop.f32.mrb[0].mxu0
      %v3334 = vadd.f32 %v3293, %v3333
      %v3335 = vpop.f32.mrb[0].mxu0
      %3336 = vdwg.mxu0
      %3337 = vmatprep.subr.bf16.mxu0 0
      %3338 = vmatpush1.bf16.msra.mxu0 %v3212
      %3339 = vmatprep.subr.bf16.mxu0 0
      %3340 = vmatpush1.bf16.msra.mxu0 %v3213
      %3341 = vmatprep.subr.bf16.mxu0 0
      %3342 = vmatpush1.bf16.msra.mxu0 %v3214
      %3343 = vmatprep.subr.bf16.mxu0 0
      %3344 = vmatpush1.bf16.msra.mxu0 %v3215
      %3345 = vmatprep.subr.bf16.mxu0 0
      %3346 = vmatpush1.bf16.msra.mxu0 0
      %3347 = vmatprep.subr.bf16.mxu0 0
      %3348 = vmatpush1.bf16.msra.mxu0 0
      %3349 = vmatprep.subr.bf16.mxu0 0
      %3350 = vmatpush1.bf16.msra.mxu0 0
      %3351 = vmatprep.subr.bf16.mxu0 0
      %3352 = vmatpush1.bf16.msra.mxu0 0
      %3353 = vmatprep.subr.bf16.mxu0 0
      %3354 = vmatpush1.bf16.msra.mxu0 0
      %3355 = vmatprep.subr.bf16.mxu0 0
      %3356 = vmatpush1.bf16.msra.mxu0 0
      %3357 = vmatprep.subr.bf16.mxu0 0
      %3358 = vmatpush1.bf16.msra.mxu0 0
      %3359 = vmatprep.subr.bf16.mxu0 0
      %3360 = vmatpush1.bf16.msra.mxu0 0
      %3361 = vmatprep.subr.bf16.mxu0 0
      %3362 = vmatpush1.bf16.msra.mxu0 0
      %3363 = vmatprep.subr.bf16.mxu0 0
      %3364 = vmatpush1.bf16.msra.mxu0 0
      %3365 = vmatprep.subr.bf16.mxu0 0
      %3366 = vmatpush1.bf16.msra.mxu0 0
      %3367 = vmatprep.subr.bf16.mxu0 0
      %3368 = vmatpush1.bf16.msra.mxu0 0
      %3369 = vmatprep.mubr.bf16.mxu0 0
      %3370 = vmatmul.mubr.bf16.gmra.mrb[0].mxu0 %v3253
      %v3371 = vpop.f32.mrb[0].mxu0
      %v3372 = vadd.f32 %v3331, %v3371
      %v3373 = vpop.f32.mrb[0].mxu0
      %v3374 = vpop.f32.mrb[0].mxu0
      %v3375 = vadd.f32 %v3334, %v3374
      %v3376 = vpop.f32.mrb[0].mxu0
      %3377 = vdwg.mxu0
      %vm3378 = vcmp.ge.f32.partialorder %v3372, 0.0
      %vm3379 = vcmp.ge.f32.partialorder %v3375, 0.0
      %v3380 = vmul.f32 %v3372, 0.2
      %v3381 = vmul.f32 %v3375, 0.2
      %v3382 = vsel %vm3378, %v3372, %v3380
      %v3383 = vsel %vm3379, %v3375, %v3381
      %v3384 = vld [vmem:[%s1 + $0x2c8] sm:$0xf]
      %v3385 = vld [vmem:[%s1 + $0x2cc] sm:$0xf]
      %v3386 = vld [vmem:[%s1 + $0x2d0] sm:$0xf]
      %v3387 = vld [vmem:[%s1 + $0x2d4] sm:$0xf]
      %v3388 = vld [vmem:[%s1 + $0x2d8] sm:$0xf]
      %v3389 = vld [vmem:[%s1 + $0x2dc] sm:$0xf]
      %v3390 = vld [vmem:[%s1 + $0x2e0] sm:$0xf]
      %v3391 = vld [vmem:[%s1 + $0x2e4] sm:$0xf]
      %v3392 = vpack.c.bf16 %v3383, %v3382
      %v3401 = vunpack.c.l.b16 %v3384
      %v3402 = vunpack.c.l.b16 %v3385
      %v3403 = vunpack.c.l.b16 %v3386
      %v3404 = vunpack.c.l.b16 %v3387
      %v3405 = vunpack.c.l.b16 %v3388
      %v3406 = vunpack.c.l.b16 %v3389
      %v3407 = vunpack.c.l.b16 %v3390
      %v3408 = vunpack.c.l.b16 %v3391
      %v3409 = vpack.c.b16 %v3402, %v3401
      %v3410 = vpack.c.b16 %v3404, %v3403
      %v3411 = vpack.c.b16 %v3406, %v3405
      %v3412 = vpack.c.b16 %v3408, %v3407
      %v3418 = vsel %vm632, %v3392, 0
      %3420 = vmatprep.subr.bf16.mxu0 0
      %3421 = vmatpush1.bf16.msra.mxu0 %v3409
      %3422 = vmatprep.subr.bf16.mxu0 0
      %3423 = vmatpush1.bf16.msra.mxu0 %v3410
      %3424 = vmatprep.subr.bf16.mxu0 0
      %3425 = vmatpush1.bf16.msra.mxu0 %v3411
      %3426 = vmatprep.subr.bf16.mxu0 0
      %3427 = vmatpush1.bf16.msra.mxu0 %v3412
      %3428 = vmatprep.subr.bf16.mxu0 0
      %3429 = vmatpush1.bf16.msra.mxu0 0
      %3430 = vmatprep.subr.bf16.mxu0 0
      %3431 = vmatpush1.bf16.msra.mxu0 0
      %3432 = vmatprep.subr.bf16.mxu0 0
      %3433 = vmatpush1.bf16.msra.mxu0 0
      %3434 = vmatprep.subr.bf16.mxu0 0
      %3435 = vmatpush1.bf16.msra.mxu0 0
      %3436 = vmatprep.subr.bf16.mxu0 0
      %3437 = vmatpush1.bf16.msra.mxu0 0
      %3438 = vmatprep.subr.bf16.mxu0 0
      %3439 = vmatpush1.bf16.msra.mxu0 0
      %3440 = vmatprep.subr.bf16.mxu0 0
      %3441 = vmatpush1.bf16.msra.mxu0 0
      %3442 = vmatprep.subr.bf16.mxu0 0
      %3443 = vmatpush1.bf16.msra.mxu0 0
      %3444 = vmatprep.subr.bf16.mxu0 0
      %3445 = vmatpush1.bf16.msra.mxu0 0
      %3446 = vmatprep.subr.bf16.mxu0 0
      %3447 = vmatpush1.bf16.msra.mxu0 0
      %3448 = vmatprep.subr.bf16.mxu0 0
      %3449 = vmatpush1.bf16.msra.mxu0 0
      %3450 = vmatprep.subr.bf16.mxu0 0
      %3451 = vmatpush1.bf16.msra.mxu0 0
      %3452 = vmatprep.mubr.bf16.mxu0 0
      %3453 = vmatmul.mubr.bf16.gmra.mrb[0].mxu0 %v3418
      %v3454 = vpop.f32.mrb[0].mxu0
      %v3455 = vadd.f32 0.0, %v3454
      %v3456 = vpop.f32.mrb[0].mxu0
      %v3457 = vpop.f32.mrb[0].mxu0
      %v3458 = vadd.f32 0.0, %v3457
      %v3459 = vpop.f32.mrb[0].mxu0
      %3460 = vdwg.mxu0
      %v3461 = vunpack.c.l.bf16 %v2797
      %v3462 = vunpack.c.h.bf16 %v2797
      %v3463 = vadd.f32 %v3461, %v3455
      %v3464 = vadd.f32 %v3462, %v3458
      %v3465 = vpack.c.bf16 %v3464, %v3463
      %v3466 = vunpack.c.l.bf16 %v3465
      %v3467 = vunpack.c.h.bf16 %v3465
      %v3468 = vld [vmem:[%s2 + $0x58] sm:$0xff]
      %v3469 = vld [vmem:[%s2 + $0x60] sm:$0xff]
      %v3470 = vmul.f32 %v3466, %v3468
      %v3471 = vmul.f32 %v3467, %v3469
      %v3472 = vld [vmem:[%s2 + $0x68] sm:$0x1]
      %vm3473 = vcmask 130048
      %v3475 = vsel %vm3473, %v3472, 0
      %3477 = vmatprep.subr.mxu0 0.0
      %3478 = vmatpush1.msra.mxu0 %v3470
      %3479 = vmatprep.subr.mxu0 0.0
      %3480 = vmatpush1.msra.mxu0 %v3471
      %3481 = vmatprep.subr.mxu0 0.0
      %3482 = vmatpush1.msra.mxu0 0.0
      %3483 = vmatprep.subr.mxu0 0.0
      %3484 = vmatpush1.msra.mxu0 0.0
      %3485 = vmatprep.subr.mxu0 0.0
      %3486 = vmatpush1.msra.mxu0 0.0
      %3487 = vmatprep.subr.mxu0 0.0
      %3488 = vmatpush1.msra.mxu0 0.0
      %3489 = vmatprep.subr.mxu0 0.0
      %3490 = vmatpush1.msra.mxu0 0.0
      %3491 = vmatprep.subr.mxu0 0.0
      %3492 = vmatpush1.msra.mxu0 0.0
      %3493 = vmatprep.subr.mxu0 0.0
      %3494 = vmatpush1.msra.mxu0 0.0
      %3495 = vmatprep.subr.mxu0 0.0
      %3496 = vmatpush1.msra.mxu0 0.0
      %3497 = vmatprep.subr.mxu0 0.0
      %3498 = vmatpush1.msra.mxu0 0.0
      %3499 = vmatprep.subr.mxu0 0.0
      %3500 = vmatpush1.msra.mxu0 0.0
      %3501 = vmatprep.subr.mxu0 0.0
      %3502 = vmatpush1.msra.mxu0 0.0
      %3503 = vmatprep.subr.mxu0 0.0
      %3504 = vmatpush1.msra.mxu0 0.0
      %3505 = vmatprep.subr.mxu0 0.0
      %3506 = vmatpush1.msra.mxu0 0.0
      %3507 = vmatprep.subr.mxu0 0.0
      %3508 = vmatpush1.msra.mxu0 0.0
      %3509 = vmatprep.subr.mxu0 0.0
      %3510 = vmatpush1.msra.mxu0 0.0
      %3511 = vmatprep.subr.mxu0 0.0
      %3512 = vmatpush1.msra.mxu0 0.0
      %3513 = vmatprep.subr.mxu0 0.0
      %3514 = vmatpush1.msra.mxu0 0.0
      %3515 = vmatprep.subr.mxu0 0.0
      %3516 = vmatpush1.msra.mxu0 0.0
      %3517 = vmatprep.subr.mxu0 0.0
      %3518 = vmatpush1.msra.mxu0 0.0
      %3519 = vmatprep.subr.mxu0 0.0
      %3520 = vmatpush1.msra.mxu0 0.0
      %3521 = vmatprep.subr.mxu0 0.0
      %3522 = vmatpush1.msra.mxu0 0.0
      %3523 = vmatprep.subr.mxu0 0.0
      %3524 = vmatpush1.msra.mxu0 0.0
      %3525 = vmatprep.subr.mxu0 0.0
      %3526 = vmatpush1.msra.mxu0 0.0
      %3527 = vmatprep.subr.mxu0 0.0
      %3528 = vmatpush1.msra.mxu0 0.0
      %3529 = vmatprep.subr.mxu0 0.0
      %3530 = vmatpush1.msra.mxu0 0.0
      %3531 = vmatprep.subr.mxu0 0.0
      %3532 = vmatpush1.msra.mxu0 0.0
      %3533 = vmatprep.subr.mxu0 0.0
      %3534 = vmatpush1.msra.mxu0 0.0
      %3535 = vmatprep.subr.mxu0 0.0
      %3536 = vmatpush1.msra.mxu0 0.0
      %3537 = vmatprep.subr.mxu0 0.0
      %3538 = vmatpush1.msra.mxu0 0.0
      %3539 = vmatprep.subr.mxu0 0.0
      %3540 = vmatpush1.msra.mxu0 0.0
      %3541 = vmatprep.mubr.f32.mxu0 0.0
      %3542 = vmatmul.mubr.f32.gmra.mrb[0].mxu0 %v3475
      %v3543 = vpop.f32.mrb[0].mxu0
      %v3544 = vadd.f32 0.0, %v3543
      %v3545 = vpop.f32.mrb[0].mxu0
      %3546 = vdwg.mxu0
      %v3547 = vld [vmem:[%s2 + $0x70] sm:$0xff]
      %v3548 = vld [vmem:[%s2 + $0x78] sm:$0xff]
      %v3549 = vld [vmem:[%s2 + $0x80] sm:$0xff]
      %v3550 = vld [vmem:[%s2 + $0x88] sm:$0xff]
      %v3552 = vsel %vm398, %v3544, 0
      %3554 = vmatprep.subr.mxu0 0.0
      %3555 = vmatpush1.msra.mxu0 %v3547
      %3556 = vmatprep.subr.mxu0 0.0
      %3557 = vmatpush1.msra.mxu0 %v3548
      %3558 = vmatprep.subr.mxu0 0.0
      %3559 = vmatpush1.msra.mxu0 %v3549
      %3560 = vmatprep.subr.mxu0 0.0
      %3561 = vmatpush1.msra.mxu0 %v3550
      %3562 = vmatprep.subr.mxu0 0.0
      %3563 = vmatpush1.msra.mxu0 0.0
      %3564 = vmatprep.subr.mxu0 0.0
      %3565 = vmatpush1.msra.mxu0 0.0
      %3566 = vmatprep.subr.mxu0 0.0
      %3567 = vmatpush1.msra.mxu0 0.0
      %3568 = vmatprep.subr.mxu0 0.0
      %3569 = vmatpush1.msra.mxu0 0.0
      %3570 = vmatprep.subr.mxu0 0.0
      %3571 = vmatpush1.msra.mxu0 0.0
      %3572 = vmatprep.subr.mxu0 0.0
      %3573 = vmatpush1.msra.mxu0 0.0
      %3574 = vmatprep.subr.mxu0 0.0
      %3575 = vmatpush1.msra.mxu0 0.0
      %3576 = vmatprep.subr.mxu0 0.0
      %3577 = vmatpush1.msra.mxu0 0.0
      %3578 = vmatprep.subr.mxu0 0.0
      %3579 = vmatpush1.msra.mxu0 0.0
      %3580 = vmatprep.subr.mxu0 0.0
      %3581 = vmatpush1.msra.mxu0 0.0
      %3582 = vmatprep.subr.mxu0 0.0
      %3583 = vmatpush1.msra.mxu0 0.0
      %3584 = vmatprep.subr.mxu0 0.0
      %3585 = vmatpush1.msra.mxu0 0.0
      %3586 = vmatprep.subr.mxu0 0.0
      %3587 = vmatpush1.msra.mxu0 0.0
      %3588 = vmatprep.subr.mxu0 0.0
      %3589 = vmatpush1.msra.mxu0 0.0
      %3590 = vmatprep.subr.mxu0 0.0
      %3591 = vmatpush1.msra.mxu0 0.0
      %3592 = vmatprep.subr.mxu0 0.0
      %3593 = vmatpush1.msra.mxu0 0.0
      %3594 = vmatprep.subr.mxu0 0.0
      %3595 = vmatpush1.msra.mxu0 0.0
      %3596 = vmatprep.subr.mxu0 0.0
      %3597 = vmatpush1.msra.mxu0 0.0
      %3598 = vmatprep.subr.mxu0 0.0
      %3599 = vmatpush1.msra.mxu0 0.0
      %3600 = vmatprep.subr.mxu0 0.0
      %3601 = vmatpush1.msra.mxu0 0.0
      %3602 = vmatprep.subr.mxu0 0.0
      %3603 = vmatpush1.msra.mxu0 0.0
      %3604 = vmatprep.subr.mxu0 0.0
      %3605 = vmatpush1.msra.mxu0 0.0
      %3606 = vmatprep.subr.mxu0 0.0
      %3607 = vmatpush1.msra.mxu0 0.0
      %3608 = vmatprep.subr.mxu0 0.0
      %3609 = vmatpush1.msra.mxu0 0.0
      %3610 = vmatprep.subr.mxu0 0.0
      %3611 = vmatpush1.msra.mxu0 0.0
      %3612 = vmatprep.subr.mxu0 0.0
      %3613 = vmatpush1.msra.mxu0 0.0
      %3614 = vmatprep.subr.mxu0 0.0
      %3615 = vmatpush1.msra.mxu0 0.0
      %3616 = vmatprep.subr.mxu0 0.0
      %3617 = vmatpush1.msra.mxu0 0.0
      %3618 = vmatprep.mubr.f32.mxu0 0.0
      %3619 = vmatmul.mubr.f32.gmra.mrb[0].mxu0 %v3552
      %v3620 = vpop.f32.mrb[0].mxu0
      %v3621 = vadd.f32 0.0, %v3620
      %v3622 = vpop.f32.mrb[0].mxu0
      %3623 = vdwg.mxu0
      %vm3624 = vcmp.ge.f32.partialorder %v3621, 0.0
      %v3625 = vmul.f32 %v3621, 0.2
      %v3626 = vsel %vm3624, %v3621, %v3625
      %v3627 = vld [vmem:[%s2 + $0x90] sm:$0x1]
      %v3628 = vmul.f32 %v3626, %v3627
      %vm3629 = vcmask 516096
      %v3630 = vsel %vm3629, %v3628, 0.0
      %3631 = vadd.xlane.f32.xlu0 %v3630
      %v3632 = vpop.xlane.xlu0 %3631
      %vm3633 = vcmask 1040384
      %v3634 = vsel %vm3633, %v3632, 0.0
      %3635 = vst [vmem:[%s276] sm:$0xff] %v3634
      %p3636 = scmp.lt.s32.totalorder %s18, 1
      %s3637 = scalar_select %p3636, %s18, 1
      %s3638 = smul.addr %s3637, 8
      %s3639 = scalar_lea.vmem %s7, %s3638
      // Predicated region
      $region49: #{discriminator_forward.1} parent=47 // pred_check
        %p3640 = pneg %p188
      $region50: #{discriminator_forward.1} parent=47 // pred_check_branch
        %3642 = sbr.rel (%p3640) target = $region52
      $region51: #{discriminator_forward.1} parent=47 // pred_region
        _
      $region52: #{discriminator_forward.1} parent=47 // pred_fallthru
        _
    $region48: #{discriminator_forward.1} parent=5 // pred_fallthru
      _
    %p3643 = scmp.le.s32.totalorder 2, %s13
    // Predicated region
    $region53: #{discriminator_forward.1} parent=5 // pred_check
      %p3644 = pneg %p3643
    $region54: #{discriminator_forward.1} parent=5 // pred_check_branch
      %3646 = sbr.rel (%p3644) target = $region56
    $region55: #{discriminator_forward.1} parent=5 // pred_region
      %s3647 = ssub.s32 %s13, 2
      // Predicated region
      $region57: #{discriminator_forward.1} parent=55 // pred_check
        %p3648 = pneg %p194
      $region58: #{discriminator_forward.1} parent=55 // pred_check_branch
        %3650 = sbr.rel (%p3648) target = $region60
      $region59: #{discriminator_forward.1} parent=55 // pred_region
        %p3651 = scmp.lt.s32.totalorder %s19, 1
        %s3652 = scalar_select %p3651, %s19, 1
        %s3653 = smul.addr %s3652, 8
        %s3654 = scalar_lea.vmem %s7, %s3653
      $region60: #{discriminator_forward.1} parent=55 // pred_fallthru
        _
    $region56: #{discriminator_forward.1} parent=5 // pred_fallthru
      _
  $region6: #{discriminator_forward.1} parent=0 // loop_footer
    %s17 = sadd.s32 1, %s13
  $region7: #{discriminator_forward.1} parent=0 // loop_footer_branch
    %12 = sbr.rel target = $region3
  $region8: #{discriminator_forward.1} parent=0 // loop_exit
    _

</llo_original>
